<compile_context>
chip_gen: v7x
topology: tpu7x:2x2x1
jax: 0.10.0
libtpu: 0.0.40
codegen_flags: <defaults>
</compile_context>

<pallas_src>
import math
from functools import partial

import jax
import jax.numpy as jnp
from jax.experimental import pallas as pl
from jax.experimental.pallas import tpu as pltpu

_MXU_DTYPE = jnp.bfloat16          # MXU inputs; accumulation stays f32
_VMEM_LIMIT = 64 * 1024 * 1024     # sized for v7x (64 MiB VMEM); fine on v5e/v6e


def _pick_tile(dim, preferred, align):
    """Largest tile <= preferred that divides dim and is a multiple of align.
    Falls back to the full dim (always legal: block == full array dim)."""
    if dim <= preferred or dim % align != 0:
        return dim
    t = (preferred // align) * align
    while t >= align:
        if dim % t == 0:
            return t
        t -= align
    return dim


# ----------------------------------------------------------------------------
# Pallas kernels
# ----------------------------------------------------------------------------

def _matmul_bias_kernel(x_ref, w_ref, b_ref, o_ref, acc_ref, *, activation):
    """Tiled o = act(x @ w + b); grid = (M/tm, N/tn, K/tk), K innermost."""
    k = pl.program_id(2)

    @pl.when(k == 0)
    def _():
        acc_ref[...] = jnp.zeros_like(acc_ref)

    acc_ref[...] += jnp.dot(x_ref[...].astype(_MXU_DTYPE),
                            w_ref[...].astype(_MXU_DTYPE),
                            preferred_element_type=jnp.float32)

    @pl.when(k == pl.num_programs(2) - 1)
    def _():
        y = acc_ref[...] + b_ref[...].astype(jnp.float32)
        if activation == "relu":
            y = jnp.maximum(y, 0.0)
        o_ref[...] = y.astype(o_ref.dtype)


def matmul_bias(x2d, w, b, activation=None, tm=256, tn=256, tk=512):
    M, K = x2d.shape
    K2, N = w.shape
    assert K == K2
    tm = _pick_tile(M, tm, 8)
    tn = _pick_tile(N, tn, 128)
    tk = _pick_tile(K, tk, 128)
    grid = (M // tm, N // tn, K // tk)
    return pl.pallas_call(
        partial(_matmul_bias_kernel, activation=activation),
        out_shape=jax.ShapeDtypeStruct((M, N), x2d.dtype),
        grid=grid,
        in_specs=[
            pl.BlockSpec((tm, tk), lambda i, j, k: (i, k)),
            pl.BlockSpec((tk, tn), lambda i, j, k: (k, j)),
            pl.BlockSpec((1, tn), lambda i, j, k: (0, j)),
        ],
        out_specs=pl.BlockSpec((tm, tn), lambda i, j, k: (i, j)),
        scratch_shapes=[pltpu.VMEM((tm, tn), jnp.float32)],
        compiler_params=pltpu.CompilerParams(
            dimension_semantics=("parallel", "parallel", "arbitrary"),
            vmem_limit_bytes=_VMEM_LIMIT),
    )(x2d, w, b.reshape(1, N))


def _matmul_res_ln_kernel(x_ref, w_ref, b_ref, res_ref, g_ref, beta_ref,
                          o_ref, acc_ref, *, eps):
    """Tiled o = LayerNorm(x @ w + b + res); grid = (M/tm, K/tk)."""
    k = pl.program_id(1)

    @pl.when(k == 0)
    def _():
        acc_ref[...] = jnp.zeros_like(acc_ref)

    acc_ref[...] += jnp.dot(x_ref[...].astype(_MXU_DTYPE),
                            w_ref[...].astype(_MXU_DTYPE),
                            preferred_element_type=jnp.float32)

    @pl.when(k == pl.num_programs(1) - 1)
    def _():
        y = (acc_ref[...] + b_ref[...].astype(jnp.float32)
             + res_ref[...].astype(jnp.float32))
        mu = jnp.mean(y, axis=-1, keepdims=True)
        var = jnp.mean(jnp.square(y - mu), axis=-1, keepdims=True)
        yn = (y - mu) * jax.lax.rsqrt(var + eps)
        o_ref[...] = (yn * g_ref[...].astype(jnp.float32)
                      + beta_ref[...].astype(jnp.float32)).astype(o_ref.dtype)


def matmul_res_ln(x2d, w, b, res2d, gamma, beta, eps, tm=256, tk=512):
    """Fused: o = LayerNorm(x @ w + b + res).  N (= embed dim) is kept whole
    inside the block because LayerNorm needs the full feature row."""
    M, K = x2d.shape
    _, N = w.shape
    tm = _pick_tile(M, tm, 8)
    tk = _pick_tile(K, tk, 128)
    grid = (M // tm, K // tk)
    return pl.pallas_call(
        partial(_matmul_res_ln_kernel, eps=eps),
        out_shape=jax.ShapeDtypeStruct((M, N), x2d.dtype),
        grid=grid,
        in_specs=[
            pl.BlockSpec((tm, tk), lambda i, k: (i, k)),
            pl.BlockSpec((tk, N), lambda i, k: (k, 0)),
            pl.BlockSpec((1, N), lambda i, k: (0, 0)),
            pl.BlockSpec((tm, N), lambda i, k: (i, 0)),
            pl.BlockSpec((1, N), lambda i, k: (0, 0)),
            pl.BlockSpec((1, N), lambda i, k: (0, 0)),
        ],
        out_specs=pl.BlockSpec((tm, N), lambda i, k: (i, 0)),
        scratch_shapes=[pltpu.VMEM((tm, N), jnp.float32)],
        compiler_params=pltpu.CompilerParams(
            dimension_semantics=("parallel", "arbitrary"),
            vmem_limit_bytes=_VMEM_LIMIT),
    )(x2d, w, b.reshape(1, N), res2d, gamma.reshape(1, N), beta.reshape(1, N))


def _ffn_res_ln_kernel(x_ref, w1_ref, b1_ref, w2_ref, b2_ref, res_ref,
                       g_ref, beta_ref, o_ref, *, eps):
    """Fused FFN: o = LayerNorm(relu(x@w1+b1)@w2 + b2 + res).
    The (tm, F) hidden activation stays in VMEM/vregs (no HBM round trip)."""
    x = x_ref[...].astype(_MXU_DTYPE)
    h = jnp.dot(x, w1_ref[...].astype(_MXU_DTYPE),
                preferred_element_type=jnp.float32)
    h = jnp.maximum(h + b1_ref[...].astype(jnp.float32), 0.0)
    y = jnp.dot(h.astype(_MXU_DTYPE), w2_ref[...].astype(_MXU_DTYPE),
                preferred_element_type=jnp.float32)
    y = y + b2_ref[...].astype(jnp.float32) + res_ref[...].astype(jnp.float32)
    mu = jnp.mean(y, axis=-1, keepdims=True)
    var = jnp.mean(jnp.square(y - mu), axis=-1, keepdims=True)
    yn = (y - mu) * jax.lax.rsqrt(var + eps)
    o_ref[...] = (yn * g_ref[...].astype(jnp.float32)
                  + beta_ref[...].astype(jnp.float32)).astype(o_ref.dtype)


def ffn_res_ln(x2d, w1, b1, w2, b2, res2d, gamma, beta, eps, tm=256):
    M, D = x2d.shape
    _, F = w1.shape
    tm = _pick_tile(M, tm, 8)
    grid = (M // tm,)
    return pl.pallas_call(
        partial(_ffn_res_ln_kernel, eps=eps),
        out_shape=jax.ShapeDtypeStruct((M, D), x2d.dtype),
        grid=grid,
        in_specs=[
            pl.BlockSpec((tm, D), lambda i: (i, 0)),
            pl.BlockSpec((D, F), lambda i: (0, 0)),
            pl.BlockSpec((1, F), lambda i: (0, 0)),
            pl.BlockSpec((F, D), lambda i: (0, 0)),
            pl.BlockSpec((1, D), lambda i: (0, 0)),
            pl.BlockSpec((tm, D), lambda i: (i, 0)),
            pl.BlockSpec((1, D), lambda i: (0, 0)),
            pl.BlockSpec((1, D), lambda i: (0, 0)),
        ],
        out_specs=pl.BlockSpec((tm, D), lambda i: (i, 0)),
        compiler_params=pltpu.CompilerParams(
            dimension_semantics=("parallel",),
            vmem_limit_bytes=_VMEM_LIMIT),
    )(x2d, w1, b1.reshape(1, F), w2, b2.reshape(1, D),
      res2d, gamma.reshape(1, D), beta.reshape(1, D))


def _sdpa_kernel(q_ref, k_ref, v_ref, m_ref, o_ref, *, scale, n_heads):
    """Scaled dot-product attention for one batch, all heads.
       q:(1,H,Sq,dh) k,v:(1,H,Sk,dh) m:(1,Sq,Sk) additive, o:(1,Sq,H*dh)."""
    dh = q_ref.shape[3]
    mask = m_ref[0].astype(jnp.float32)
    for h in range(n_heads):                       # static unroll over heads
        q = q_ref[0, h].astype(_MXU_DTYPE)         # (Sq, dh)
        k = k_ref[0, h].astype(_MXU_DTYPE)         # (Sk, dh)
        v = v_ref[0, h].astype(_MXU_DTYPE)         # (Sk, dh)
        s = jax.lax.dot_general(q, k, (((1,), (1,)), ((), ())),
                                preferred_element_type=jnp.float32)
        s = s * scale + mask
        s = s - jnp.max(s, axis=-1, keepdims=True)
        p = jnp.exp(s)
        denom = jnp.sum(p, axis=-1, keepdims=True)
        p = p * pl.reciprocal(denom, approx=True)  # EUP, not VALU divide
        out_h = jnp.dot(p.astype(_MXU_DTYPE), v,
                        preferred_element_type=jnp.float32)
        o_ref[0, :, h * dh:(h + 1) * dh] = out_h.astype(o_ref.dtype)


def sdpa(q, k, v, mask_add):
    """q,k,v: (B, H, S, dh); mask_add: (B, Sq, Sk); out: (B, Sq, H*dh)."""
    B, H, Sq, dh = q.shape
    _, _, Sk, _ = k.shape
    scale = 1.0 / math.sqrt(dh)
    return pl.pallas_call(
        partial(_sdpa_kernel, scale=scale, n_heads=H),
        out_shape=jax.ShapeDtypeStruct((B, Sq, H * dh), q.dtype),
        grid=(B,),
        in_specs=[
            pl.BlockSpec((1, H, Sq, dh), lambda b: (b, 0, 0, 0)),
            pl.BlockSpec((1, H, Sk, dh), lambda b: (b, 0, 0, 0)),
            pl.BlockSpec((1, H, Sk, dh), lambda b: (b, 0, 0, 0)),
            pl.BlockSpec((1, Sq, Sk), lambda b: (b, 0, 0)),
        ],
        out_specs=pl.BlockSpec((1, Sq, H * dh), lambda b: (b, 0, 0)),
        compiler_params=pltpu.CompilerParams(
            dimension_semantics=("parallel",),
            vmem_limit_bytes=_VMEM_LIMIT),
    )(q, k, v, mask_add)


# ----------------------------------------------------------------------------
# Model glue (plain JAX reshapes around the Pallas kernels)
# ----------------------------------------------------------------------------

def multi_head_attention(x_q, x_kv, mask_add, p, n_heads, fused_qkv=True):
    """Returns pre-output-projection attention context (B, Sq, D)."""
    B, Sq, D = x_q.shape
    _, Sk, _ = x_kv.shape
    dh = D // n_heads

    if fused_qkv:
        w_qkv = jnp.concatenate([p["wq"], p["wk"], p["wv"]], axis=1)   # (D, 3D)
        b_qkv = jnp.concatenate([p["bq"], p["bk"], p["bv"]], axis=0)
        qkv = matmul_bias(x_q.reshape(B * Sq, D), w_qkv, b_qkv)
        qkv = qkv.reshape(B, Sq, 3, n_heads, dh)
        q = qkv[:, :, 0].transpose(0, 2, 1, 3)                          # (B,H,Sq,dh)
        k = qkv[:, :, 1].transpose(0, 2, 1, 3)
        v = qkv[:, :, 2].transpose(0, 2, 1, 3)
    else:
        q = matmul_bias(x_q.reshape(B * Sq, D), p["wq"], p["bq"])
        q = q.reshape(B, Sq, n_heads, dh).transpose(0, 2, 1, 3)
        w_kv = jnp.concatenate([p["wk"], p["wv"]], axis=1)              # (D, 2D)
        b_kv = jnp.concatenate([p["bk"], p["bv"]], axis=0)
        kv = matmul_bias(x_kv.reshape(B * Sk, D), w_kv, b_kv)
        kv = kv.reshape(B, Sk, 2, n_heads, dh)
        k = kv[:, :, 0].transpose(0, 2, 1, 3)
        v = kv[:, :, 1].transpose(0, 2, 1, 3)

    return sdpa(q, k, v, mask_add)                                       # (B,Sq,D)


def encoder_layer(x, mask_add, p, n_heads, eps):
    B, S, D = x.shape
    x2 = x.reshape(B * S, D)
    attn = multi_head_attention(x, x, mask_add, p["self_attn"], n_heads)
    # wo projection fused with residual add + LayerNorm
    x2 = matmul_res_ln(attn.reshape(B * S, D), p["self_attn"]["wo"],
                       p["self_attn"]["bo"], x2, p["ln1_g"], p["ln1_b"], eps)
    # fused FFN + residual + LayerNorm
    x2 = ffn_res_ln(x2, p["ffn"]["w1"], p["ffn"]["b1"], p["ffn"]["w2"],
                    p["ffn"]["b2"], x2, p["ln2_g"], p["ln2_b"], eps)
    return x2.reshape(B, S, D)


def decoder_layer(x, enc_out, self_mask_add, cross_mask_add, p, n_heads, eps):
    B, S, D = x.shape
    x2 = x.reshape(B * S, D)
    attn = multi_head_attention(x, x, self_mask_add, p["self_attn"], n_heads)
    x2 = matmul_res_ln(attn.reshape(B * S, D), p["self_attn"]["wo"],
                       p["self_attn"]["bo"], x2, p["ln1_g"], p["ln1_b"], eps)
    cross = multi_head_attention(x2.reshape(B, S, D), enc_out, cross_mask_add,
                                 p["cross_attn"], n_heads, fused_qkv=False)
    x2 = matmul_res_ln(cross.reshape(B * S, D), p["cross_attn"]["wo"],
                       p["cross_attn"]["bo"], x2, p["ln2_g"], p["ln2_b"], eps)
    x2 = ffn_res_ln(x2, p["ffn"]["w1"], p["ffn"]["b1"], p["ffn"]["w2"],
                    p["ffn"]["b2"], x2, p["ln3_g"], p["ln3_b"], eps)
    return x2.reshape(B, S, D)


def sinusoidal_pe(seq_len, d):
    pos = jnp.arange(seq_len, dtype=jnp.float32)[:, None]
    i = jnp.arange(0, d, 2, dtype=jnp.float32)[None, :]
    angle = pos / jnp.power(10000.0, i / d)
    pe = jnp.zeros((seq_len, d), jnp.float32)
    pe = pe.at[:, 0::2].set(jnp.sin(angle))
    pe = pe.at[:, 1::2].set(jnp.cos(angle))
    return pe


def embed_and_pos(tokens, emb_table, pe):
    # TODO(synk): token-embedding gather + PE add kept in XLA (data-dependent gather).
    D = emb_table.shape[1]
    x = jnp.take(emb_table, tokens, axis=0) * math.sqrt(D)
    x = x + pe[None, : tokens.shape[1], :]
    return x  # pe_dropout is identity in eval


def transformer_forward(params, x_in, input_mask, x_out, output_mask, cfg):
    """x_in:(B,S_in) int32, x_out:(B,S_out) int32,
       input_mask:(B,S_in) {0,1}, output_mask:(B,S_out,S_out) {0,1}."""
    n_heads, eps = cfg["n_heads"], cfg["eps"]
    NEG = -1e9
    B, S_in = x_in.shape
    _, S_out = x_out.shape

    # additive masks (one per batch; never duplicated per head)
    pad = (1.0 - input_mask.astype(jnp.float32)) * NEG                   # (B,S_in)
    enc_mask = jnp.broadcast_to(pad[:, None, :], (B, S_in, S_in))        # (B,S_in,S_in)
    cross_mask = jnp.broadcast_to(pad[:, None, :], (B, S_out, S_in))     # (B,S_out,S_in)
    dec_self_mask = (1.0 - output_mask.astype(jnp.float32)) * NEG        # (B,S_out,S_out)

    # --- Encoder ---
    x = embed_and_pos(x_in, params["enc_embed"], params["enc_pe"])
    for lp in params["enc_layers"]:
        x = encoder_layer(x, enc_mask, lp, n_heads, eps)
    enc_out = x

    # --- Decoder ---
    y = embed_and_pos(x_out, params["dec_embed"], params["dec_pe"])
    for lp in params["dec_layers"]:
        y = decoder_layer(y, enc_out, dec_self_mask, cross_mask, lp, n_heads, eps)

    # --- Final projection (vocab padded to a multiple of 128 lanes) ---
    B, S, D = y.shape
    V = params["final_w"].shape[1]
    V_pad = ((V + 127) // 128) * 128
    w = jnp.pad(params["final_w"], ((0, 0), (0, V_pad - V)))
    b = jnp.pad(params["final_b"], (0, V_pad - V))
    logits = matmul_bias(y.reshape(B * S, D), w, b)
    return logits[:, :V].reshape(B, S, V)


# ----------------------------------------------------------------------------
# Deterministic parameter initialization (xavier_uniform for dim>1, zeros bias)
# ----------------------------------------------------------------------------

def _xavier(key, shape):
    fan_in, fan_out = shape[0], shape[1]
    limit = math.sqrt(6.0 / (fan_in + fan_out))
    return jax.random.uniform(key, shape, jnp.float32, -limit, limit)


class _KeyGen:
    def __init__(self, key):
        self.key = key

    def __call__(self):
        self.key, sub = jax.random.split(self.key)
        return sub


def init_attn(kg, D):
    return dict(
        wq=_xavier(kg(), (D, D)), bq=jnp.zeros((D,), jnp.float32),
        wk=_xavier(kg(), (D, D)), bk=jnp.zeros((D,), jnp.float32),
        wv=_xavier(kg(), (D, D)), bv=jnp.zeros((D,), jnp.float32),
        wo=_xavier(kg(), (D, D)), bo=jnp.zeros((D,), jnp.float32),
    )


def init_ffn(kg, D, F):
    return dict(
        w1=_xavier(kg(), (D, F)), b1=jnp.zeros((F,), jnp.float32),
        w2=_xavier(kg(), (F, D)), b2=jnp.zeros((D,), jnp.float32),
    )


def init_params(key, cfg):
    kg = _KeyGen(key)
    D, F = cfg["embed_dim"], cfg["ffn_dim"]
    params = dict(
        enc_embed=_xavier(kg(), (cfg["input_vocab_size"], D)),
        dec_embed=_xavier(kg(), (cfg["output_vocab_size"], D)),
        enc_pe=sinusoidal_pe(cfg["input_seq_len"], D),
        dec_pe=sinusoidal_pe(cfg["output_seq_len"], D),
        enc_layers=[],
        dec_layers=[],
        final_w=_xavier(kg(), (D, cfg["output_vocab_size"])),
        final_b=jnp.zeros((cfg["output_vocab_size"],), jnp.float32),
    )
    for _ in range(cfg["n_layers"]):
        params["enc_layers"].append(dict(
            self_attn=init_attn(kg, D), ffn=init_ffn(kg, D, F),
            ln1_g=jnp.ones((D,), jnp.float32), ln1_b=jnp.zeros((D,), jnp.float32),
            ln2_g=jnp.ones((D,), jnp.float32), ln2_b=jnp.zeros((D,), jnp.float32),
        ))
    for _ in range(cfg["n_layers"]):
        params["dec_layers"].append(dict(
            self_attn=init_attn(kg, D), cross_attn=init_attn(kg, D),
            ffn=init_ffn(kg, D, F),
            ln1_g=jnp.ones((D,), jnp.float32), ln1_b=jnp.zeros((D,), jnp.float32),
            ln2_g=jnp.ones((D,), jnp.float32), ln2_b=jnp.zeros((D,), jnp.float32),
            ln3_g=jnp.ones((D,), jnp.float32), ln3_b=jnp.zeros((D,), jnp.float32),
        ))
    return params


# ----------------------------------------------------------------------------
# main
# ----------------------------------------------------------------------------

if __name__ == "__main__":
    cfg = dict(
        input_vocab_size=11,
        output_vocab_size=13,
        embed_dim=32,
        input_seq_len=8,
        output_seq_len=8,
        n_heads=4,
        ffn_dim=64,
        n_layers=2,
        attn_dropout=0.1,   # identity in eval-mode forward
        ffn_dropout=0.1,    # identity in eval-mode forward
        pe_dropout=0.1,     # identity in eval-mode forward
        eps=1e-6,
    )
    B = 2

    root = jax.random.PRNGKey(0)
    k_param, k_in, k_out = jax.random.split(root, 3)
    params = init_params(k_param, cfg)

    x_in = jax.random.randint(k_in, (B, cfg["input_seq_len"]), 0,
                              cfg["input_vocab_size"], jnp.int32)
    x_out = jax.random.randint(k_out, (B, cfg["output_seq_len"]), 0,
                               cfg["output_vocab_size"], jnp.int32)

    # padding mask over encoder input (all tokens valid here)
    input_mask = jnp.ones((B, cfg["input_seq_len"]), jnp.float32)
    # causal mask for decoder self-attention
    causal = jnp.tril(jnp.ones((cfg["output_seq_len"], cfg["output_seq_len"]),
                               jnp.float32))
    output_mask = jnp.broadcast_to(causal, (B,) + causal.shape)

    fwd = jax.jit(partial(transformer_forward, cfg=cfg))
    logits = fwd(params, x_in, input_mask, x_out, output_mask)
    jax.block_until_ready(logits)

    assert logits.shape == (B, cfg["output_seq_len"], cfg["output_vocab_size"])
    assert bool(jnp.all(jnp.isfinite(logits)))
    print("KERNEL_OK")
</pallas_src>

<mosaic_0001>
module attributes {stable_mosaic.version = 11 : i64} {
  func.func @_matmul_bias_kernel(%arg0: i32, %arg1: i32, %arg2: i32, %arg3: memref<16x32xf32, #tpu.memory_space<vmem>>, %arg4: memref<32x96xf32, #tpu.memory_space<vmem>>, %arg5: memref<1x96xf32, #tpu.memory_space<vmem>>, %arg6: memref<16x96xf32, #tpu.memory_space<vmem>>, %arg7: memref<16x96xf32, #tpu.memory_space<vmem>>) attributes {dimension_semantics = [#tpu.dimension_semantics<parallel>, #tpu.dimension_semantics<parallel>, #tpu.dimension_semantics<arbitrary>], iteration_bounds = array<i64: 1, 1, 1>, scalar_prefetch = 0 : i64, scratch_operands = 1 : i64, tpu.core_type = #tpu.core_type<tc>, window_params = [{transform_indices = @transform_0, window_bounds = array<i64: 16, 32>}, {transform_indices = @transform_1, window_bounds = array<i64: 32, 96>}, {transform_indices = @transform_2, window_bounds = array<i64: 1, 96>}, {transform_indices = @transform_3, window_bounds = array<i64: 16, 96>}]} {
    %c0_i32 = arith.constant 0 : i32
    %0 = arith.cmpi eq, %arg2, %c0_i32 : i32
    %1 = arith.extui %0 : i1 to i32
    %c0_i32_0 = arith.constant 0 : i32
    %2 = arith.cmpi ne, %1, %c0_i32_0 : i32
    scf.if %2 {
      %cst_10 = arith.constant 0.000000e+00 : f32
      %14 = vector.broadcast %cst_10 : f32 to vector<16x96xf32>
      %c0_11 = arith.constant 0 : index
      %c0_12 = arith.constant 0 : index
      %15 = vector.load %arg7[%c0_11, %c0_12] : memref<16x96xf32, #tpu.memory_space<vmem>>, vector<16x96xf32>
      tpu.vector_store %arg7[%c0_11, %c0_12], %14 {strides = array<i32>} : memref<16x96xf32, #tpu.memory_space<vmem>>, vector<16x96xf32>,
    } else {
    }
    %c0 = arith.constant 0 : index
    %c0_1 = arith.constant 0 : index
    %3 = vector.load %arg7[%c0, %c0_1] : memref<16x96xf32, #tpu.memory_space<vmem>>, vector<16x96xf32>
    %c0_2 = arith.constant 0 : index
    %c0_3 = arith.constant 0 : index
    %4 = vector.load %arg3[%c0_2, %c0_3] : memref<16x32xf32, #tpu.memory_space<vmem>>, vector<16x32xf32>
    %5 = arith.truncf %4 : vector<16x32xf32> to vector<16x32xbf16>
    %c0_4 = arith.constant 0 : index
    %c0_5 = arith.constant 0 : index
    %6 = vector.load %arg4[%c0_4, %c0_5] : memref<32x96xf32, #tpu.memory_space<vmem>>, vector<32x96xf32>
    %7 = arith.truncf %6 : vector<32x96xf32> to vector<32x96xbf16>
    %cst = arith.constant dense<0.000000e+00> : vector<16x96xf32>
    %8 = tpu.matmul %5, %7, %cst {dimension_numbers = #tpu.dot_dimension_numbers<[1], [0], [0], [1], [0, 0, 1, 1], [], []>} : vector<16x32xbf16>, vector<32x96xbf16>, vector<16x96xf32> -> vector<16x96xf32>
    %9 = arith.addf %3, %8 : vector<16x96xf32>
    %c0_6 = arith.constant 0 : index
    %c0_7 = arith.constant 0 : index
    %10 = vector.load %arg7[%c0_6, %c0_7] : memref<16x96xf32, #tpu.memory_space<vmem>>, vector<16x96xf32>
    tpu.vector_store %arg7[%c0_6, %c0_7], %9 {strides = array<i32>} : memref<16x96xf32, #tpu.memory_space<vmem>>, vector<16x96xf32>,
    %c0_i32_8 = arith.constant 0 : i32
    %11 = arith.cmpi eq, %arg2, %c0_i32_8 : i32
    %12 = arith.extui %11 : i1 to i32
    %c0_i32_9 = arith.constant 0 : i32
    %13 = arith.cmpi ne, %12, %c0_i32_9 : i32
    scf.if %13 {
      %c0_10 = arith.constant 0 : index
      %c0_11 = arith.constant 0 : index
      %14 = vector.load %arg7[%c0_10, %c0_11] : memref<16x96xf32, #tpu.memory_space<vmem>>, vector<16x96xf32>
      %c0_12 = arith.constant 0 : index
      %c0_13 = arith.constant 0 : index
      %15 = vector.load %arg5[%c0_12, %c0_13] : memref<1x96xf32, #tpu.memory_space<vmem>>, vector<1x96xf32>
      %16 = vector.broadcast %15 : vector<1x96xf32> to vector<16x96xf32>
      %17 = arith.addf %14, %16 : vector<16x96xf32>
      %c0_14 = arith.constant 0 : index
      %c0_15 = arith.constant 0 : index
      %18 = vector.load %arg6[%c0_14, %c0_15] : memref<16x96xf32, #tpu.memory_space<vmem>>, vector<16x96xf32>
      tpu.vector_store %arg6[%c0_14, %c0_15], %17 {strides = array<i32>} : memref<16x96xf32, #tpu.memory_space<vmem>>, vector<16x96xf32>,
    } else {
    }
    return
  }
  func.func @transform_0(%arg0: i32, %arg1: i32, %arg2: i32) -> (i32, i32) {
    %c0_i32 = arith.constant 0 : i32
    return %arg0, %arg2 : i32, i32
  }
  func.func @transform_1(%arg0: i32, %arg1: i32, %arg2: i32) -> (i32, i32) {
    %c0_i32 = arith.constant 0 : i32
    return %arg2, %arg1 : i32, i32
  }
  func.func @transform_2(%arg0: i32, %arg1: i32, %arg2: i32) -> (i32, i32) {
    %c0_i32 = arith.constant 0 : i32
    %c0_i32_0 = arith.constant 0 : i32
    return %c0_i32, %arg1 : i32, i32
  }
  func.func @transform_3(%arg0: i32, %arg1: i32, %arg2: i32) -> (i32, i32) {
    %c0_i32 = arith.constant 0 : i32
    return %arg0, %arg1 : i32, i32
  }
}

module attributes {stable_mosaic.version = 11 : i64} {
  func.func @_matmul_bias_kernel(%arg0: i32, %arg1: i32, %arg2: i32, %arg3: memref<16x32xf32, #tpu.memory_space<vmem>>, %arg4: memref<32x32xf32, #tpu.memory_space<vmem>>, %arg5: memref<1x32xf32, #tpu.memory_space<vmem>>, %arg6: memref<16x32xf32, #tpu.memory_space<vmem>>, %arg7: memref<16x32xf32, #tpu.memory_space<vmem>>) attributes {dimension_semantics = [#tpu.dimension_semantics<parallel>, #tpu.dimension_semantics<parallel>, #tpu.dimension_semantics<arbitrary>], iteration_bounds = array<i64: 1, 1, 1>, scalar_prefetch = 0 : i64, scratch_operands = 1 : i64, tpu.core_type = #tpu.core_type<tc>, window_params = [{transform_indices = @transform_0, window_bounds = array<i64: 16, 32>}, {transform_indices = @transform_1, window_bounds = array<i64: 32, 32>}, {transform_indices = @transform_2, window_bounds = array<i64: 1, 32>}, {transform_indices = @transform_3, window_bounds = array<i64: 16, 32>}]} {
    %c0_i32 = arith.constant 0 : i32
    %0 = arith.cmpi eq, %arg2, %c0_i32 : i32
    %1 = arith.extui %0 : i1 to i32
    %c0_i32_0 = arith.constant 0 : i32
    %2 = arith.cmpi ne, %1, %c0_i32_0 : i32
    scf.if %2 {
      %cst_10 = arith.constant 0.000000e+00 : f32
      %14 = vector.broadcast %cst_10 : f32 to vector<16x32xf32>
      %c0_11 = arith.constant 0 : index
      %c0_12 = arith.constant 0 : index
      %15 = vector.load %arg7[%c0_11, %c0_12] : memref<16x32xf32, #tpu.memory_space<vmem>>, vector<16x32xf32>
      tpu.vector_store %arg7[%c0_11, %c0_12], %14 {strides = array<i32>} : memref<16x32xf32, #tpu.memory_space<vmem>>, vector<16x32xf32>,
    } else {
    }
    %c0 = arith.constant 0 : index
    %c0_1 = arith.constant 0 : index
    %3 = vector.load %arg7[%c0, %c0_1] : memref<16x32xf32, #tpu.memory_space<vmem>>, vector<16x32xf32>
    %c0_2 = arith.constant 0 : index
    %c0_3 = arith.constant 0 : index
    %4 = vector.load %arg3[%c0_2, %c0_3] : memref<16x32xf32, #tpu.memory_space<vmem>>, vector<16x32xf32>
    %5 = arith.truncf %4 : vector<16x32xf32> to vector<16x32xbf16>
    %c0_4 = arith.constant 0 : index
    %c0_5 = arith.constant 0 : index
    %6 = vector.load %arg4[%c0_4, %c0_5] : memref<32x32xf32, #tpu.memory_space<vmem>>, vector<32x32xf32>
    %7 = arith.truncf %6 : vector<32x32xf32> to vector<32x32xbf16>
    %cst = arith.constant dense<0.000000e+00> : vector<16x32xf32>
    %8 = tpu.matmul %5, %7, %cst {dimension_numbers = #tpu.dot_dimension_numbers<[1], [0], [0], [1], [0, 0, 1, 1], [], []>} : vector<16x32xbf16>, vector<32x32xbf16>, vector<16x32xf32> -> vector<16x32xf32>
    %9 = arith.addf %3, %8 : vector<16x32xf32>
    %c0_6 = arith.constant 0 : index
    %c0_7 = arith.constant 0 : index
    %10 = vector.load %arg7[%c0_6, %c0_7] : memref<16x32xf32, #tpu.memory_space<vmem>>, vector<16x32xf32>
    tpu.vector_store %arg7[%c0_6, %c0_7], %9 {strides = array<i32>} : memref<16x32xf32, #tpu.memory_space<vmem>>, vector<16x32xf32>,
    %c0_i32_8 = arith.constant 0 : i32
    %11 = arith.cmpi eq, %arg2, %c0_i32_8 : i32
    %12 = arith.extui %11 : i1 to i32
    %c0_i32_9 = arith.constant 0 : i32
    %13 = arith.cmpi ne, %12, %c0_i32_9 : i32
    scf.if %13 {
      %c0_10 = arith.constant 0 : index
      %c0_11 = arith.constant 0 : index
      %14 = vector.load %arg7[%c0_10, %c0_11] : memref<16x32xf32, #tpu.memory_space<vmem>>, vector<16x32xf32>
      %c0_12 = arith.constant 0 : index
      %c0_13 = arith.constant 0 : index
      %15 = vector.load %arg5[%c0_12, %c0_13] : memref<1x32xf32, #tpu.memory_space<vmem>>, vector<1x32xf32>
      %16 = vector.broadcast %15 : vector<1x32xf32> to vector<16x32xf32>
      %17 = arith.addf %14, %16 : vector<16x32xf32>
      %c0_14 = arith.constant 0 : index
      %c0_15 = arith.constant 0 : index
      %18 = vector.load %arg6[%c0_14, %c0_15] : memref<16x32xf32, #tpu.memory_space<vmem>>, vector<16x32xf32>
      tpu.vector_store %arg6[%c0_14, %c0_15], %17 {strides = array<i32>} : memref<16x32xf32, #tpu.memory_space<vmem>>, vector<16x32xf32>,
    } else {
    }
    return
  }
  func.func @transform_0(%arg0: i32, %arg1: i32, %arg2: i32) -> (i32, i32) {
    %c0_i32 = arith.constant 0 : i32
    return %arg0, %arg2 : i32, i32
  }
  func.func @transform_1(%arg0: i32, %arg1: i32, %arg2: i32) -> (i32, i32) {
    %c0_i32 = arith.constant 0 : i32
    return %arg2, %arg1 : i32, i32
  }
  func.func @transform_2(%arg0: i32, %arg1: i32, %arg2: i32) -> (i32, i32) {
    %c0_i32 = arith.constant 0 : i32
    %c0_i32_0 = arith.constant 0 : i32
    return %c0_i32, %arg1 : i32, i32
  }
  func.func @transform_3(%arg0: i32, %arg1: i32, %arg2: i32) -> (i32, i32) {
    %c0_i32 = arith.constant 0 : i32
    return %arg0, %arg1 : i32, i32
  }
}

module attributes {stable_mosaic.version = 11 : i64} {
  func.func @_matmul_res_ln_kernel(%arg0: i32, %arg1: i32, %arg2: memref<16x32xf32, #tpu.memory_space<vmem>>, %arg3: memref<32x32xf32, #tpu.memory_space<vmem>>, %arg4: memref<1x32xf32, #tpu.memory_space<vmem>>, %arg5: memref<16x32xf32, #tpu.memory_space<vmem>>, %arg6: memref<1x32xf32, #tpu.memory_space<vmem>>, %arg7: memref<1x32xf32, #tpu.memory_space<vmem>>, %arg8: memref<16x32xf32, #tpu.memory_space<vmem>>, %arg9: memref<16x32xf32, #tpu.memory_space<vmem>>) attributes {dimension_semantics = [#tpu.dimension_semantics<parallel>, #tpu.dimension_semantics<arbitrary>], iteration_bounds = array<i64: 1, 1>, scalar_prefetch = 0 : i64, scratch_operands = 1 : i64, tpu.core_type = #tpu.core_type<tc>, window_params = [{transform_indices = @transform_0, window_bounds = array<i64: 16, 32>}, {transform_indices = @transform_1, window_bounds = array<i64: 32, 32>}, {pipeline_mode = #tpu.pipeline_mode<synchronous>, transform_indices = @transform_2, window_bounds = array<i64: 1, 32>}, {transform_indices = @transform_3, window_bounds = array<i64: 16, 32>}, {pipeline_mode = #tpu.pipeline_mode<synchronous>, transform_indices = @transform_4, window_bounds = array<i64: 1, 32>}, {pipeline_mode = #tpu.pipeline_mode<synchronous>, transform_indices = @transform_5, window_bounds = array<i64: 1, 32>}, {transform_indices = @transform_6, window_bounds = array<i64: 16, 32>}]} {
    %c0_i32 = arith.constant 0 : i32
    %0 = arith.cmpi eq, %arg1, %c0_i32 : i32
    %1 = arith.extui %0 : i1 to i32
    %c0_i32_0 = arith.constant 0 : i32
    %2 = arith.cmpi ne, %1, %c0_i32_0 : i32
    scf.if %2 {
      %cst_10 = arith.constant 0.000000e+00 : f32
      %14 = vector.broadcast %cst_10 : f32 to vector<16x32xf32>
      %c0_11 = arith.constant 0 : index
      %c0_12 = arith.constant 0 : index
      %15 = vector.load %arg9[%c0_11, %c0_12] : memref<16x32xf32, #tpu.memory_space<vmem>>, vector<16x32xf32>
      tpu.vector_store %arg9[%c0_11, %c0_12], %14 {strides = array<i32>} : memref<16x32xf32, #tpu.memory_space<vmem>>, vector<16x32xf32>,
    } else {
    }
    %c0 = arith.constant 0 : index
    %c0_1 = arith.constant 0 : index
    %3 = vector.load %arg9[%c0, %c0_1] : memref<16x32xf32, #tpu.memory_space<vmem>>, vector<16x32xf32>
    %c0_2 = arith.constant 0 : index
    %c0_3 = arith.constant 0 : index
    %4 = vector.load %arg2[%c0_2, %c0_3] : memref<16x32xf32, #tpu.memory_space<vmem>>, vector<16x32xf32>
    %5 = arith.truncf %4 : vector<16x32xf32> to vector<16x32xbf16>
    %c0_4 = arith.constant 0 : index
    %c0_5 = arith.constant 0 : index
    %6 = vector.load %arg3[%c0_4, %c0_5] : memref<32x32xf32, #tpu.memory_space<vmem>>, vector<32x32xf32>
    %7 = arith.truncf %6 : vector<32x32xf32> to vector<32x32xbf16>
    %cst = arith.constant dense<0.000000e+00> : vector<16x32xf32>
    %8 = tpu.matmul %5, %7, %cst {dimension_numbers = #tpu.dot_dimension_numbers<[1], [0], [0], [1], [0, 0, 1, 1], [], []>} : vector<16x32xbf16>, vector<32x32xbf16>, vector<16x32xf32> -> vector<16x32xf32>
    %9 = arith.addf %3, %8 : vector<16x32xf32>
    %c0_6 = arith.constant 0 : index
    %c0_7 = arith.constant 0 : index
    %10 = vector.load %arg9[%c0_6, %c0_7] : memref<16x32xf32, #tpu.memory_space<vmem>>, vector<16x32xf32>
    tpu.vector_store %arg9[%c0_6, %c0_7], %9 {strides = array<i32>} : memref<16x32xf32, #tpu.memory_space<vmem>>, vector<16x32xf32>,
    %c0_i32_8 = arith.constant 0 : i32
    %11 = arith.cmpi eq, %arg1, %c0_i32_8 : i32
    %12 = arith.extui %11 : i1 to i32
    %c0_i32_9 = arith.constant 0 : i32
    %13 = arith.cmpi ne, %12, %c0_i32_9 : i32
    scf.if %13 {
      %c0_10 = arith.constant 0 : index
      %c0_11 = arith.constant 0 : index
      %14 = vector.load %arg9[%c0_10, %c0_11] : memref<16x32xf32, #tpu.memory_space<vmem>>, vector<16x32xf32>
      %c0_12 = arith.constant 0 : index
      %c0_13 = arith.constant 0 : index
      %15 = vector.load %arg4[%c0_12, %c0_13] : memref<1x32xf32, #tpu.memory_space<vmem>>, vector<1x32xf32>
      %16 = vector.broadcast %15 : vector<1x32xf32> to vector<16x32xf32>
      %17 = arith.addf %14, %16 : vector<16x32xf32>
      %c0_14 = arith.constant 0 : index
      %c0_15 = arith.constant 0 : index
      %18 = vector.load %arg5[%c0_14, %c0_15] : memref<16x32xf32, #tpu.memory_space<vmem>>, vector<16x32xf32>
      %19 = arith.addf %17, %18 : vector<16x32xf32>
      %cst_16 = arith.constant dense<0.000000e+00> : vector<16xf32>
      %20 = vector.multi_reduction <add>, %19, %cst_16 [1] : vector<16x32xf32> to vector<16xf32>
      %21 = vector.shape_cast %20 : vector<16xf32> to vector<16x1xf32>
      %cst_17 = arith.constant 3.200000e+01 : f32
      %22 = vector.broadcast %cst_17 : f32 to vector<16x1xf32>
      %23 = arith.divf %21, %22 : vector<16x1xf32>
      %24 = vector.broadcast %23 : vector<16x1xf32> to vector<16x32xf32>
      %25 = arith.subf %19, %24 : vector<16x32xf32>
      %26 = arith.mulf %25, %25 : vector<16x32xf32>
      %cst_18 = arith.constant dense<0.000000e+00> : vector<16xf32>
      %27 = vector.multi_reduction <add>, %26, %cst_18 [1] : vector<16x32xf32> to vector<16xf32>
      %28 = vector.shape_cast %27 : vector<16xf32> to vector<16x1xf32>
      %cst_19 = arith.constant 3.200000e+01 : f32
      %29 = vector.broadcast %cst_19 : f32 to vector<16x1xf32>
      %30 = arith.divf %28, %29 : vector<16x1xf32>
      %31 = vector.broadcast %23 : vector<16x1xf32> to vector<16x32xf32>
      %32 = arith.subf %19, %31 : vector<16x32xf32>
      %cst_20 = arith.constant 9.99999997E-7 : f32
      %33 = vector.broadcast %cst_20 : f32 to vector<16x1xf32>
      %34 = arith.addf %30, %33 : vector<16x1xf32>
      %35 = math.rsqrt %34 : vector<16x1xf32>
      %36 = vector.broadcast %35 : vector<16x1xf32> to vector<16x32xf32>
      %37 = arith.mulf %32, %36 : vector<16x32xf32>
      %c0_21 = arith.constant 0 : index
      %c0_22 = arith.constant 0 : index
      %38 = vector.load %arg6[%c0_21, %c0_22] : memref<1x32xf32, #tpu.memory_space<vmem>>, vector<1x32xf32>
      %39 = vector.broadcast %38 : vector<1x32xf32> to vector<16x32xf32>
      %40 = arith.mulf %37, %39 : vector<16x32xf32>
      %c0_23 = arith.constant 0 : index
      %c0_24 = arith.constant 0 : index
      %41 = vector.load %arg7[%c0_23, %c0_24] : memref<1x32xf32, #tpu.memory_space<vmem>>, vector<1x32xf32>
      %42 = vector.broadcast %41 : vector<1x32xf32> to vector<16x32xf32>
      %43 = arith.addf %40, %42 : vector<16x32xf32>
      %c0_25 = arith.constant 0 : index
      %c0_26 = arith.constant 0 : index
      %44 = vector.load %arg8[%c0_25, %c0_26] : memref<16x32xf32, #tpu.memory_space<vmem>>, vector<16x32xf32>
      tpu.vector_store %arg8[%c0_25, %c0_26], %43 {strides = array<i32>} : memref<16x32xf32, #tpu.memory_space<vmem>>, vector<16x32xf32>,
    } else {
    }
    return
  }
  func.func @transform_0(%arg0: i32, %arg1: i32) -> (i32, i32) {
    %c0_i32 = arith.constant 0 : i32
    return %arg0, %arg1 : i32, i32
  }
  func.func @transform_1(%arg0: i32, %arg1: i32) -> (i32, i32) {
    %c0_i32 = arith.constant 0 : i32
    %c0_i32_0 = arith.constant 0 : i32
    return %arg1, %c0_i32 : i32, i32
  }
  func.func @transform_2(%arg0: i32, %arg1: i32) -> (i32, i32) {
    %c0_i32 = arith.constant 0 : i32
    %c0_i32_0 = arith.constant 0 : i32
    %c0_i32_1 = arith.constant 0 : i32
    return %c0_i32, %c0_i32_0 : i32, i32
  }
  func.func @transform_3(%arg0: i32, %arg1: i32) -> (i32, i32) {
    %c0_i32 = arith.constant 0 : i32
    %c0_i32_0 = arith.constant 0 : i32
    return %arg0, %c0_i32 : i32, i32
  }
  func.func @transform_4(%arg0: i32, %arg1: i32) -> (i32, i32) {
    %c0_i32 = arith.constant 0 : i32
    %c0_i32_0 = arith.constant 0 : i32
    %c0_i32_1 = arith.constant 0 : i32
    return %c0_i32, %c0_i32_0 : i32, i32
  }
  func.func @transform_5(%arg0: i32, %arg1: i32) -> (i32, i32) {
    %c0_i32 = arith.constant 0 : i32
    %c0_i32_0 = arith.constant 0 : i32
    %c0_i32_1 = arith.constant 0 : i32
    return %c0_i32, %c0_i32_0 : i32, i32
  }
  func.func @transform_6(%arg0: i32, %arg1: i32) -> (i32, i32) {
    %c0_i32 = arith.constant 0 : i32
    %c0_i32_0 = arith.constant 0 : i32
    return %arg0, %c0_i32 : i32, i32
  }
}

module attributes {stable_mosaic.version = 11 : i64} {
  func.func @_sdpa_kernel(%arg0: i32, %arg1: memref<1x4x8x8xf32, #tpu.memory_space<vmem>>, %arg2: memref<1x4x8x8xf32, #tpu.memory_space<vmem>>, %arg3: memref<1x4x8x8xf32, #tpu.memory_space<vmem>>, %arg4: memref<1x8x8xf32, #tpu.memory_space<vmem>>, %arg5: memref<1x8x32xf32, #tpu.memory_space<vmem>>) attributes {dimension_semantics = [#tpu.dimension_semantics<parallel>], iteration_bounds = array<i64: 2>, scalar_prefetch = 0 : i64, scratch_operands = 0 : i64, tpu.core_type = #tpu.core_type<tc>, window_params = [{transform_indices = @transform_0, window_bounds = array<i64: 1, 4, 8, 8>}, {transform_indices = @transform_1, window_bounds = array<i64: 1, 4, 8, 8>}, {transform_indices = @transform_2, window_bounds = array<i64: 1, 4, 8, 8>}, {transform_indices = @transform_3, window_bounds = array<i64: 1, 8, 8>}, {transform_indices = @transform_4, window_bounds = array<i64: 1, 8, 32>}]} {
    %c0 = arith.constant 0 : index
    %c0_0 = arith.constant 0 : index
    %c0_1 = arith.constant 0 : index
    %0 = vector.load %arg4[%c0, %c0_0, %c0_1] : memref<1x8x8xf32, #tpu.memory_space<vmem>>, vector<1x8x8xf32>
    %1 = vector.shape_cast %0 : vector<1x8x8xf32> to vector<8x8xf32>
    %c0_2 = arith.constant 0 : index
    %c0_3 = arith.constant 0 : index
    %c0_4 = arith.constant 0 : index
    %c0_5 = arith.constant 0 : index
    %2 = vector.load %arg1[%c0_2, %c0_3, %c0_4, %c0_5] : memref<1x4x8x8xf32, #tpu.memory_space<vmem>>, vector<1x1x8x8xf32>
    %3 = vector.shape_cast %2 : vector<1x1x8x8xf32> to vector<8x8xf32>
    %4 = arith.truncf %3 : vector<8x8xf32> to vector<8x8xbf16>
    %c0_6 = arith.constant 0 : index
    %c0_7 = arith.constant 0 : index
    %c0_8 = arith.constant 0 : index
    %c0_9 = arith.constant 0 : index
    %5 = vector.load %arg2[%c0_6, %c0_7, %c0_8, %c0_9] : memref<1x4x8x8xf32, #tpu.memory_space<vmem>>, vector<1x1x8x8xf32>
    %6 = vector.shape_cast %5 : vector<1x1x8x8xf32> to vector<8x8xf32>
    %7 = arith.truncf %6 : vector<8x8xf32> to vector<8x8xbf16>
    %c0_10 = arith.constant 0 : index
    %c0_11 = arith.constant 0 : index
    %c0_12 = arith.constant 0 : index
    %c0_13 = arith.constant 0 : index
    %8 = vector.load %arg3[%c0_10, %c0_11, %c0_12, %c0_13] : memref<1x4x8x8xf32, #tpu.memory_space<vmem>>, vector<1x1x8x8xf32>
    %9 = vector.shape_cast %8 : vector<1x1x8x8xf32> to vector<8x8xf32>
    %10 = arith.truncf %9 : vector<8x8xf32> to vector<8x8xbf16>
    %cst = arith.constant dense<0.000000e+00> : vector<8x8xf32>
    %11 = tpu.matmul %4, %7, %cst {dimension_numbers = #tpu.dot_dimension_numbers<[1], [1], [0], [0], [0, 0, 1, 0], [], []>} : vector<8x8xbf16>, vector<8x8xbf16>, vector<8x8xf32> -> vector<8x8xf32>
    %cst_14 = arith.constant 0.353553385 : f32
    %12 = vector.broadcast %cst_14 : f32 to vector<8x8xf32>
    %13 = arith.mulf %11, %12 : vector<8x8xf32>
    %14 = arith.addf %13, %1 : vector<8x8xf32>
    %cst_15 = arith.constant dense<0xFF800000> : vector<8xf32>
    %15 = vector.multi_reduction <maximumf>, %14, %cst_15 [1] : vector<8x8xf32> to vector<8xf32>
    %16 = vector.shape_cast %15 : vector<8xf32> to vector<8x1xf32>
    %17 = vector.broadcast %16 : vector<8x1xf32> to vector<8x8xf32>
    %18 = arith.subf %14, %17 : vector<8x8xf32>
    %19 = math.exp %18 : vector<8x8xf32>
    %cst_16 = arith.constant dense<0.000000e+00> : vector<8xf32>
    %20 = vector.multi_reduction <add>, %19, %cst_16 [1] : vector<8x8xf32> to vector<8xf32>
    %21 = vector.shape_cast %20 : vector<8xf32> to vector<8x1xf32>
    %22 = tpu.reciprocal %21 {approx = true} : vector<8x1xf32> -> vector<8x1xf32>
    %23 = vector.broadcast %22 : vector<8x1xf32> to vector<8x8xf32>
    %24 = arith.mulf %19, %23 : vector<8x8xf32>
    %25 = arith.truncf %24 : vector<8x8xf32> to vector<8x8xbf16>
    %cst_17 = arith.constant dense<0.000000e+00> : vector<8x8xf32>
    %26 = tpu.matmul %25, %10, %cst_17 {dimension_numbers = #tpu.dot_dimension_numbers<[1], [0], [0], [1], [0, 0, 1, 1], [], []>} : vector<8x8xbf16>, vector<8x8xbf16>, vector<8x8xf32> -> vector<8x8xf32>
    %c0_18 = arith.constant 0 : index
    %c0_19 = arith.constant 0 : index
    %c0_20 = arith.constant 0 : index
    %27 = vector.load %arg5[%c0_18, %c0_19, %c0_20] : memref<1x8x32xf32, #tpu.memory_space<vmem>>, vector<1x8x8xf32>
    %28 = vector.shape_cast %27 : vector<1x8x8xf32> to vector<8x8xf32>
    %29 = vector.shape_cast %26 : vector<8x8xf32> to vector<1x8x8xf32>
    tpu.vector_store %arg5[%c0_18, %c0_19, %c0_20], %29 {strides = array<i32>} : memref<1x8x32xf32, #tpu.memory_space<vmem>>, vector<1x8x8xf32>,
    %c0_21 = arith.constant 0 : index
    %c1 = arith.constant 1 : index
    %c0_22 = arith.constant 0 : index
    %c0_23 = arith.constant 0 : index
    %30 = vector.load %arg1[%c0_21, %c1, %c0_22, %c0_23] : memref<1x4x8x8xf32, #tpu.memory_space<vmem>>, vector<1x1x8x8xf32>
    %31 = vector.shape_cast %30 : vector<1x1x8x8xf32> to vector<8x8xf32>
    %32 = arith.truncf %31 : vector<8x8xf32> to vector<8x8xbf16>
    %c0_24 = arith.constant 0 : index
    %c1_25 = arith.constant 1 : index
    %c0_26 = arith.constant 0 : index
    %c0_27 = arith.constant 0 : index
    %33 = vector.load %arg2[%c0_24, %c1_25, %c0_26, %c0_27] : memref<1x4x8x8xf32, #tpu.memory_space<vmem>>, vector<1x1x8x8xf32>
    %34 = vector.shape_cast %33 : vector<1x1x8x8xf32> to vector<8x8xf32>
    %35 = arith.truncf %34 : vector<8x8xf32> to vector<8x8xbf16>
    %c0_28 = arith.constant 0 : index
    %c1_29 = arith.constant 1 : index
    %c0_30 = arith.constant 0 : index
    %c0_31 = arith.constant 0 : index
    %36 = vector.load %arg3[%c0_28, %c1_29, %c0_30, %c0_31] : memref<1x4x8x8xf32, #tpu.memory_space<vmem>>, vector<1x1x8x8xf32>
    %37 = vector.shape_cast %36 : vector<1x1x8x8xf32> to vector<8x8xf32>
    %38 = arith.truncf %37 : vector<8x8xf32> to vector<8x8xbf16>
    %cst_32 = arith.constant dense<0.000000e+00> : vector<8x8xf32>
    %39 = tpu.matmul %32, %35, %cst_32 {dimension_numbers = #tpu.dot_dimension_numbers<[1], [1], [0], [0], [0, 0, 1, 0], [], []>} : vector<8x8xbf16>, vector<8x8xbf16>, vector<8x8xf32> -> vector<8x8xf32>
    %cst_33 = arith.constant 0.353553385 : f32
    %40 = vector.broadcast %cst_33 : f32 to vector<8x8xf32>
    %41 = arith.mulf %39, %40 : vector<8x8xf32>
    %42 = arith.addf %41, %1 : vector<8x8xf32>
    %cst_34 = arith.constant dense<0xFF800000> : vector<8xf32>
    %43 = vector.multi_reduction <maximumf>, %42, %cst_34 [1] : vector<8x8xf32> to vector<8xf32>
    %44 = vector.shape_cast %43 : vector<8xf32> to vector<8x1xf32>
    %45 = vector.broadcast %44 : vector<8x1xf32> to vector<8x8xf32>
    %46 = arith.subf %42, %45 : vector<8x8xf32>
    %47 = math.exp %46 : vector<8x8xf32>
    %cst_35 = arith.constant dense<0.000000e+00> : vector<8xf32>
    %48 = vector.multi_reduction <add>, %47, %cst_35 [1] : vector<8x8xf32> to vector<8xf32>
    %49 = vector.shape_cast %48 : vector<8xf32> to vector<8x1xf32>
    %50 = tpu.reciprocal %49 {approx = true} : vector<8x1xf32> -> vector<8x1xf32>
    %51 = vector.broadcast %50 : vector<8x1xf32> to vector<8x8xf32>
    %52 = arith.mulf %47, %51 : vector<8x8xf32>
    %53 = arith.truncf %52 : vector<8x8xf32> to vector<8x8xbf16>
    %cst_36 = arith.constant dense<0.000000e+00> : vector<8x8xf32>
    %54 = tpu.matmul %53, %38, %cst_36 {dimension_numbers = #tpu.dot_dimension_numbers<[1], [0], [0], [1], [0, 0, 1, 1], [], []>} : vector<8x8xbf16>, vector<8x8xbf16>, vector<8x8xf32> -> vector<8x8xf32>
    %c0_37 = arith.constant 0 : index
    %c0_38 = arith.constant 0 : index
    %c8 = arith.constant 8 : index
    %55 = vector.load %arg5[%c0_37, %c0_38, %c8] : memref<1x8x32xf32, #tpu.memory_space<vmem>>, vector<1x8x8xf32>
    %56 = vector.shape_cast %55 : vector<1x8x8xf32> to vector<8x8xf32>
    %57 = vector.shape_cast %54 : vector<8x8xf32> to vector<1x8x8xf32>
    tpu.vector_store %arg5[%c0_37, %c0_38, %c8], %57 {strides = array<i32>} : memref<1x8x32xf32, #tpu.memory_space<vmem>>, vector<1x8x8xf32>,
    %c0_39 = arith.constant 0 : index
    %c2 = arith.constant 2 : index
    %c0_40 = arith.constant 0 : index
    %c0_41 = arith.constant 0 : index
    %58 = vector.load %arg1[%c0_39, %c2, %c0_40, %c0_41] : memref<1x4x8x8xf32, #tpu.memory_space<vmem>>, vector<1x1x8x8xf32>
    %59 = vector.shape_cast %58 : vector<1x1x8x8xf32> to vector<8x8xf32>
    %60 = arith.truncf %59 : vector<8x8xf32> to vector<8x8xbf16>
    %c0_42 = arith.constant 0 : index
    %c2_43 = arith.constant 2 : index
    %c0_44 = arith.constant 0 : index
    %c0_45 = arith.constant 0 : index
    %61 = vector.load %arg2[%c0_42, %c2_43, %c0_44, %c0_45] : memref<1x4x8x8xf32, #tpu.memory_space<vmem>>, vector<1x1x8x8xf32>
    %62 = vector.shape_cast %61 : vector<1x1x8x8xf32> to vector<8x8xf32>
    %63 = arith.truncf %62 : vector<8x8xf32> to vector<8x8xbf16>
    %c0_46 = arith.constant 0 : index
    %c2_47 = arith.constant 2 : index
    %c0_48 = arith.constant 0 : index
    %c0_49 = arith.constant 0 : index
    %64 = vector.load %arg3[%c0_46, %c2_47, %c0_48, %c0_49] : memref<1x4x8x8xf32, #tpu.memory_space<vmem>>, vector<1x1x8x8xf32>
    %65 = vector.shape_cast %64 : vector<1x1x8x8xf32> to vector<8x8xf32>
    %66 = arith.truncf %65 : vector<8x8xf32> to vector<8x8xbf16>
    %cst_50 = arith.constant dense<0.000000e+00> : vector<8x8xf32>
    %67 = tpu.matmul %60, %63, %cst_50 {dimension_numbers = #tpu.dot_dimension_numbers<[1], [1], [0], [0], [0, 0, 1, 0], [], []>} : vector<8x8xbf16>, vector<8x8xbf16>, vector<8x8xf32> -> vector<8x8xf32>
    %cst_51 = arith.constant 0.353553385 : f32
    %68 = vector.broadcast %cst_51 : f32 to vector<8x8xf32>
    %69 = arith.mulf %67, %68 : vector<8x8xf32>
    %70 = arith.addf %69, %1 : vector<8x8xf32>
    %cst_52 = arith.constant dense<0xFF800000> : vector<8xf32>
    %71 = vector.multi_reduction <maximumf>, %70, %cst_52 [1] : vector<8x8xf32> to vector<8xf32>
    %72 = vector.shape_cast %71 : vector<8xf32> to vector<8x1xf32>
    %73 = vector.broadcast %72 : vector<8x1xf32> to vector<8x8xf32>
    %74 = arith.subf %70, %73 : vector<8x8xf32>
    %75 = math.exp %74 : vector<8x8xf32>
    %cst_53 = arith.constant dense<0.000000e+00> : vector<8xf32>
    %76 = vector.multi_reduction <add>, %75, %cst_53 [1] : vector<8x8xf32> to vector<8xf32>
    %77 = vector.shape_cast %76 : vector<8xf32> to vector<8x1xf32>
    %78 = tpu.reciprocal %77 {approx = true} : vector<8x1xf32> -> vector<8x1xf32>
    %79 = vector.broadcast %78 : vector<8x1xf32> to vector<8x8xf32>
    %80 = arith.mulf %75, %79 : vector<8x8xf32>
    %81 = arith.truncf %80 : vector<8x8xf32> to vector<8x8xbf16>
    %cst_54 = arith.constant dense<0.000000e+00> : vector<8x8xf32>
    %82 = tpu.matmul %81, %66, %cst_54 {dimension_numbers = #tpu.dot_dimension_numbers<[1], [0], [0], [1], [0, 0, 1, 1], [], []>} : vector<8x8xbf16>, vector<8x8xbf16>, vector<8x8xf32> -> vector<8x8xf32>
    %c0_55 = arith.constant 0 : index
    %c0_56 = arith.constant 0 : index
    %c16 = arith.constant 16 : index
    %83 = vector.load %arg5[%c0_55, %c0_56, %c16] : memref<1x8x32xf32, #tpu.memory_space<vmem>>, vector<1x8x8xf32>
    %84 = vector.shape_cast %83 : vector<1x8x8xf32> to vector<8x8xf32>
    %85 = vector.shape_cast %82 : vector<8x8xf32> to vector<1x8x8xf32>
    tpu.vector_store %arg5[%c0_55, %c0_56, %c16], %85 {strides = array<i32>} : memref<1x8x32xf32, #tpu.memory_space<vmem>>, vector<1x8x8xf32>,
    %c0_57 = arith.constant 0 : index
    %c3 = arith.constant 3 : index
    %c0_58 = arith.constant 0 : index
    %c0_59 = arith.constant 0 : index
    %86 = vector.load %arg1[%c0_57, %c3, %c0_58, %c0_59] : memref<1x4x8x8xf32, #tpu.memory_space<vmem>>, vector<1x1x8x8xf32>
    %87 = vector.shape_cast %86 : vector<1x1x8x8xf32> to vector<8x8xf32>
    %88 = arith.truncf %87 : vector<8x8xf32> to vector<8x8xbf16>
    %c0_60 = arith.constant 0 : index
    %c3_61 = arith.constant 3 : index
    %c0_62 = arith.constant 0 : index
    %c0_63 = arith.constant 0 : index
    %89 = vector.load %arg2[%c0_60, %c3_61, %c0_62, %c0_63] : memref<1x4x8x8xf32, #tpu.memory_space<vmem>>, vector<1x1x8x8xf32>
    %90 = vector.shape_cast %89 : vector<1x1x8x8xf32> to vector<8x8xf32>
    %91 = arith.truncf %90 : vector<8x8xf32> to vector<8x8xbf16>
    %c0_64 = arith.constant 0 : index
    %c3_65 = arith.constant 3 : index
    %c0_66 = arith.constant 0 : index
    %c0_67 = arith.constant 0 : index
    %92 = vector.load %arg3[%c0_64, %c3_65, %c0_66, %c0_67] : memref<1x4x8x8xf32, #tpu.memory_space<vmem>>, vector<1x1x8x8xf32>
    %93 = vector.shape_cast %92 : vector<1x1x8x8xf32> to vector<8x8xf32>
    %94 = arith.truncf %93 : vector<8x8xf32> to vector<8x8xbf16>
    %cst_68 = arith.constant dense<0.000000e+00> : vector<8x8xf32>
    %95 = tpu.matmul %88, %91, %cst_68 {dimension_numbers = #tpu.dot_dimension_numbers<[1], [1], [0], [0], [0, 0, 1, 0], [], []>} : vector<8x8xbf16>, vector<8x8xbf16>, vector<8x8xf32> -> vector<8x8xf32>
    %cst_69 = arith.constant 0.353553385 : f32
    %96 = vector.broadcast %cst_69 : f32 to vector<8x8xf32>
    %97 = arith.mulf %95, %96 : vector<8x8xf32>
    %98 = arith.addf %97, %1 : vector<8x8xf32>
    %cst_70 = arith.constant dense<0xFF800000> : vector<8xf32>
    %99 = vector.multi_reduction <maximumf>, %98, %cst_70 [1] : vector<8x8xf32> to vector<8xf32>
    %100 = vector.shape_cast %99 : vector<8xf32> to vector<8x1xf32>
    %101 = vector.broadcast %100 : vector<8x1xf32> to vector<8x8xf32>
    %102 = arith.subf %98, %101 : vector<8x8xf32>
    %103 = math.exp %102 : vector<8x8xf32>
    %cst_71 = arith.constant dense<0.000000e+00> : vector<8xf32>
    %104 = vector.multi_reduction <add>, %103, %cst_71 [1] : vector<8x8xf32> to vector<8xf32>
    %105 = vector.shape_cast %104 : vector<8xf32> to vector<8x1xf32>
    %106 = tpu.reciprocal %105 {approx = true} : vector<8x1xf32> -> vector<8x1xf32>
    %107 = vector.broadcast %106 : vector<8x1xf32> to vector<8x8xf32>
    %108 = arith.mulf %103, %107 : vector<8x8xf32>
    %109 = arith.truncf %108 : vector<8x8xf32> to vector<8x8xbf16>
    %cst_72 = arith.constant dense<0.000000e+00> : vector<8x8xf32>
    %110 = tpu.matmul %109, %94, %cst_72 {dimension_numbers = #tpu.dot_dimension_numbers<[1], [0], [0], [1], [0, 0, 1, 1], [], []>} : vector<8x8xbf16>, vector<8x8xbf16>, vector<8x8xf32> -> vector<8x8xf32>
    %c0_73 = arith.constant 0 : index
    %c0_74 = arith.constant 0 : index
    %c24 = arith.constant 24 : index
    %111 = vector.load %arg5[%c0_73, %c0_74, %c24] : memref<1x8x32xf32, #tpu.memory_space<vmem>>, vector<1x8x8xf32>
    %112 = vector.shape_cast %111 : vector<1x8x8xf32> to vector<8x8xf32>
    %113 = vector.shape_cast %110 : vector<8x8xf32> to vector<1x8x8xf32>
    tpu.vector_store %arg5[%c0_73, %c0_74, %c24], %113 {strides = array<i32>} : memref<1x8x32xf32, #tpu.memory_space<vmem>>, vector<1x8x8xf32>,
    return
  }
  func.func @transform_0(%arg0: i32) -> (i32, i32, i32, i32) {
    %c0_i32 = arith.constant 0 : i32
    %c0_i32_0 = arith.constant 0 : i32
    %c0_i32_1 = arith.constant 0 : i32
    %c0_i32_2 = arith.constant 0 : i32
    return %arg0, %c0_i32, %c0_i32_0, %c0_i32_1 : i32, i32, i32, i32
  }
  func.func @transform_1(%arg0: i32) -> (i32, i32, i32, i32) {
    %c0_i32 = arith.constant 0 : i32
    %c0_i32_0 = arith.constant 0 : i32
    %c0_i32_1 = arith.constant 0 : i32
    %c0_i32_2 = arith.constant 0 : i32
    return %arg0, %c0_i32, %c0_i32_0, %c0_i32_1 : i32, i32, i32, i32
  }
  func.func @transform_2(%arg0: i32) -> (i32, i32, i32, i32) {
    %c0_i32 = arith.constant 0 : i32
    %c0_i32_0 = arith.constant 0 : i32
    %c0_i32_1 = arith.constant 0 : i32
    %c0_i32_2 = arith.constant 0 : i32
    return %arg0, %c0_i32, %c0_i32_0, %c0_i32_1 : i32, i32, i32, i32
  }
  func.func @transform_3(%arg0: i32) -> (i32, i32, i32) {
    %c0_i32 = arith.constant 0 : i32
    %c0_i32_0 = arith.constant 0 : i32
    %c0_i32_1 = arith.constant 0 : i32
    return %arg0, %c0_i32, %c0_i32_0 : i32, i32, i32
  }
  func.func @transform_4(%arg0: i32) -> (i32, i32, i32) {
    %c0_i32 = arith.constant 0 : i32
    %c0_i32_0 = arith.constant 0 : i32
    %c0_i32_1 = arith.constant 0 : i32
    return %arg0, %c0_i32, %c0_i32_0 : i32, i32, i32
  }
}

module attributes {stable_mosaic.version = 11 : i64} {
  func.func @_matmul_bias_kernel(%arg0: i32, %arg1: i32, %arg2: i32, %arg3: memref<16x32xf32, #tpu.memory_space<vmem>>, %arg4: memref<32x64xf32, #tpu.memory_space<vmem>>, %arg5: memref<1x64xf32, #tpu.memory_space<vmem>>, %arg6: memref<16x64xf32, #tpu.memory_space<vmem>>, %arg7: memref<16x64xf32, #tpu.memory_space<vmem>>) attributes {dimension_semantics = [#tpu.dimension_semantics<parallel>, #tpu.dimension_semantics<parallel>, #tpu.dimension_semantics<arbitrary>], iteration_bounds = array<i64: 1, 1, 1>, scalar_prefetch = 0 : i64, scratch_operands = 1 : i64, tpu.core_type = #tpu.core_type<tc>, window_params = [{transform_indices = @transform_0, window_bounds = array<i64: 16, 32>}, {transform_indices = @transform_1, window_bounds = array<i64: 32, 64>}, {transform_indices = @transform_2, window_bounds = array<i64: 1, 64>}, {transform_indices = @transform_3, window_bounds = array<i64: 16, 64>}]} {
    %c0_i32 = arith.constant 0 : i32
    %0 = arith.cmpi eq, %arg2, %c0_i32 : i32
    %1 = arith.extui %0 : i1 to i32
    %c0_i32_0 = arith.constant 0 : i32
    %2 = arith.cmpi ne, %1, %c0_i32_0 : i32
    scf.if %2 {
      %cst_10 = arith.constant 0.000000e+00 : f32
      %14 = vector.broadcast %cst_10 : f32 to vector<16x64xf32>
      %c0_11 = arith.constant 0 : index
      %c0_12 = arith.constant 0 : index
      %15 = vector.load %arg7[%c0_11, %c0_12] : memref<16x64xf32, #tpu.memory_space<vmem>>, vector<16x64xf32>
      tpu.vector_store %arg7[%c0_11, %c0_12], %14 {strides = array<i32>} : memref<16x64xf32, #tpu.memory_space<vmem>>, vector<16x64xf32>,
    } else {
    }
    %c0 = arith.constant 0 : index
    %c0_1 = arith.constant 0 : index
    %3 = vector.load %arg7[%c0, %c0_1] : memref<16x64xf32, #tpu.memory_space<vmem>>, vector<16x64xf32>
    %c0_2 = arith.constant 0 : index
    %c0_3 = arith.constant 0 : index
    %4 = vector.load %arg3[%c0_2, %c0_3] : memref<16x32xf32, #tpu.memory_space<vmem>>, vector<16x32xf32>
    %5 = arith.truncf %4 : vector<16x32xf32> to vector<16x32xbf16>
    %c0_4 = arith.constant 0 : index
    %c0_5 = arith.constant 0 : index
    %6 = vector.load %arg4[%c0_4, %c0_5] : memref<32x64xf32, #tpu.memory_space<vmem>>, vector<32x64xf32>
    %7 = arith.truncf %6 : vector<32x64xf32> to vector<32x64xbf16>
    %cst = arith.constant dense<0.000000e+00> : vector<16x64xf32>
    %8 = tpu.matmul %5, %7, %cst {dimension_numbers = #tpu.dot_dimension_numbers<[1], [0], [0], [1], [0, 0, 1, 1], [], []>} : vector<16x32xbf16>, vector<32x64xbf16>, vector<16x64xf32> -> vector<16x64xf32>
    %9 = arith.addf %3, %8 : vector<16x64xf32>
    %c0_6 = arith.constant 0 : index
    %c0_7 = arith.constant 0 : index
    %10 = vector.load %arg7[%c0_6, %c0_7] : memref<16x64xf32, #tpu.memory_space<vmem>>, vector<16x64xf32>
    tpu.vector_store %arg7[%c0_6, %c0_7], %9 {strides = array<i32>} : memref<16x64xf32, #tpu.memory_space<vmem>>, vector<16x64xf32>,
    %c0_i32_8 = arith.constant 0 : i32
    %11 = arith.cmpi eq, %arg2, %c0_i32_8 : i32
    %12 = arith.extui %11 : i1 to i32
    %c0_i32_9 = arith.constant 0 : i32
    %13 = arith.cmpi ne, %12, %c0_i32_9 : i32
    scf.if %13 {
      %c0_10 = arith.constant 0 : index
      %c0_11 = arith.constant 0 : index
      %14 = vector.load %arg7[%c0_10, %c0_11] : memref<16x64xf32, #tpu.memory_space<vmem>>, vector<16x64xf32>
      %c0_12 = arith.constant 0 : index
      %c0_13 = arith.constant 0 : index
      %15 = vector.load %arg5[%c0_12, %c0_13] : memref<1x64xf32, #tpu.memory_space<vmem>>, vector<1x64xf32>
      %16 = vector.broadcast %15 : vector<1x64xf32> to vector<16x64xf32>
      %17 = arith.addf %14, %16 : vector<16x64xf32>
      %c0_14 = arith.constant 0 : index
      %c0_15 = arith.constant 0 : index
      %18 = vector.load %arg6[%c0_14, %c0_15] : memref<16x64xf32, #tpu.memory_space<vmem>>, vector<16x64xf32>
      tpu.vector_store %arg6[%c0_14, %c0_15], %17 {strides = array<i32>} : memref<16x64xf32, #tpu.memory_space<vmem>>, vector<16x64xf32>,
    } else {
    }
    return
  }
  func.func @transform_0(%arg0: i32, %arg1: i32, %arg2: i32) -> (i32, i32) {
    %c0_i32 = arith.constant 0 : i32
    return %arg0, %arg2 : i32, i32
  }
  func.func @transform_1(%arg0: i32, %arg1: i32, %arg2: i32) -> (i32, i32) {
    %c0_i32 = arith.constant 0 : i32
    return %arg2, %arg1 : i32, i32
  }
  func.func @transform_2(%arg0: i32, %arg1: i32, %arg2: i32) -> (i32, i32) {
    %c0_i32 = arith.constant 0 : i32
    %c0_i32_0 = arith.constant 0 : i32
    return %c0_i32, %arg1 : i32, i32
  }
  func.func @transform_3(%arg0: i32, %arg1: i32, %arg2: i32) -> (i32, i32) {
    %c0_i32 = arith.constant 0 : i32
    return %arg0, %arg1 : i32, i32
  }
}

module attributes {stable_mosaic.version = 11 : i64} {
  func.func @_ffn_res_ln_kernel(%arg0: i32, %arg1: memref<16x32xf32, #tpu.memory_space<vmem>>, %arg2: memref<32x64xf32, #tpu.memory_space<vmem>>, %arg3: memref<1x64xf32, #tpu.memory_space<vmem>>, %arg4: memref<64x32xf32, #tpu.memory_space<vmem>>, %arg5: memref<1x32xf32, #tpu.memory_space<vmem>>, %arg6: memref<16x32xf32, #tpu.memory_space<vmem>>, %arg7: memref<1x32xf32, #tpu.memory_space<vmem>>, %arg8: memref<1x32xf32, #tpu.memory_space<vmem>>, %arg9: memref<16x32xf32, #tpu.memory_space<vmem>>) attributes {dimension_semantics = [#tpu.dimension_semantics<parallel>], iteration_bounds = array<i64: 1>, scalar_prefetch = 0 : i64, scratch_operands = 0 : i64, tpu.core_type = #tpu.core_type<tc>, window_params = [{transform_indices = @transform_0, window_bounds = array<i64: 16, 32>}, {pipeline_mode = #tpu.pipeline_mode<synchronous>, transform_indices = @transform_1, window_bounds = array<i64: 32, 64>}, {pipeline_mode = #tpu.pipeline_mode<synchronous>, transform_indices = @transform_2, window_bounds = array<i64: 1, 64>}, {pipeline_mode = #tpu.pipeline_mode<synchronous>, transform_indices = @transform_3, window_bounds = array<i64: 64, 32>}, {pipeline_mode = #tpu.pipeline_mode<synchronous>, transform_indices = @transform_4, window_bounds = array<i64: 1, 32>}, {transform_indices = @transform_5, window_bounds = array<i64: 16, 32>}, {pipeline_mode = #tpu.pipeline_mode<synchronous>, transform_indices = @transform_6, window_bounds = array<i64: 1, 32>}, {pipeline_mode = #tpu.pipeline_mode<synchronous>, transform_indices = @transform_7, window_bounds = array<i64: 1, 32>}, {transform_indices = @transform_8, window_bounds = array<i64: 16, 32>}]} {
    %c0 = arith.constant 0 : index
    %c0_0 = arith.constant 0 : index
    %0 = vector.load %arg1[%c0, %c0_0] : memref<16x32xf32, #tpu.memory_space<vmem>>, vector<16x32xf32>
    %1 = arith.truncf %0 : vector<16x32xf32> to vector<16x32xbf16>
    %c0_1 = arith.constant 0 : index
    %c0_2 = arith.constant 0 : index
    %2 = vector.load %arg2[%c0_1, %c0_2] : memref<32x64xf32, #tpu.memory_space<vmem>>, vector<32x64xf32>
    %3 = arith.truncf %2 : vector<32x64xf32> to vector<32x64xbf16>
    %cst = arith.constant dense<0.000000e+00> : vector<16x64xf32>
    %4 = tpu.matmul %1, %3, %cst {dimension_numbers = #tpu.dot_dimension_numbers<[1], [0], [0], [1], [0, 0, 1, 1], [], []>} : vector<16x32xbf16>, vector<32x64xbf16>, vector<16x64xf32> -> vector<16x64xf32>
    %c0_3 = arith.constant 0 : index
    %c0_4 = arith.constant 0 : index
    %5 = vector.load %arg3[%c0_3, %c0_4] : memref<1x64xf32, #tpu.memory_space<vmem>>, vector<1x64xf32>
    %6 = vector.broadcast %5 : vector<1x64xf32> to vector<16x64xf32>
    %7 = arith.addf %4, %6 : vector<16x64xf32>
    %cst_5 = arith.constant 0.000000e+00 : f32
    %8 = vector.broadcast %cst_5 : f32 to vector<16x64xf32>
    %9 = arith.maximumf %7, %8 : vector<16x64xf32>
    %10 = arith.truncf %9 : vector<16x64xf32> to vector<16x64xbf16>
    %c0_6 = arith.constant 0 : index
    %c0_7 = arith.constant 0 : index
    %11 = vector.load %arg4[%c0_6, %c0_7] : memref<64x32xf32, #tpu.memory_space<vmem>>, vector<64x32xf32>
    %12 = arith.truncf %11 : vector<64x32xf32> to vector<64x32xbf16>
    %cst_8 = arith.constant dense<0.000000e+00> : vector<16x32xf32>
    %13 = tpu.matmul %10, %12, %cst_8 {dimension_numbers = #tpu.dot_dimension_numbers<[1], [0], [0], [1], [0, 0, 1, 1], [], []>} : vector<16x64xbf16>, vector<64x32xbf16>, vector<16x32xf32> -> vector<16x32xf32>
    %c0_9 = arith.constant 0 : index
    %c0_10 = arith.constant 0 : index
    %14 = vector.load %arg5[%c0_9, %c0_10] : memref<1x32xf32, #tpu.memory_space<vmem>>, vector<1x32xf32>
    %15 = vector.broadcast %14 : vector<1x32xf32> to vector<16x32xf32>
    %16 = arith.addf %13, %15 : vector<16x32xf32>
    %c0_11 = arith.constant 0 : index
    %c0_12 = arith.constant 0 : index
    %17 = vector.load %arg6[%c0_11, %c0_12] : memref<16x32xf32, #tpu.memory_space<vmem>>, vector<16x32xf32>
    %18 = arith.addf %16, %17 : vector<16x32xf32>
    %cst_13 = arith.constant dense<0.000000e+00> : vector<16xf32>
    %19 = vector.multi_reduction <add>, %18, %cst_13 [1] : vector<16x32xf32> to vector<16xf32>
    %20 = vector.shape_cast %19 : vector<16xf32> to vector<16x1xf32>
    %cst_14 = arith.constant 3.200000e+01 : f32
    %21 = vector.broadcast %cst_14 : f32 to vector<16x1xf32>
    %22 = arith.divf %20, %21 : vector<16x1xf32>
    %23 = vector.broadcast %22 : vector<16x1xf32> to vector<16x32xf32>
    %24 = arith.subf %18, %23 : vector<16x32xf32>
    %25 = arith.mulf %24, %24 : vector<16x32xf32>
    %cst_15 = arith.constant dense<0.000000e+00> : vector<16xf32>
    %26 = vector.multi_reduction <add>, %25, %cst_15 [1] : vector<16x32xf32> to vector<16xf32>
    %27 = vector.shape_cast %26 : vector<16xf32> to vector<16x1xf32>
    %cst_16 = arith.constant 3.200000e+01 : f32
    %28 = vector.broadcast %cst_16 : f32 to vector<16x1xf32>
    %29 = arith.divf %27, %28 : vector<16x1xf32>
    %30 = vector.broadcast %22 : vector<16x1xf32> to vector<16x32xf32>
    %31 = arith.subf %18, %30 : vector<16x32xf32>
    %cst_17 = arith.constant 9.99999997E-7 : f32
    %32 = vector.broadcast %cst_17 : f32 to vector<16x1xf32>
    %33 = arith.addf %29, %32 : vector<16x1xf32>
    %34 = math.rsqrt %33 : vector<16x1xf32>
    %35 = vector.broadcast %34 : vector<16x1xf32> to vector<16x32xf32>
    %36 = arith.mulf %31, %35 : vector<16x32xf32>
    %c0_18 = arith.constant 0 : index
    %c0_19 = arith.constant 0 : index
    %37 = vector.load %arg7[%c0_18, %c0_19] : memref<1x32xf32, #tpu.memory_space<vmem>>, vector<1x32xf32>
    %38 = vector.broadcast %37 : vector<1x32xf32> to vector<16x32xf32>
    %39 = arith.mulf %36, %38 : vector<16x32xf32>
    %c0_20 = arith.constant 0 : index
    %c0_21 = arith.constant 0 : index
    %40 = vector.load %arg8[%c0_20, %c0_21] : memref<1x32xf32, #tpu.memory_space<vmem>>, vector<1x32xf32>
    %41 = vector.broadcast %40 : vector<1x32xf32> to vector<16x32xf32>
    %42 = arith.addf %39, %41 : vector<16x32xf32>
    %c0_22 = arith.constant 0 : index
    %c0_23 = arith.constant 0 : index
    %43 = vector.load %arg9[%c0_22, %c0_23] : memref<16x32xf32, #tpu.memory_space<vmem>>, vector<16x32xf32>
    tpu.vector_store %arg9[%c0_22, %c0_23], %42 {strides = array<i32>} : memref<16x32xf32, #tpu.memory_space<vmem>>, vector<16x32xf32>,
    return
  }
  func.func @transform_0(%arg0: i32) -> (i32, i32) {
    %c0_i32 = arith.constant 0 : i32
    %c0_i32_0 = arith.constant 0 : i32
    return %arg0, %c0_i32 : i32, i32
  }
  func.func @transform_1(%arg0: i32) -> (i32, i32) {
    %c0_i32 = arith.constant 0 : i32
    %c0_i32_0 = arith.constant 0 : i32
    %c0_i32_1 = arith.constant 0 : i32
    return %c0_i32, %c0_i32_0 : i32, i32
  }
  func.func @transform_2(%arg0: i32) -> (i32, i32) {
    %c0_i32 = arith.constant 0 : i32
    %c0_i32_0 = arith.constant 0 : i32
    %c0_i32_1 = arith.constant 0 : i32
    return %c0_i32, %c0_i32_0 : i32, i32
  }
  func.func @transform_3(%arg0: i32) -> (i32, i32) {
    %c0_i32 = arith.constant 0 : i32
    %c0_i32_0 = arith.constant 0 : i32
    %c0_i32_1 = arith.constant 0 : i32
    return %c0_i32, %c0_i32_0 : i32, i32
  }
  func.func @transform_4(%arg0: i32) -> (i32, i32) {
    %c0_i32 = arith.constant 0 : i32
    %c0_i32_0 = arith.constant 0 : i32
    %c0_i32_1 = arith.constant 0 : i32
    return %c0_i32, %c0_i32_0 : i32, i32
  }
  func.func @transform_5(%arg0: i32) -> (i32, i32) {
    %c0_i32 = arith.constant 0 : i32
    %c0_i32_0 = arith.constant 0 : i32
    return %arg0, %c0_i32 : i32, i32
  }
  func.func @transform_6(%arg0: i32) -> (i32, i32) {
    %c0_i32 = arith.constant 0 : i32
    %c0_i32_0 = arith.constant 0 : i32
    %c0_i32_1 = arith.constant 0 : i32
    return %c0_i32, %c0_i32_0 : i32, i32
  }
  func.func @transform_7(%arg0: i32) -> (i32, i32) {
    %c0_i32 = arith.constant 0 : i32
    %c0_i32_0 = arith.constant 0 : i32
    %c0_i32_1 = arith.constant 0 : i32
    return %c0_i32, %c0_i32_0 : i32, i32
  }
  func.func @transform_8(%arg0: i32) -> (i32, i32) {
    %c0_i32 = arith.constant 0 : i32
    %c0_i32_0 = arith.constant 0 : i32
    return %arg0, %c0_i32 : i32, i32
  }
}

module attributes {stable_mosaic.version = 11 : i64} {
  func.func @_matmul_bias_kernel(%arg0: i32, %arg1: i32, %arg2: i32, %arg3: memref<16x32xf32, #tpu.memory_space<vmem>>, %arg4: memref<32x128xf32, #tpu.memory_space<vmem>>, %arg5: memref<1x128xf32, #tpu.memory_space<vmem>>, %arg6: memref<16x128xf32, #tpu.memory_space<vmem>>, %arg7: memref<16x128xf32, #tpu.memory_space<vmem>>) attributes {dimension_semantics = [#tpu.dimension_semantics<parallel>, #tpu.dimension_semantics<parallel>, #tpu.dimension_semantics<arbitrary>], iteration_bounds = array<i64: 1, 1, 1>, scalar_prefetch = 0 : i64, scratch_operands = 1 : i64, tpu.core_type = #tpu.core_type<tc>, window_params = [{transform_indices = @transform_0, window_bounds = array<i64: 16, 32>}, {transform_indices = @transform_1, window_bounds = array<i64: 32, 128>}, {transform_indices = @transform_2, window_bounds = array<i64: 1, 128>}, {transform_indices = @transform_3, window_bounds = array<i64: 16, 128>}]} {
    %c0_i32 = arith.constant 0 : i32
    %0 = arith.cmpi eq, %arg2, %c0_i32 : i32
    %1 = arith.extui %0 : i1 to i32
    %c0_i32_0 = arith.constant 0 : i32
    %2 = arith.cmpi ne, %1, %c0_i32_0 : i32
    scf.if %2 {
      %cst_10 = arith.constant 0.000000e+00 : f32
      %14 = vector.broadcast %cst_10 : f32 to vector<16x128xf32>
      %c0_11 = arith.constant 0 : index
      %c0_12 = arith.constant 0 : index
      %15 = vector.load %arg7[%c0_11, %c0_12] : memref<16x128xf32, #tpu.memory_space<vmem>>, vector<16x128xf32>
      tpu.vector_store %arg7[%c0_11, %c0_12], %14 {strides = array<i32>} : memref<16x128xf32, #tpu.memory_space<vmem>>, vector<16x128xf32>,
    } else {
    }
    %c0 = arith.constant 0 : index
    %c0_1 = arith.constant 0 : index
    %3 = vector.load %arg7[%c0, %c0_1] : memref<16x128xf32, #tpu.memory_space<vmem>>, vector<16x128xf32>
    %c0_2 = arith.constant 0 : index
    %c0_3 = arith.constant 0 : index
    %4 = vector.load %arg3[%c0_2, %c0_3] : memref<16x32xf32, #tpu.memory_space<vmem>>, vector<16x32xf32>
    %5 = arith.truncf %4 : vector<16x32xf32> to vector<16x32xbf16>
    %c0_4 = arith.constant 0 : index
    %c0_5 = arith.constant 0 : index
    %6 = vector.load %arg4[%c0_4, %c0_5] : memref<32x128xf32, #tpu.memory_space<vmem>>, vector<32x128xf32>
    %7 = arith.truncf %6 : vector<32x128xf32> to vector<32x128xbf16>
    %cst = arith.constant dense<0.000000e+00> : vector<16x128xf32>
    %8 = tpu.matmul %5, %7, %cst {dimension_numbers = #tpu.dot_dimension_numbers<[1], [0], [0], [1], [0, 0, 1, 1], [], []>} : vector<16x32xbf16>, vector<32x128xbf16>, vector<16x128xf32> -> vector<16x128xf32>
    %9 = arith.addf %3, %8 : vector<16x128xf32>
    %c0_6 = arith.constant 0 : index
    %c0_7 = arith.constant 0 : index
    %10 = vector.load %arg7[%c0_6, %c0_7] : memref<16x128xf32, #tpu.memory_space<vmem>>, vector<16x128xf32>
    tpu.vector_store %arg7[%c0_6, %c0_7], %9 {strides = array<i32>} : memref<16x128xf32, #tpu.memory_space<vmem>>, vector<16x128xf32>,
    %c0_i32_8 = arith.constant 0 : i32
    %11 = arith.cmpi eq, %arg2, %c0_i32_8 : i32
    %12 = arith.extui %11 : i1 to i32
    %c0_i32_9 = arith.constant 0 : i32
    %13 = arith.cmpi ne, %12, %c0_i32_9 : i32
    scf.if %13 {
      %c0_10 = arith.constant 0 : index
      %c0_11 = arith.constant 0 : index
      %14 = vector.load %arg7[%c0_10, %c0_11] : memref<16x128xf32, #tpu.memory_space<vmem>>, vector<16x128xf32>
      %c0_12 = arith.constant 0 : index
      %c0_13 = arith.constant 0 : index
      %15 = vector.load %arg5[%c0_12, %c0_13] : memref<1x128xf32, #tpu.memory_space<vmem>>, vector<1x128xf32>
      %16 = vector.broadcast %15 : vector<1x128xf32> to vector<16x128xf32>
      %17 = arith.addf %14, %16 : vector<16x128xf32>
      %c0_14 = arith.constant 0 : index
      %c0_15 = arith.constant 0 : index
      %18 = vector.load %arg6[%c0_14, %c0_15] : memref<16x128xf32, #tpu.memory_space<vmem>>, vector<16x128xf32>
      tpu.vector_store %arg6[%c0_14, %c0_15], %17 {strides = array<i32>} : memref<16x128xf32, #tpu.memory_space<vmem>>, vector<16x128xf32>,
    } else {
    }
    return
  }
  func.func @transform_0(%arg0: i32, %arg1: i32, %arg2: i32) -> (i32, i32) {
    %c0_i32 = arith.constant 0 : i32
    return %arg0, %arg2 : i32, i32
  }
  func.func @transform_1(%arg0: i32, %arg1: i32, %arg2: i32) -> (i32, i32) {
    %c0_i32 = arith.constant 0 : i32
    return %arg2, %arg1 : i32, i32
  }
  func.func @transform_2(%arg0: i32, %arg1: i32, %arg2: i32) -> (i32, i32) {
    %c0_i32 = arith.constant 0 : i32
    %c0_i32_0 = arith.constant 0 : i32
    return %c0_i32, %arg1 : i32, i32
  }
  func.func @transform_3(%arg0: i32, %arg1: i32, %arg2: i32) -> (i32, i32) {
    %c0_i32 = arith.constant 0 : i32
    return %arg0, %arg1 : i32, i32
  }
}

</mosaic_0001>

<llo_original>
// kernel: transformer_forward.33
$region0: #{transformer_forward.33}
  #allocation0 [shape = 'u32[]', space=smem, size = 0x4, offset = 0x4, fixed_abs, tag = 'smem constant byte address 0x4 - core index']
  #allocation1 [shape = 'u32[144,128]{1,0:T(1,128)}', space=vmem, size = 0x12000, scoped, tag = 'internal scratch']
  #allocation2 [shape = 'f32[16,96]{1,0:T(8,128)}', space=vmem, size = 0x2000, scoped, tag = 'scratch operand']
  %s0 = inlined_call_operand.hbm [shape: f32[16,32], index: 0, kind: input, shape index: {}]
  %s1 = inlined_call_operand.hbm [shape: f32[32,96], index: 1, kind: input, shape index: {}]
  %s2 = inlined_call_operand.hbm [shape: f32[1,96], index: 2, kind: input, shape index: {}]
  %s3 = inlined_call_operand.hbm [shape: f32[16,96], index: 3, kind: output, shape index: {}]
  %s4 = sld [smem:[#allocation0]]
  $region42: #{transformer_forward.33} parent=0
    _
  %s6 = ssub.s32 1, %s4
  %s7 = scalar_select 0, %s6, %s4
  $region1: #{transformer_forward.33} parent=0
    #allocation3 [shape = 'u8[8192]{0}', space=vmem, size = 0x2000, scoped, tag = 'input window, operand 0, single buffered']
    #allocation4 [shape = 's32[1]{0}', space=sflag, size = 0x4, scoped, tag = 'scoped memory for transformer_forward.33']
    #allocation5 [shape = 's32[1]{0}', space=sflag, size = 0x4, scoped, tag = 'scoped memory for transformer_forward.33']
    #allocation6 [shape = 'u8[16384]{0}', space=vmem, size = 0x4000, scoped, tag = 'input window, operand 1, single buffered']
    #allocation7 [shape = 's32[1]{0}', space=sflag, size = 0x4, scoped, tag = 'scoped memory for transformer_forward.33']
    #allocation8 [shape = 'u8[512]{0}', space=vmem, size = 0x400, scoped, tag = 'input window, operand 2, single buffered']
    #allocation9 [shape = 'u8[8192]{0}', space=vmem, size = 0x2000, scoped, tag = 'output window, operand 0, single buffered']
    %8 = vsyncpa [#allocation4], 0
    %9 = vsyncpa [#allocation7], 0
    %10 = vsyncpa [#allocation5], 0
    // Predicated region
    $region2: #{transformer_forward.33} parent=1 // pred_check
      _
    $region3: #{transformer_forward.33} parent=1 // pred_check_branch
      %12 = sbr.rel (0) target = $region5
    $region4: #{transformer_forward.33} parent=1 // pred_region
      %s14 = ssub.s32 256, 256
      %15 = vsyncadd [#allocation4], %s14
      %s16 = sshll.u32 [#allocation3], 4
      %s17 = int_to_ptr.vmem [resolvable:$true] %s16
      %22 = dma.hbm_to_vmem [thread:$0]  %s0, 256, %s17, [#allocation4], 128, 128, 8
    $region5: #{transformer_forward.33} parent=1 // pred_fallthru
      _
    // Predicated region
    $region6: #{transformer_forward.33} parent=1 // pred_check
      _
    $region7: #{transformer_forward.33} parent=1 // pred_check_branch
      %24 = sbr.rel (0) target = $region9
    $region8: #{transformer_forward.33} parent=1 // pred_region
      %s26 = ssub.s32 512, 512
      %27 = vsyncadd [#allocation7], %s26
      %s28 = sshll.u32 [#allocation6], 4
      %s29 = int_to_ptr.vmem [resolvable:$true] %s28
      %34 = dma.hbm_to_vmem [thread:$0]  %s1, 512, %s29, [#allocation7], 128, 128, 8
    $region9: #{transformer_forward.33} parent=1 // pred_fallthru
      _
    // Predicated region
    $region10: #{transformer_forward.33} parent=1 // pred_check
      _
    $region11: #{transformer_forward.33} parent=1 // pred_check_branch
      %36 = sbr.rel (0) target = $region13
    $region12: #{transformer_forward.33} parent=1 // pred_region
      %s38 = ssub.s32 16, 16
      %39 = vsyncadd [#allocation7], %s38
      %s41 = sshll.u32 [#allocation8], 4
      %s42 = int_to_ptr.vmem [resolvable:$true] %s41
      %44 = dma.hbm_to_vmem [thread:$0]  %s2, 16, %s42, [#allocation7]
    $region13: #{transformer_forward.33} parent=1 // pred_fallthru
      _
    // Predicated region
    $region14: #{transformer_forward.33} parent=1 // pred_check
      _
    $region15: #{transformer_forward.33} parent=1 // pred_check_branch
      %46 = sbr.rel (0) target = $region17
    $region16: #{transformer_forward.33} parent=1 // pred_region
      %47 = dma.done [#allocation4], 256
    $region17: #{transformer_forward.33} parent=1 // pred_fallthru
      _
    // Predicated region
    $region18: #{transformer_forward.33} parent=1 // pred_check
      _
    $region19: #{transformer_forward.33} parent=1 // pred_check_branch
      %49 = sbr.rel (0) target = $region21
    $region20: #{transformer_forward.33} parent=1 // pred_region
      %50 = dma.done [#allocation7], 512
    $region21: #{transformer_forward.33} parent=1 // pred_fallthru
      _
    // Predicated region
    $region22: #{transformer_forward.33} parent=1 // pred_check
      _
    $region23: #{transformer_forward.33} parent=1 // pred_check_branch
      %52 = sbr.rel (0) target = $region25
    $region24: #{transformer_forward.33} parent=1 // pred_region
      %53 = dma.done [#allocation7], 16
    $region25: #{transformer_forward.33} parent=1 // pred_fallthru
      _
    %p55 = scmp.eq.s32.totalorder 0, 0
    // Predicated region
    $region26: #{transformer_forward.33} parent=1 // pred_check
      %p56 = pneg %p55
    $region27: #{transformer_forward.33} parent=1 // pred_check_branch
      %58 = sbr.rel (%p56) target = $region29
    $region28: #{transformer_forward.33} parent=1 // pred_region
      %vm59 = vcmask 785408
      %60 = vst.msk [vmem:[#allocation2] sm:$0xff] %vm59, 0.0
      %61 = vst.msk [vmem:[#allocation2 + $0x8] sm:$0xff] %vm59, 0.0
    $region29: #{transformer_forward.33} parent=1 // pred_fallthru
      _
    %v62 = vld [vmem:[#allocation2] sm:$0xff]
    %v63 = vld [vmem:[#allocation2 + $0x8] sm:$0xff]
    %v64 = vld [vmem:[#allocation3] sm:$0xff]
    %v65 = vld [vmem:[#allocation3 + $0x8] sm:$0xff]
    %v66 = vpack.c.bf16 %v65, %v64
    %v67 = vld [vmem:[#allocation6] sm:$0xff]
    %v68 = vld [vmem:[#allocation6 + $0x8] sm:$0xff]
    %v69 = vld [vmem:[#allocation6 + $0x10] sm:$0xff]
    %v70 = vld [vmem:[#allocation6 + $0x18] sm:$0xff]
    %v71 = vpack.c.bf16 %v68, %v67
    %v72 = vpack.c.bf16 %v70, %v69
    %vm73 = vcmask 261120
    %v75 = vsel %vm73, %v66, 0
    %77 = vmatprep.subr.bf16.mxu0 0
    %78 = vmatpush1.bf16.msra.mxu0 %v71
    %79 = vmatprep.subr.bf16.mxu0 0
    %80 = vmatpush1.bf16.msra.mxu0 %v72
    %81 = vmatprep.subr.bf16.mxu0 0
    %82 = vmatpush1.bf16.msra.mxu0 0
    %83 = vmatprep.subr.bf16.mxu0 0
    %84 = vmatpush1.bf16.msra.mxu0 0
    %85 = vmatprep.subr.bf16.mxu0 0
    %86 = vmatpush1.bf16.msra.mxu0 0
    %87 = vmatprep.subr.bf16.mxu0 0
    %88 = vmatpush1.bf16.msra.mxu0 0
    %89 = vmatprep.subr.bf16.mxu0 0
    %90 = vmatpush1.bf16.msra.mxu0 0
    %91 = vmatprep.subr.bf16.mxu0 0
    %92 = vmatpush1.bf16.msra.mxu0 0
    %93 = vmatprep.subr.bf16.mxu0 0
    %94 = vmatpush1.bf16.msra.mxu0 0
    %95 = vmatprep.subr.bf16.mxu0 0
    %96 = vmatpush1.bf16.msra.mxu0 0
    %97 = vmatprep.subr.bf16.mxu0 0
    %98 = vmatpush1.bf16.msra.mxu0 0
    %99 = vmatprep.subr.bf16.mxu0 0
    %100 = vmatpush1.bf16.msra.mxu0 0
    %101 = vmatprep.subr.bf16.mxu0 0
    %102 = vmatpush1.bf16.msra.mxu0 0
    %103 = vmatprep.subr.bf16.mxu0 0
    %104 = vmatpush1.bf16.msra.mxu0 0
    %105 = vmatprep.subr.bf16.mxu0 0
    %106 = vmatpush1.bf16.msra.mxu0 0
    %107 = vmatprep.subr.bf16.mxu0 0
    %108 = vmatpush1.bf16.msra.mxu0 0
    %109 = vmatprep.mubr.bf16.mxu0 0
    %110 = vmatmul.mubr.bf16.gmra.mrb[0].mxu0 %v75
    %v111 = vpop.f32.mrb[0].mxu0
    %v112 = vadd.f32 0.0, %v111
    %v113 = vpop.f32.mrb[0].mxu0
    %v114 = vpop.f32.mrb[0].mxu0
    %v115 = vadd.f32 0.0, %v114
    %v116 = vpop.f32.mrb[0].mxu0
    %117 = vdwg.mxu0
    %v118 = vadd.f32 %v62, %v112
    %v119 = vadd.f32 %v63, %v115
    %vm120 = vcmask 785408
    %121 = vst.msk [vmem:[#allocation2] sm:$0xff] %vm120, %v118
    %122 = vst.msk [vmem:[#allocation2 + $0x8] sm:$0xff] %vm120, %v119
    // Predicated region
    $region30: #{transformer_forward.33} parent=1 // pred_check
      %p123 = pneg %p55
    $region31: #{transformer_forward.33} parent=1 // pred_check_branch
      %125 = sbr.rel (%p123) target = $region33
    $region32: #{transformer_forward.33} parent=1 // pred_region
      %v126 = vld [vmem:[#allocation2] sm:$0xff]
      %v127 = vld [vmem:[#allocation2 + $0x8] sm:$0xff]
      %v128 = vld [vmem:[#allocation8] sm:$0x1]
      %v130 = vlaneseq
      %v131 = vshrl.u32 %v130, 7
      %v132 = vsub.s32 0, %v131
      %v133 = vrot.slane %v128, %v132
      %v135 = vadd.f32 %v126, %v133
      %v136 = vadd.f32 %v127, %v133
      %137 = vst.msk [vmem:[#allocation9] sm:$0xff] %vm120, %v135
      %138 = vst.msk [vmem:[#allocation9 + $0x8] sm:$0xff] %vm120, %v136
    $region33: #{transformer_forward.33} parent=1 // pred_fallthru
      _
    // Predicated region
    $region34: #{transformer_forward.33} parent=1 // pred_check
      _
    $region35: #{transformer_forward.33} parent=1 // pred_check_branch
      %140 = sbr.rel (0) target = $region37
    $region36: #{transformer_forward.33} parent=1 // pred_region
      %s142 = ssub.s32 256, 256
      %143 = vsyncadd [#allocation5], %s142
      %s144 = sshll.u32 [#allocation9], 4
      %s145 = int_to_ptr.vmem [resolvable:$true] %s144
      %150 = dma.vmem_to_hbm [thread:$0]  %s145, 256, %s3, [#allocation5], 128, 128, 8
    $region37: #{transformer_forward.33} parent=1 // pred_fallthru
      _
    // Predicated region
    $region38: #{transformer_forward.33} parent=1 // pred_check
      _
    $region39: #{transformer_forward.33} parent=1 // pred_check_branch
      %152 = sbr.rel (0) target = $region41
    $region40: #{transformer_forward.33} parent=1 // pred_region
      %153 = dma.done [#allocation5], 256
    $region41: #{transformer_forward.33} parent=1 // pred_fallthru
      _
    %154 = vsyncpa [#allocation4], 1
    %155 = vsyncpa [#allocation7], 1
    %156 = vsyncpa [#allocation5], 1

// kernel: transformer_forward.35
$region0: #{transformer_forward.35}
  #allocation0 [shape = 'u32[]', space=smem, size = 0x4, offset = 0x4, fixed_abs, tag = 'smem constant byte address 0x4 - core index']
  #allocation1 [shape = 'u32[144,128]{1,0:T(1,128)}', space=vmem, size = 0x12000, scoped, tag = 'internal scratch']
  #allocation2 [shape = 'f32[16,32]{1,0:T(8,128)}', space=vmem, size = 0x2000, scoped, tag = 'scratch operand']
  %s0 = inlined_call_operand.hbm [shape: f32[16,32], index: 0, kind: input, shape index: {}]
  %s1 = inlined_call_operand.hbm [shape: f32[32,32], index: 1, kind: input, shape index: {}]
  %s2 = inlined_call_operand.hbm [shape: f32[1,32], index: 2, kind: input, shape index: {}]
  %s3 = inlined_call_operand.hbm [shape: f32[16,32], index: 3, kind: input, shape index: {}]
  %s4 = inlined_call_operand.hbm [shape: f32[1,32], index: 4, kind: input, shape index: {}]
  %s5 = inlined_call_operand.hbm [shape: f32[1,32], index: 5, kind: input, shape index: {}]
  %s6 = inlined_call_operand.hbm [shape: f32[16,32], index: 6, kind: output, shape index: {}]
  %s7 = sld [smem:[#allocation0]]
  $region66: #{transformer_forward.35} parent=0
    _
  %s9 = ssub.s32 1, %s7
  %s10 = scalar_select 0, %s9, %s7
  $region1: #{transformer_forward.35} parent=0
    #allocation3 [shape = 'u8[8192]{0}', space=vmem, size = 0x2000, scoped, tag = 'input window, operand 0, single buffered']
    #allocation4 [shape = 's32[1]{0}', space=sflag, size = 0x4, scoped, tag = 'scoped memory for transformer_forward.35']
    #allocation5 [shape = 's32[1]{0}', space=sflag, size = 0x4, scoped, tag = 'scoped memory for transformer_forward.35']
    #allocation6 [shape = 'u8[16384]{0}', space=vmem, size = 0x4000, scoped, tag = 'input window, operand 1, single buffered']
    #allocation7 [shape = 's32[1]{0}', space=sflag, size = 0x4, scoped, tag = 'scoped memory for transformer_forward.35']
    #allocation8 [shape = 'u8[512]{0}', space=vmem, size = 0x400, scoped, tag = 'input window, operand 2, single buffered']
    #allocation9 [shape = 'u8[8192]{0}', space=vmem, size = 0x2000, scoped, tag = 'input window, operand 3, single buffered']
    #allocation10 [shape = 's32[1]{0}', space=sflag, size = 0x4, scoped, tag = 'scoped memory for transformer_forward.35']
    #allocation11 [shape = 'u8[512]{0}', space=vmem, size = 0x400, scoped, tag = 'input window, operand 4, single buffered']
    #allocation12 [shape = 'u8[512]{0}', space=vmem, size = 0x400, scoped, tag = 'input window, operand 5, single buffered']
    #allocation13 [shape = 's32[1]{0}', space=sflag, size = 0x4, scoped, tag = 'scoped memory for transformer_forward.35']
    #allocation14 [shape = 'u8[8192]{0}', space=vmem, size = 0x2000, scoped, tag = 'output window, operand 0, single buffered']
    %11 = vsyncpa [#allocation4], 0
    %12 = vsyncpa [#allocation7], 0
    %13 = vsyncpa [#allocation10], 0
    %14 = vsyncpa [#allocation13], 0
    %15 = vsyncpa [#allocation5], 0
    // Predicated region
    $region2: #{transformer_forward.35} parent=1 // pred_check
      _
    $region3: #{transformer_forward.35} parent=1 // pred_check_branch
      %17 = sbr.rel (0) target = $region5
    $region4: #{transformer_forward.35} parent=1 // pred_region
      %s19 = ssub.s32 256, 256
      %20 = vsyncadd [#allocation4], %s19
      %s21 = sshll.u32 [#allocation3], 4
      %s22 = int_to_ptr.vmem [resolvable:$true] %s21
      %27 = dma.hbm_to_vmem [thread:$0]  %s0, 256, %s22, [#allocation4], 128, 128, 8
    $region5: #{transformer_forward.35} parent=1 // pred_fallthru
      _
    // Predicated region
    $region6: #{transformer_forward.35} parent=1 // pred_check
      _
    $region7: #{transformer_forward.35} parent=1 // pred_check_branch
      %29 = sbr.rel (0) target = $region9
    $region8: #{transformer_forward.35} parent=1 // pred_region
      %s31 = ssub.s32 512, 512
      %32 = vsyncadd [#allocation7], %s31
      %s33 = sshll.u32 [#allocation6], 4
      %s34 = int_to_ptr.vmem [resolvable:$true] %s33
      %39 = dma.hbm_to_vmem [thread:$0]  %s1, 512, %s34, [#allocation7], 128, 128, 8
    $region9: #{transformer_forward.35} parent=1 // pred_fallthru
      _
    // Predicated region
    $region10: #{transformer_forward.35} parent=1 // pred_check
      _
    $region11: #{transformer_forward.35} parent=1 // pred_check_branch
      %41 = sbr.rel (0) target = $region13
    $region12: #{transformer_forward.35} parent=1 // pred_region
      %s43 = ssub.s32 16, 16
      %44 = vsyncadd [#allocation7], %s43
      %s46 = sshll.u32 [#allocation8], 4
      %s47 = int_to_ptr.vmem [resolvable:$true] %s46
      %49 = dma.hbm_to_vmem [thread:$0]  %s2, 16, %s47, [#allocation7]
    $region13: #{transformer_forward.35} parent=1 // pred_fallthru
      _
    // Predicated region
    $region14: #{transformer_forward.35} parent=1 // pred_check
      _
    $region15: #{transformer_forward.35} parent=1 // pred_check_branch
      %51 = sbr.rel (0) target = $region17
    $region16: #{transformer_forward.35} parent=1 // pred_region
      %s53 = ssub.s32 256, 256
      %54 = vsyncadd [#allocation10], %s53
      %s55 = sshll.u32 [#allocation9], 4
      %s56 = int_to_ptr.vmem [resolvable:$true] %s55
      %61 = dma.hbm_to_vmem [thread:$0]  %s3, 256, %s56, [#allocation10], 128, 128, 8
    $region17: #{transformer_forward.35} parent=1 // pred_fallthru
      _
    // Predicated region
    $region18: #{transformer_forward.35} parent=1 // pred_check
      _
    $region19: #{transformer_forward.35} parent=1 // pred_check_branch
      %63 = sbr.rel (0) target = $region21
    $region20: #{transformer_forward.35} parent=1 // pred_region
      %s65 = ssub.s32 16, 16
      %66 = vsyncadd [#allocation10], %s65
      %s68 = sshll.u32 [#allocation11], 4
      %s69 = int_to_ptr.vmem [resolvable:$true] %s68
      %71 = dma.hbm_to_vmem [thread:$0]  %s4, 16, %s69, [#allocation10]
    $region21: #{transformer_forward.35} parent=1 // pred_fallthru
      _
    // Predicated region
    $region22: #{transformer_forward.35} parent=1 // pred_check
      _
    $region23: #{transformer_forward.35} parent=1 // pred_check_branch
      %73 = sbr.rel (0) target = $region25
    $region24: #{transformer_forward.35} parent=1 // pred_region
      %s75 = ssub.s32 16, 16
      %76 = vsyncadd [#allocation13], %s75
      %s78 = sshll.u32 [#allocation12], 4
      %s79 = int_to_ptr.vmem [resolvable:$true] %s78
      %81 = dma.hbm_to_vmem [thread:$0]  %s5, 16, %s79, [#allocation13]
    $region25: #{transformer_forward.35} parent=1 // pred_fallthru
      _
    // Predicated region
    $region26: #{transformer_forward.35} parent=1 // pred_check
      _
    $region27: #{transformer_forward.35} parent=1 // pred_check_branch
      %83 = sbr.rel (0) target = $region29
    $region28: #{transformer_forward.35} parent=1 // pred_region
      %84 = dma.done [#allocation4], 256
    $region29: #{transformer_forward.35} parent=1 // pred_fallthru
      _
    // Predicated region
    $region30: #{transformer_forward.35} parent=1 // pred_check
      _
    $region31: #{transformer_forward.35} parent=1 // pred_check_branch
      %86 = sbr.rel (0) target = $region33
    $region32: #{transformer_forward.35} parent=1 // pred_region
      %87 = dma.done [#allocation7], 512
    $region33: #{transformer_forward.35} parent=1 // pred_fallthru
      _
    // Predicated region
    $region34: #{transformer_forward.35} parent=1 // pred_check
      _
    $region35: #{transformer_forward.35} parent=1 // pred_check_branch
      %89 = sbr.rel (0) target = $region37
    $region36: #{transformer_forward.35} parent=1 // pred_region
      %90 = dma.done [#allocation7], 16
    $region37: #{transformer_forward.35} parent=1 // pred_fallthru
      _
    // Predicated region
    $region38: #{transformer_forward.35} parent=1 // pred_check
      _
    $region39: #{transformer_forward.35} parent=1 // pred_check_branch
      %92 = sbr.rel (0) target = $region41
    $region40: #{transformer_forward.35} parent=1 // pred_region
      %93 = dma.done [#allocation10], 256
    $region41: #{transformer_forward.35} parent=1 // pred_fallthru
      _
    // Predicated region
    $region42: #{transformer_forward.35} parent=1 // pred_check
      _
    $region43: #{transformer_forward.35} parent=1 // pred_check_branch
      %95 = sbr.rel (0) target = $region45
    $region44: #{transformer_forward.35} parent=1 // pred_region
      %96 = dma.done [#allocation10], 16
    $region45: #{transformer_forward.35} parent=1 // pred_fallthru
      _
    // Predicated region
    $region46: #{transformer_forward.35} parent=1 // pred_check
      _
    $region47: #{transformer_forward.35} parent=1 // pred_check_branch
      %98 = sbr.rel (0) target = $region49
    $region48: #{transformer_forward.35} parent=1 // pred_region
      %99 = dma.done [#allocation13], 16
    $region49: #{transformer_forward.35} parent=1 // pred_fallthru
      _
    %p101 = scmp.eq.s32.totalorder 0, 0
    // Predicated region
    $region50: #{transformer_forward.35} parent=1 // pred_check
      %p102 = pneg %p101
    $region51: #{transformer_forward.35} parent=1 // pred_check_branch
      %104 = sbr.rel (%p102) target = $region53
    $region52: #{transformer_forward.35} parent=1 // pred_region
      %vm105 = vcmask 261120
      %106 = vst.msk [vmem:[#allocation2] sm:$0xff] %vm105, 0.0
      %107 = vst.msk [vmem:[#allocation2 + $0x8] sm:$0xff] %vm105, 0.0
    $region53: #{transformer_forward.35} parent=1 // pred_fallthru
      _
    %v108 = vld [vmem:[#allocation2] sm:$0xff]
    %v109 = vld [vmem:[#allocation2 + $0x8] sm:$0xff]
    %v110 = vld [vmem:[#allocation3] sm:$0xff]
    %v111 = vld [vmem:[#allocation3 + $0x8] sm:$0xff]
    %v112 = vpack.c.bf16 %v111, %v110
    %v113 = vld [vmem:[#allocation6] sm:$0xff]
    %v114 = vld [vmem:[#allocation6 + $0x8] sm:$0xff]
    %v115 = vld [vmem:[#allocation6 + $0x10] sm:$0xff]
    %v116 = vld [vmem:[#allocation6 + $0x18] sm:$0xff]
    %v117 = vpack.c.bf16 %v114, %v113
    %v118 = vpack.c.bf16 %v116, %v115
    %vm119 = vcmask 261120
    %v121 = vsel %vm119, %v112, 0
    %123 = vmatprep.subr.bf16.mxu0 0
    %124 = vmatpush1.bf16.msra.mxu0 %v117
    %125 = vmatprep.subr.bf16.mxu0 0
    %126 = vmatpush1.bf16.msra.mxu0 %v118
    %127 = vmatprep.subr.bf16.mxu0 0
    %128 = vmatpush1.bf16.msra.mxu0 0
    %129 = vmatprep.subr.bf16.mxu0 0
    %130 = vmatpush1.bf16.msra.mxu0 0
    %131 = vmatprep.subr.bf16.mxu0 0
    %132 = vmatpush1.bf16.msra.mxu0 0
    %133 = vmatprep.subr.bf16.mxu0 0
    %134 = vmatpush1.bf16.msra.mxu0 0
    %135 = vmatprep.subr.bf16.mxu0 0
    %136 = vmatpush1.bf16.msra.mxu0 0
    %137 = vmatprep.subr.bf16.mxu0 0
    %138 = vmatpush1.bf16.msra.mxu0 0
    %139 = vmatprep.subr.bf16.mxu0 0
    %140 = vmatpush1.bf16.msra.mxu0 0
    %141 = vmatprep.subr.bf16.mxu0 0
    %142 = vmatpush1.bf16.msra.mxu0 0
    %143 = vmatprep.subr.bf16.mxu0 0
    %144 = vmatpush1.bf16.msra.mxu0 0
    %145 = vmatprep.subr.bf16.mxu0 0
    %146 = vmatpush1.bf16.msra.mxu0 0
    %147 = vmatprep.subr.bf16.mxu0 0
    %148 = vmatpush1.bf16.msra.mxu0 0
    %149 = vmatprep.subr.bf16.mxu0 0
    %150 = vmatpush1.bf16.msra.mxu0 0
    %151 = vmatprep.subr.bf16.mxu0 0
    %152 = vmatpush1.bf16.msra.mxu0 0
    %153 = vmatprep.subr.bf16.mxu0 0
    %154 = vmatpush1.bf16.msra.mxu0 0
    %155 = vmatprep.mubr.bf16.mxu0 0
    %156 = vmatmul.mubr.bf16.gmra.mrb[0].mxu0 %v121
    %v157 = vpop.f32.mrb[0].mxu0
    %v158 = vadd.f32 0.0, %v157
    %v159 = vpop.f32.mrb[0].mxu0
    %v160 = vpop.f32.mrb[0].mxu0
    %v161 = vadd.f32 0.0, %v160
    %v162 = vpop.f32.mrb[0].mxu0
    %163 = vdwg.mxu0
    %v164 = vadd.f32 %v108, %v158
    %v165 = vadd.f32 %v109, %v161
    %166 = vst.msk [vmem:[#allocation2] sm:$0xff] %vm119, %v164
    %167 = vst.msk [vmem:[#allocation2 + $0x8] sm:$0xff] %vm119, %v165
    // Predicated region
    $region54: #{transformer_forward.35} parent=1 // pred_check
      %p168 = pneg %p101
    $region55: #{transformer_forward.35} parent=1 // pred_check_branch
      %170 = sbr.rel (%p168) target = $region57
    $region56: #{transformer_forward.35} parent=1 // pred_region
      %v171 = vld [vmem:[#allocation2] sm:$0xff]
      %v172 = vld [vmem:[#allocation2 + $0x8] sm:$0xff]
      %v173 = vld [vmem:[#allocation8] sm:$0x1]
      %v175 = vlaneseq
      %v176 = vshrl.u32 %v175, 7
      %v177 = vsub.s32 0, %v176
      %v178 = vrot.slane %v173, %v177
      %v180 = vadd.f32 %v171, %v178
      %v181 = vadd.f32 %v172, %v178
      %v182 = vld [vmem:[#allocation9] sm:$0xff]
      %v183 = vld [vmem:[#allocation9 + $0x8] sm:$0xff]
      %v184 = vadd.f32 %v180, %v182
      %v185 = vadd.f32 %v181, %v183
      %v186 = vsel %vm119, %v184, 0.0
      %187 = vadd.xlane.f32.xlu0 %v186
      %v188 = vpop.xlane.xlu0 %187
      %v189 = vsel %vm119, %v185, 0.0
      %190 = vadd.xlane.f32.xlu0 %v189
      %v191 = vpop.xlane.xlu0 %190
      %v192 = vrcp.pop 32.0
      %v193 = vmul.f32 %v188, %v192
      %v194 = vmul.f32 %v191, %v192
      %v195 = vsub.f32 %v184, %v193
      %v196 = vsub.f32 %v185, %v194
      %v197 = vmul.f32 %v195, %v195
      %v198 = vmul.f32 %v196, %v196
      %v199 = vsel %vm119, %v197, 0.0
      %200 = vadd.xlane.f32.xlu0 %v199
      %v201 = vpop.xlane.xlu0 %200
      %v202 = vsel %vm119, %v198, 0.0
      %203 = vadd.xlane.f32.xlu0 %v202
      %v204 = vpop.xlane.xlu0 %203
      %v205 = vmul.f32 %v201, %v192
      %v206 = vmul.f32 %v204, %v192
      %v207 = vadd.f32 %v205, 1e-06
      %v208 = vadd.f32 %v206, 1e-06
      %v209 = vrsqrt.pop %v207
      %v210 = vrsqrt.pop %v208
      %v211 = vmul.f32 %v195, %v209
      %v212 = vmul.f32 %v196, %v210
      %v213 = vld [vmem:[#allocation11] sm:$0x1]
      %v215 = vlaneseq
      %v216 = vshrl.u32 %v215, 7
      %v217 = vsub.s32 0, %v216
      %v218 = vrot.slane %v213, %v217
      %v220 = vmul.f32 %v211, %v218
      %v221 = vmul.f32 %v212, %v218
      %v222 = vld [vmem:[#allocation12] sm:$0x1]
      %v224 = vlaneseq
      %v225 = vshrl.u32 %v224, 7
      %v226 = vsub.s32 0, %v225
      %v227 = vrot.slane %v222, %v226
      %v229 = vadd.f32 %v220, %v227
      %v230 = vadd.f32 %v221, %v227
      %231 = vst.msk [vmem:[#allocation14] sm:$0xff] %vm119, %v229
      %232 = vst.msk [vmem:[#allocation14 + $0x8] sm:$0xff] %vm119, %v230
    $region57: #{transformer_forward.35} parent=1 // pred_fallthru
      _
    // Predicated region
    $region58: #{transformer_forward.35} parent=1 // pred_check
      _
    $region59: #{transformer_forward.35} parent=1 // pred_check_branch
      %234 = sbr.rel (0) target = $region61
    $region60: #{transformer_forward.35} parent=1 // pred_region
      %s236 = ssub.s32 256, 256
      %237 = vsyncadd [#allocation5], %s236
      %s238 = sshll.u32 [#allocation14], 4
      %s239 = int_to_ptr.vmem [resolvable:$true] %s238
      %244 = dma.vmem_to_hbm [thread:$0]  %s239, 256, %s6, [#allocation5], 128, 128, 8
    $region61: #{transformer_forward.35} parent=1 // pred_fallthru
      _
    // Predicated region
    $region62: #{transformer_forward.35} parent=1 // pred_check
      _
    $region63: #{transformer_forward.35} parent=1 // pred_check_branch
      %246 = sbr.rel (0) target = $region65
    $region64: #{transformer_forward.35} parent=1 // pred_region
      %247 = dma.done [#allocation5], 256
    $region65: #{transformer_forward.35} parent=1 // pred_fallthru
      _
    %248 = vsyncpa [#allocation4], 1
    %249 = vsyncpa [#allocation7], 1
    %250 = vsyncpa [#allocation10], 1
    %251 = vsyncpa [#allocation13], 1
    %252 = vsyncpa [#allocation5], 1

// kernel: transformer_forward.36
$region0: #{transformer_forward.36}
  #allocation0 [shape = 'u32[]', space=smem, size = 0x4, offset = 0x4, fixed_abs, tag = 'smem constant byte address 0x4 - core index']
  #allocation1 [shape = 'u32[144,128]{1,0:T(1,128)}', space=vmem, size = 0x12000, scoped, tag = 'internal scratch']
  #allocation2 [shape = 'f32[16,32]{1,0:T(8,128)}', space=vmem, size = 0x2000, scoped, tag = 'scratch operand']
  %s0 = inlined_call_operand.hbm [shape: f32[16,32], index: 0, kind: input, shape index: {}]
  %s1 = inlined_call_operand.hbm [shape: f32[32,32], index: 1, kind: input, shape index: {}]
  %s2 = inlined_call_operand.hbm [shape: f32[1,32], index: 2, kind: input, shape index: {}]
  %s3 = inlined_call_operand.hbm [shape: f32[16,32], index: 3, kind: output, shape index: {}]
  %s4 = sld [smem:[#allocation0]]
  $region42: #{transformer_forward.36} parent=0
    _
  %s6 = ssub.s32 1, %s4
  %s7 = scalar_select 0, %s6, %s4
  $region1: #{transformer_forward.36} parent=0
    #allocation3 [shape = 'u8[8192]{0}', space=vmem, size = 0x2000, scoped, tag = 'input window, operand 0, single buffered']
    #allocation4 [shape = 's32[1]{0}', space=sflag, size = 0x4, scoped, tag = 'scoped memory for transformer_forward.36']
    #allocation5 [shape = 's32[1]{0}', space=sflag, size = 0x4, scoped, tag = 'scoped memory for transformer_forward.36']
    #allocation6 [shape = 'u8[16384]{0}', space=vmem, size = 0x4000, scoped, tag = 'input window, operand 1, single buffered']
    #allocation7 [shape = 's32[1]{0}', space=sflag, size = 0x4, scoped, tag = 'scoped memory for transformer_forward.36']
    #allocation8 [shape = 'u8[512]{0}', space=vmem, size = 0x400, scoped, tag = 'input window, operand 2, single buffered']
    #allocation9 [shape = 'u8[8192]{0}', space=vmem, size = 0x2000, scoped, tag = 'output window, operand 0, single buffered']
    %8 = vsyncpa [#allocation4], 0
    %9 = vsyncpa [#allocation7], 0
    %10 = vsyncpa [#allocation5], 0
    // Predicated region
    $region2: #{transformer_forward.36} parent=1 // pred_check
      _
    $region3: #{transformer_forward.36} parent=1 // pred_check_branch
      %12 = sbr.rel (0) target = $region5
    $region4: #{transformer_forward.36} parent=1 // pred_region
      %s14 = ssub.s32 256, 256
      %15 = vsyncadd [#allocation4], %s14
      %s16 = sshll.u32 [#allocation3], 4
      %s17 = int_to_ptr.vmem [resolvable:$true] %s16
      %22 = dma.hbm_to_vmem [thread:$0]  %s0, 256, %s17, [#allocation4], 128, 128, 8
    $region5: #{transformer_forward.36} parent=1 // pred_fallthru
      _
    // Predicated region
    $region6: #{transformer_forward.36} parent=1 // pred_check
      _
    $region7: #{transformer_forward.36} parent=1 // pred_check_branch
      %24 = sbr.rel (0) target = $region9
    $region8: #{transformer_forward.36} parent=1 // pred_region
      %s26 = ssub.s32 512, 512
      %27 = vsyncadd [#allocation7], %s26
      %s28 = sshll.u32 [#allocation6], 4
      %s29 = int_to_ptr.vmem [resolvable:$true] %s28
      %34 = dma.hbm_to_vmem [thread:$0]  %s1, 512, %s29, [#allocation7], 128, 128, 8
    $region9: #{transformer_forward.36} parent=1 // pred_fallthru
      _
    // Predicated region
    $region10: #{transformer_forward.36} parent=1 // pred_check
      _
    $region11: #{transformer_forward.36} parent=1 // pred_check_branch
      %36 = sbr.rel (0) target = $region13
    $region12: #{transformer_forward.36} parent=1 // pred_region
      %s38 = ssub.s32 16, 16
      %39 = vsyncadd [#allocation7], %s38
      %s41 = sshll.u32 [#allocation8], 4
      %s42 = int_to_ptr.vmem [resolvable:$true] %s41
      %44 = dma.hbm_to_vmem [thread:$0]  %s2, 16, %s42, [#allocation7]
    $region13: #{transformer_forward.36} parent=1 // pred_fallthru
      _
    // Predicated region
    $region14: #{transformer_forward.36} parent=1 // pred_check
      _
    $region15: #{transformer_forward.36} parent=1 // pred_check_branch
      %46 = sbr.rel (0) target = $region17
    $region16: #{transformer_forward.36} parent=1 // pred_region
      %47 = dma.done [#allocation4], 256
    $region17: #{transformer_forward.36} parent=1 // pred_fallthru
      _
    // Predicated region
    $region18: #{transformer_forward.36} parent=1 // pred_check
      _
    $region19: #{transformer_forward.36} parent=1 // pred_check_branch
      %49 = sbr.rel (0) target = $region21
    $region20: #{transformer_forward.36} parent=1 // pred_region
      %50 = dma.done [#allocation7], 512
    $region21: #{transformer_forward.36} parent=1 // pred_fallthru
      _
    // Predicated region
    $region22: #{transformer_forward.36} parent=1 // pred_check
      _
    $region23: #{transformer_forward.36} parent=1 // pred_check_branch
      %52 = sbr.rel (0) target = $region25
    $region24: #{transformer_forward.36} parent=1 // pred_region
      %53 = dma.done [#allocation7], 16
    $region25: #{transformer_forward.36} parent=1 // pred_fallthru
      _
    %p55 = scmp.eq.s32.totalorder 0, 0
    // Predicated region
    $region26: #{transformer_forward.36} parent=1 // pred_check
      %p56 = pneg %p55
    $region27: #{transformer_forward.36} parent=1 // pred_check_branch
      %58 = sbr.rel (%p56) target = $region29
    $region28: #{transformer_forward.36} parent=1 // pred_region
      %vm59 = vcmask 261120
      %60 = vst.msk [vmem:[#allocation2] sm:$0xff] %vm59, 0.0
      %61 = vst.msk [vmem:[#allocation2 + $0x8] sm:$0xff] %vm59, 0.0
    $region29: #{transformer_forward.36} parent=1 // pred_fallthru
      _
    %v62 = vld [vmem:[#allocation2] sm:$0xff]
    %v63 = vld [vmem:[#allocation2 + $0x8] sm:$0xff]
    %v64 = vld [vmem:[#allocation3] sm:$0xff]
    %v65 = vld [vmem:[#allocation3 + $0x8] sm:$0xff]
    %v66 = vpack.c.bf16 %v65, %v64
    %v67 = vld [vmem:[#allocation6] sm:$0xff]
    %v68 = vld [vmem:[#allocation6 + $0x8] sm:$0xff]
    %v69 = vld [vmem:[#allocation6 + $0x10] sm:$0xff]
    %v70 = vld [vmem:[#allocation6 + $0x18] sm:$0xff]
    %v71 = vpack.c.bf16 %v68, %v67
    %v72 = vpack.c.bf16 %v70, %v69
    %vm73 = vcmask 261120
    %v75 = vsel %vm73, %v66, 0
    %77 = vmatprep.subr.bf16.mxu0 0
    %78 = vmatpush1.bf16.msra.mxu0 %v71
    %79 = vmatprep.subr.bf16.mxu0 0
    %80 = vmatpush1.bf16.msra.mxu0 %v72
    %81 = vmatprep.subr.bf16.mxu0 0
    %82 = vmatpush1.bf16.msra.mxu0 0
    %83 = vmatprep.subr.bf16.mxu0 0
    %84 = vmatpush1.bf16.msra.mxu0 0
    %85 = vmatprep.subr.bf16.mxu0 0
    %86 = vmatpush1.bf16.msra.mxu0 0
    %87 = vmatprep.subr.bf16.mxu0 0
    %88 = vmatpush1.bf16.msra.mxu0 0
    %89 = vmatprep.subr.bf16.mxu0 0
    %90 = vmatpush1.bf16.msra.mxu0 0
    %91 = vmatprep.subr.bf16.mxu0 0
    %92 = vmatpush1.bf16.msra.mxu0 0
    %93 = vmatprep.subr.bf16.mxu0 0
    %94 = vmatpush1.bf16.msra.mxu0 0
    %95 = vmatprep.subr.bf16.mxu0 0
    %96 = vmatpush1.bf16.msra.mxu0 0
    %97 = vmatprep.subr.bf16.mxu0 0
    %98 = vmatpush1.bf16.msra.mxu0 0
    %99 = vmatprep.subr.bf16.mxu0 0
    %100 = vmatpush1.bf16.msra.mxu0 0
    %101 = vmatprep.subr.bf16.mxu0 0
    %102 = vmatpush1.bf16.msra.mxu0 0
    %103 = vmatprep.subr.bf16.mxu0 0
    %104 = vmatpush1.bf16.msra.mxu0 0
    %105 = vmatprep.subr.bf16.mxu0 0
    %106 = vmatpush1.bf16.msra.mxu0 0
    %107 = vmatprep.subr.bf16.mxu0 0
    %108 = vmatpush1.bf16.msra.mxu0 0
    %109 = vmatprep.mubr.bf16.mxu0 0
    %110 = vmatmul.mubr.bf16.gmra.mrb[0].mxu0 %v75
    %v111 = vpop.f32.mrb[0].mxu0
    %v112 = vadd.f32 0.0, %v111
    %v113 = vpop.f32.mrb[0].mxu0
    %v114 = vpop.f32.mrb[0].mxu0
    %v115 = vadd.f32 0.0, %v114
    %v116 = vpop.f32.mrb[0].mxu0
    %117 = vdwg.mxu0
    %v118 = vadd.f32 %v62, %v112
    %v119 = vadd.f32 %v63, %v115
    %120 = vst.msk [vmem:[#allocation2] sm:$0xff] %vm73, %v118
    %121 = vst.msk [vmem:[#allocation2 + $0x8] sm:$0xff] %vm73, %v119
    // Predicated region
    $region30: #{transformer_forward.36} parent=1 // pred_check
      %p122 = pneg %p55
    $region31: #{transformer_forward.36} parent=1 // pred_check_branch
      %124 = sbr.rel (%p122) target = $region33
    $region32: #{transformer_forward.36} parent=1 // pred_region
      %v125 = vld [vmem:[#allocation2] sm:$0xff]
      %v126 = vld [vmem:[#allocation2 + $0x8] sm:$0xff]
      %v127 = vld [vmem:[#allocation8] sm:$0x1]
      %v129 = vlaneseq
      %v130 = vshrl.u32 %v129, 7
      %v131 = vsub.s32 0, %v130
      %v132 = vrot.slane %v127, %v131
      %v134 = vadd.f32 %v125, %v132
      %v135 = vadd.f32 %v126, %v132
      %136 = vst.msk [vmem:[#allocation9] sm:$0xff] %vm73, %v134
      %137 = vst.msk [vmem:[#allocation9 + $0x8] sm:$0xff] %vm73, %v135
    $region33: #{transformer_forward.36} parent=1 // pred_fallthru
      _
    // Predicated region
    $region34: #{transformer_forward.36} parent=1 // pred_check
      _
    $region35: #{transformer_forward.36} parent=1 // pred_check_branch
      %139 = sbr.rel (0) target = $region37
    $region36: #{transformer_forward.36} parent=1 // pred_region
      %s141 = ssub.s32 256, 256
      %142 = vsyncadd [#allocation5], %s141
      %s143 = sshll.u32 [#allocation9], 4
      %s144 = int_to_ptr.vmem [resolvable:$true] %s143
      %149 = dma.vmem_to_hbm [thread:$0]  %s144, 256, %s3, [#allocation5], 128, 128, 8
    $region37: #{transformer_forward.36} parent=1 // pred_fallthru
      _
    // Predicated region
    $region38: #{transformer_forward.36} parent=1 // pred_check
      _
    $region39: #{transformer_forward.36} parent=1 // pred_check_branch
      %151 = sbr.rel (0) target = $region41
    $region40: #{transformer_forward.36} parent=1 // pred_region
      %152 = dma.done [#allocation5], 256
    $region41: #{transformer_forward.36} parent=1 // pred_fallthru
      _
    %153 = vsyncpa [#allocation4], 1
    %154 = vsyncpa [#allocation7], 1
    %155 = vsyncpa [#allocation5], 1

// kernel: transformer_forward.34
$region0: #{transformer_forward.34}
  #allocation0 [shape = 'u32[]', space=smem, size = 0x4, offset = 0x4, fixed_abs, tag = 'smem constant byte address 0x4 - core index']
  #allocation1 [shape = 'u32[144,128]{1,0:T(1,128)}', space=vmem, size = 0x12000, scoped, tag = 'internal scratch']
  %s0 = inlined_call_operand.hbm [shape: f32[2,4,8,8], index: 0, kind: input, shape index: {}]
  %s1 = inlined_call_operand.hbm [shape: f32[2,4,8,8], index: 1, kind: input, shape index: {}]
  %s2 = inlined_call_operand.hbm [shape: f32[2,4,8,8], index: 2, kind: input, shape index: {}]
  %s3 = inlined_call_operand.hbm [shape: f32[2,8,8], index: 3, kind: input, shape index: {}]
  %s4 = inlined_call_operand.hbm [shape: f32[2,8,32], index: 4, kind: output, shape index: {}]
  %s5 = sld [smem:[#allocation0]]
  $region65: #{transformer_forward.34} parent=0
    _
  %s7 = ssub.s32 1, %s5
  %s8 = scalar_select 0, %s7, %s5
  $region1: #{transformer_forward.34} parent=0
    #allocation2 [shape = 'u8[32768]{0}', space=vmem, size = 0x8000, scoped, tag = 'input window, operand 0']
    #allocation3 [shape = 's32[2]{0}', space=sflag, size = 0x8, scoped, tag = 'scoped memory for transformer_forward.34']
    #allocation4 [shape = 's32[2]{0}', space=sflag, size = 0x8, scoped, tag = 'scoped memory for transformer_forward.34']
    #allocation5 [shape = 'u8[32768]{0}', space=vmem, size = 0x8000, scoped, tag = 'input window, operand 1']
    #allocation6 [shape = 's32[2]{0}', space=sflag, size = 0x8, scoped, tag = 'scoped memory for transformer_forward.34']
    #allocation7 [shape = 'u8[32768]{0}', space=vmem, size = 0x8000, scoped, tag = 'input window, operand 2']
    #allocation8 [shape = 'u8[8192]{0}', space=vmem, size = 0x2000, scoped, tag = 'input window, operand 3']
    #allocation9 [shape = 's32[2]{0}', space=sflag, size = 0x8, scoped, tag = 'scoped memory for transformer_forward.34']
    #allocation10 [shape = 'u8[8192]{0}', space=vmem, size = 0x2000, scoped, tag = 'output window, operand 0']
    %9 = vsyncpa [#allocation3], 0
    %s10 = scalar_lea.sflag [#allocation3], 1
    %11 = vsyncpa %s10, 0
    %12 = vsyncpa [#allocation6], 0
    %s13 = scalar_lea.sflag [#allocation6], 1
    %14 = vsyncpa %s13, 0
    %15 = vsyncpa [#allocation9], 0
    %s16 = scalar_lea.sflag [#allocation9], 1
    %17 = vsyncpa %s16, 0
    %18 = vsyncpa [#allocation4], 0
    %s19 = scalar_lea.sflag [#allocation4], 1
    %20 = vsyncpa %s19, 0
    loop: start=0, step=1, limit=4
    $region2: #{transformer_forward.34} parent=1 // loop_pre_header
      _
    $region3: #{transformer_forward.34} parent=1 // loop_header
      %s22 = sphi 0, %s26
      %p23 = scmp.ge.s32.totalorder %s22, 4
      %s32 = sphi 0, %s34
      %s35 = sphi 0, %s32
      %s36 = sphi 0, %s35
      %s52 = sphi 0, %s36
      %s58 = sphi 0, %s60
      %s61 = sphi 0, %s58
      %s62 = sphi 0, %s61
      %s78 = sphi 0, %s62
      %s84 = sphi 0, %s86
      %s87 = sphi 0, %s84
      %s88 = sphi 0, %s87
      %s104 = sphi 0, %s88
      %s110 = sphi 0, %s112
      %s113 = sphi 0, %s110
      %s114 = sphi 0, %s113
      %s130 = sphi 0, %s114
      %s136 = sphi 0, %s138
      %s139 = sphi 0, %s136
      %s140 = sphi 0, %s139
      %s156 = sphi 0, %s140
    $region4: #{transformer_forward.34} parent=1 // loop_header_branch
      %25 = sbr.rel (%p23) target = $region8
    $region5: #{transformer_forward.34} parent=1 // loop_body
      %s27 = ssub.s32 %s22, 1
      %s28 = ssub.s32 %s22, 2
      %s29 = sadd.s32 %s22, 1
      %s30 = ssub.s32 %s22, %s29
      %p31 = scmp.eq.s32.totalorder %s30, 0
      %s33 = sadd.s32 %s32, 1
      %s34 = scalar_select %p31, %s32, %s33
      %p37 = pneg %p31
      %p38 = scmp.eq.s32.totalorder %s22, 1
      %p39 = por %p37, %p38
      %p40 = scmp.ne.s32.totalorder %s32, %s35
      %p41 = scmp.eq.s32.totalorder %s22, 0
      %p42 = por %p40, %p41
      %p43 = scmp.ne.s32.totalorder %s32, %s35
      %p44 = scmp.eq.s32.totalorder %s27, 1
      %p45 = por %p43, %p44
      %p46 = scmp.ne.s32.totalorder %s35, %s36
      %p47 = scmp.eq.s32.totalorder %s27, 0
      %p48 = por %p46, %p47
      %p49 = scmp.ne.s32.totalorder %s35, %s36
      %p50 = scmp.eq.s32.totalorder %s28, 1
      %p51 = por %p49, %p50
      %p53 = scmp.ne.s32.totalorder %s36, %s52
      %p54 = scmp.eq.s32.totalorder %s28, 0
      %p55 = por %p53, %p54
      %s56 = ssub.s32 %s22, %s29
      %p57 = scmp.eq.s32.totalorder %s56, 0
      %s59 = sadd.s32 %s58, 1
      %s60 = scalar_select %p57, %s58, %s59
      %p63 = pneg %p57
      %p64 = scmp.eq.s32.totalorder %s22, 1
      %p65 = por %p63, %p64
      %p66 = scmp.ne.s32.totalorder %s58, %s61
      %p67 = scmp.eq.s32.totalorder %s22, 0
      %p68 = por %p66, %p67
      %p69 = scmp.ne.s32.totalorder %s58, %s61
      %p70 = scmp.eq.s32.totalorder %s27, 1
      %p71 = por %p69, %p70
      %p72 = scmp.ne.s32.totalorder %s61, %s62
      %p73 = scmp.eq.s32.totalorder %s27, 0
      %p74 = por %p72, %p73
      %p75 = scmp.ne.s32.totalorder %s61, %s62
      %p76 = scmp.eq.s32.totalorder %s28, 1
      %p77 = por %p75, %p76
      %p79 = scmp.ne.s32.totalorder %s62, %s78
      %p80 = scmp.eq.s32.totalorder %s28, 0
      %p81 = por %p79, %p80
      %s82 = ssub.s32 %s22, %s29
      %p83 = scmp.eq.s32.totalorder %s82, 0
      %s85 = sadd.s32 %s84, 1
      %s86 = scalar_select %p83, %s84, %s85
      %p89 = pneg %p83
      %p90 = scmp.eq.s32.totalorder %s22, 1
      %p91 = por %p89, %p90
      %p92 = scmp.ne.s32.totalorder %s84, %s87
      %p93 = scmp.eq.s32.totalorder %s22, 0
      %p94 = por %p92, %p93
      %p95 = scmp.ne.s32.totalorder %s84, %s87
      %p96 = scmp.eq.s32.totalorder %s27, 1
      %p97 = por %p95, %p96
      %p98 = scmp.ne.s32.totalorder %s87, %s88
      %p99 = scmp.eq.s32.totalorder %s27, 0
      %p100 = por %p98, %p99
      %p101 = scmp.ne.s32.totalorder %s87, %s88
      %p102 = scmp.eq.s32.totalorder %s28, 1
      %p103 = por %p101, %p102
      %p105 = scmp.ne.s32.totalorder %s88, %s104
      %p106 = scmp.eq.s32.totalorder %s28, 0
      %p107 = por %p105, %p106
      %s108 = ssub.s32 %s22, %s29
      %p109 = scmp.eq.s32.totalorder %s108, 0
      %s111 = sadd.s32 %s110, 1
      %s112 = scalar_select %p109, %s110, %s111
      %p115 = pneg %p109
      %p116 = scmp.eq.s32.totalorder %s22, 1
      %p117 = por %p115, %p116
      %p118 = scmp.ne.s32.totalorder %s110, %s113
      %p119 = scmp.eq.s32.totalorder %s22, 0
      %p120 = por %p118, %p119
      %p121 = scmp.ne.s32.totalorder %s110, %s113
      %p122 = scmp.eq.s32.totalorder %s27, 1
      %p123 = por %p121, %p122
      %p124 = scmp.ne.s32.totalorder %s113, %s114
      %p125 = scmp.eq.s32.totalorder %s27, 0
      %p126 = por %p124, %p125
      %p127 = scmp.ne.s32.totalorder %s113, %s114
      %p128 = scmp.eq.s32.totalorder %s28, 1
      %p129 = por %p127, %p128
      %p131 = scmp.ne.s32.totalorder %s114, %s130
      %p132 = scmp.eq.s32.totalorder %s28, 0
      %p133 = por %p131, %p132
      %s134 = ssub.s32 %s22, %s29
      %p135 = scmp.eq.s32.totalorder %s134, 0
      %s137 = sadd.s32 %s136, 1
      %s138 = scalar_select %p135, %s136, %s137
      %p141 = pneg %p135
      %p142 = scmp.eq.s32.totalorder %s22, 1
      %p143 = por %p141, %p142
      %p144 = scmp.ne.s32.totalorder %s136, %s139
      %p145 = scmp.eq.s32.totalorder %s22, 0
      %p146 = por %p144, %p145
      %p147 = scmp.ne.s32.totalorder %s136, %s139
      %p148 = scmp.eq.s32.totalorder %s27, 1
      %p149 = por %p147, %p148
      %p150 = scmp.ne.s32.totalorder %s139, %s140
      %p151 = scmp.eq.s32.totalorder %s27, 0
      %p152 = por %p150, %p151
      %p153 = scmp.ne.s32.totalorder %s139, %s140
      %p154 = scmp.eq.s32.totalorder %s28, 1
      %p155 = por %p153, %p154
      %p157 = scmp.ne.s32.totalorder %s140, %s156
      %p158 = scmp.eq.s32.totalorder %s28, 0
      %p159 = por %p157, %p158
      %p160 = scmp.le.s32.totalorder 1, %s22
      %p161 = scmp.lt.s32.totalorder %s22, 3
      %p162 = pnand %p160, %p161
      %p163 = pneg %p162
      // Predicated region
      $region9: #{transformer_forward.34} parent=5 // pred_check
        _
      $region10: #{transformer_forward.34} parent=5 // pred_check_branch
        %165 = sbr.rel (%p162) target = $region12
      $region11: #{transformer_forward.34} parent=5 // pred_region
        %s166 = ssub.s32 %s22, 1
      $region12: #{transformer_forward.34} parent=5 // pred_fallthru
        _
      %p167 = scmp.lt.s32.totalorder %s22, 2
      // Predicated region
      $region13: #{transformer_forward.34} parent=5 // pred_check
        %p168 = pneg %p167
      $region14: #{transformer_forward.34} parent=5 // pred_check_branch
        %170 = sbr.rel (%p168) target = $region16
      $region15: #{transformer_forward.34} parent=5 // pred_region
        // Predicated region
        $region17: #{transformer_forward.34} parent=15 // pred_check
          %p171 = pneg %p42
        $region18: #{transformer_forward.34} parent=15 // pred_check_branch
          %173 = sbr.rel (%p171) target = $region20
        $region19: #{transformer_forward.34} parent=15 // pred_region
          %s174 = sand.u32 %s32, 1
          %s175 = scalar_lea.sflag [#allocation3], %s174
          %s176 = sand.u32 %s32, 1
          %s177 = smul.addr %s176, 32
          %s178 = scalar_lea.vmem [#allocation2], %s177
          %s180 = ssub.s32 512, 512
          %181 = vsyncadd %s175, %s180
          %s182 = smul.addr %s22, 4
          %s183 = smul.addr %s182, 128
          %s184 = scalar_lea.hbm %s0, %s183
          %s185 = sshll.u32 %s178, 4
          %s186 = int_to_ptr.vmem [resolvable:$true] %s185
          %191 = dma.hbm_to_vmem [thread:$0]  %s184, 512, %s186, %s175, 128, 128, 8
        $region20: #{transformer_forward.34} parent=15 // pred_fallthru
          _
        // Predicated region
        $region21: #{transformer_forward.34} parent=15 // pred_check
          %p192 = pneg %p68
        $region22: #{transformer_forward.34} parent=15 // pred_check_branch
          %194 = sbr.rel (%p192) target = $region24
        $region23: #{transformer_forward.34} parent=15 // pred_region
          %s195 = sand.u32 %s22, 1
          %s196 = scalar_lea.sflag [#allocation6], %s195
          %s197 = sand.u32 %s58, 1
          %s198 = smul.addr %s197, 32
          %s199 = scalar_lea.vmem [#allocation5], %s198
          %s201 = ssub.s32 512, 512
          %202 = vsyncadd %s196, %s201
          %s203 = smul.addr %s22, 4
          %s204 = smul.addr %s203, 128
          %s205 = scalar_lea.hbm %s1, %s204
          %s206 = sshll.u32 %s199, 4
          %s207 = int_to_ptr.vmem [resolvable:$true] %s206
          %212 = dma.hbm_to_vmem [thread:$0]  %s205, 512, %s207, %s196, 128, 128, 8
        $region24: #{transformer_forward.34} parent=15 // pred_fallthru
          _
        // Predicated region
        $region25: #{transformer_forward.34} parent=15 // pred_check
          %p213 = pneg %p94
        $region26: #{transformer_forward.34} parent=15 // pred_check_branch
          %215 = sbr.rel (%p213) target = $region28
        $region27: #{transformer_forward.34} parent=15 // pred_region
          %s216 = sand.u32 %s22, 1
          %s217 = scalar_lea.sflag [#allocation6], %s216
          %s218 = sand.u32 %s84, 1
          %s219 = smul.addr %s218, 32
          %s220 = scalar_lea.vmem [#allocation7], %s219
          %s222 = ssub.s32 512, 512
          %223 = vsyncadd %s217, %s222
          %s224 = smul.addr %s22, 4
          %s225 = smul.addr %s224, 128
          %s226 = scalar_lea.hbm %s2, %s225
          %s227 = sshll.u32 %s220, 4
          %s228 = int_to_ptr.vmem [resolvable:$true] %s227
          %233 = dma.hbm_to_vmem [thread:$0]  %s226, 512, %s228, %s217, 128, 128, 8
        $region28: #{transformer_forward.34} parent=15 // pred_fallthru
          _
        // Predicated region
        $region29: #{transformer_forward.34} parent=15 // pred_check
          %p234 = pneg %p120
        $region30: #{transformer_forward.34} parent=15 // pred_check_branch
          %236 = sbr.rel (%p234) target = $region32
        $region31: #{transformer_forward.34} parent=15 // pred_region
          %s237 = sand.u32 %s110, 1
          %s238 = scalar_lea.sflag [#allocation9], %s237
          %s239 = sand.u32 %s110, 1
          %s240 = smul.addr %s239, 8
          %s241 = scalar_lea.vmem [#allocation8], %s240
          %s243 = ssub.s32 128, 128
          %244 = vsyncadd %s238, %s243
          %s245 = smul.addr %s22, 128
          %s246 = scalar_lea.hbm %s3, %s245
          %s248 = sshll.u32 %s241, 4
          %s249 = int_to_ptr.vmem [resolvable:$true] %s248
          %251 = dma.hbm_to_vmem [thread:$0]  %s246, 128, %s249, %s238
        $region32: #{transformer_forward.34} parent=15 // pred_fallthru
          _
      $region16: #{transformer_forward.34} parent=5 // pred_fallthru
        _
      %p252 = scmp.le.s32.totalorder 1, %s22
      %p253 = scmp.lt.s32.totalorder %s22, 3
      %p254 = pnand %p252, %p253
      %p255 = pneg %p254
      // Predicated region
      $region33: #{transformer_forward.34} parent=5 // pred_check
        _
      $region34: #{transformer_forward.34} parent=5 // pred_check_branch
        %257 = sbr.rel (%p254) target = $region36
      $region35: #{transformer_forward.34} parent=5 // pred_region
        %s258 = ssub.s32 %s22, 1
        %s259 = sand.u32 %s35, 1
        %s260 = scalar_lea.sflag [#allocation3], %s259
        %s261 = sand.u32 %s35, 1
        %s262 = smul.addr %s261, 32
        %s263 = scalar_lea.vmem [#allocation2], %s262
        // Predicated region
        $region37: #{transformer_forward.34} parent=35 // pred_check
          %p264 = pneg %p48
        $region38: #{transformer_forward.34} parent=35 // pred_check_branch
          %266 = sbr.rel (%p264) target = $region40
        $region39: #{transformer_forward.34} parent=35 // pred_region
          %267 = dma.done %s260, 512
        $region40: #{transformer_forward.34} parent=35 // pred_fallthru
          _
        %s268 = sand.u32 %s27, 1
        %s269 = scalar_lea.sflag [#allocation6], %s268
        %s270 = sand.u32 %s61, 1
        %s271 = smul.addr %s270, 32
        %s272 = scalar_lea.vmem [#allocation5], %s271
        // Predicated region
        $region41: #{transformer_forward.34} parent=35 // pred_check
          %p273 = pneg %p74
        $region42: #{transformer_forward.34} parent=35 // pred_check_branch
          %275 = sbr.rel (%p273) target = $region44
        $region43: #{transformer_forward.34} parent=35 // pred_region
          %276 = dma.done %s269, 512
        $region44: #{transformer_forward.34} parent=35 // pred_fallthru
          _
        %s277 = sand.u32 %s27, 1
        %s278 = scalar_lea.sflag [#allocation6], %s277
        %s279 = sand.u32 %s87, 1
        %s280 = smul.addr %s279, 32
        %s281 = scalar_lea.vmem [#allocation7], %s280
        // Predicated region
        $region45: #{transformer_forward.34} parent=35 // pred_check
          %p282 = pneg %p100
        $region46: #{transformer_forward.34} parent=35 // pred_check_branch
          %284 = sbr.rel (%p282) target = $region48
        $region47: #{transformer_forward.34} parent=35 // pred_region
          %285 = dma.done %s278, 512
        $region48: #{transformer_forward.34} parent=35 // pred_fallthru
          _
        %s286 = sand.u32 %s113, 1
        %s287 = scalar_lea.sflag [#allocation9], %s286
        %s288 = sand.u32 %s113, 1
        %s289 = smul.addr %s288, 8
        %s290 = scalar_lea.vmem [#allocation8], %s289
        // Predicated region
        $region49: #{transformer_forward.34} parent=35 // pred_check
          %p291 = pneg %p126
        $region50: #{transformer_forward.34} parent=35 // pred_check_branch
          %293 = sbr.rel (%p291) target = $region52
        $region51: #{transformer_forward.34} parent=35 // pred_region
          %294 = dma.done %s287, 128
        $region52: #{transformer_forward.34} parent=35 // pred_fallthru
          _
        %s295 = sand.u32 %s35, 1
        %s296 = scalar_lea.sflag [#allocation3], %s295
        %s297 = sand.u32 %s35, 1
        %s298 = smul.addr %s297, 32
        %s299 = scalar_lea.vmem [#allocation2], %s298
        %p300 = pneg %p48
        %p301 = pneg %p45
        %s302 = sand.u32 %s27, 1
        %s303 = scalar_lea.sflag [#allocation6], %s302
        %s304 = sand.u32 %s61, 1
        %s305 = smul.addr %s304, 32
        %s306 = scalar_lea.vmem [#allocation5], %s305
        %p307 = pneg %p74
        %p308 = pneg %p71
        %s309 = sand.u32 %s27, 1
        %s310 = scalar_lea.sflag [#allocation6], %s309
        %s311 = sand.u32 %s87, 1
        %s312 = smul.addr %s311, 32
        %s313 = scalar_lea.vmem [#allocation7], %s312
        %p314 = pneg %p100
        %p315 = pneg %p97
        %s316 = sand.u32 %s113, 1
        %s317 = scalar_lea.sflag [#allocation9], %s316
        %s318 = sand.u32 %s113, 1
        %s319 = smul.addr %s318, 8
        %s320 = scalar_lea.vmem [#allocation8], %s319
        %p321 = pneg %p126
        %p322 = pneg %p123
        %p323 = pneg %p152
        %p324 = pneg %p149
        %s325 = sand.u32 %s139, 1
        %s326 = scalar_lea.sflag [#allocation4], %s325
        %s327 = sand.u32 %s139, 1
        %s328 = smul.addr %s327, 8
        %s329 = scalar_lea.vmem [#allocation10], %s328
        %v331 = vld [vmem:[%s290] sm:$0xff]
        %v332 = vld [vmem:[%s263] sm:$0xff]
        %v333 = vpack.c.bf16 %v332, %v332
        %v334 = vld [vmem:[%s272] sm:$0xff]
        %v335 = vpack.c.bf16 %v334, %v334
        %v336 = vld [vmem:[%s281] sm:$0xff]
        %v337 = vpack.c.bf16 %v336, %v336
        %vm338 = vcmask 64512
        %v340 = vsel %vm338, %v333, 0
        %v343 = vsel %vm338, %v335, 0
        %345 = vmatprep.subr.bf16.mxu0 0
        %346 = vmatpush1.bf16.xpose.msra.mxu0 %v343
        %347 = vmatprep.subr.bf16.mxu0 0
        %348 = vmatpush1.bf16.xpose.msra.mxu0 0
        %349 = vmatprep.subr.bf16.mxu0 0
        %350 = vmatpush1.bf16.xpose.msra.mxu0 0
        %351 = vmatprep.subr.bf16.mxu0 0
        %352 = vmatpush1.bf16.xpose.msra.mxu0 0
        %353 = vmatprep.subr.bf16.mxu0 0
        %354 = vmatpush1.bf16.xpose.msra.mxu0 0
        %355 = vmatprep.subr.bf16.mxu0 0
        %356 = vmatpush1.bf16.xpose.msra.mxu0 0
        %357 = vmatprep.subr.bf16.mxu0 0
        %358 = vmatpush1.bf16.xpose.msra.mxu0 0
        %359 = vmatprep.subr.bf16.mxu0 0
        %360 = vmatpush1.bf16.xpose.msra.mxu0 0
        %361 = vmatprep.subr.bf16.mxu0 0
        %362 = vmatpush1.bf16.xpose.msra.mxu0 0
        %363 = vmatprep.subr.bf16.mxu0 0
        %364 = vmatpush1.bf16.xpose.msra.mxu0 0
        %365 = vmatprep.subr.bf16.mxu0 0
        %366 = vmatpush1.bf16.xpose.msra.mxu0 0
        %367 = vmatprep.subr.bf16.mxu0 0
        %368 = vmatpush1.bf16.xpose.msra.mxu0 0
        %369 = vmatprep.subr.bf16.mxu0 0
        %370 = vmatpush1.bf16.xpose.msra.mxu0 0
        %371 = vmatprep.subr.bf16.mxu0 0
        %372 = vmatpush1.bf16.xpose.msra.mxu0 0
        %373 = vmatprep.subr.bf16.mxu0 0
        %374 = vmatpush1.bf16.xpose.msra.mxu0 0
        %375 = vmatprep.subr.bf16.mxu0 0
        %376 = vmatpush1.bf16.xpose.msra.mxu0 0
        %377 = vmatprep.mubr.bf16.mxu0 0
        %378 = vmatmul.mubr.bf16.gmra.mrb[0].mxu0 %v340
        %v379 = vpop.f32.mrb[0].mxu0
        %v380 = vadd.f32 0.0, %v379
        %v381 = vpop.f32.mrb[0].mxu0
        %v382 = vpop.f32.mrb[0].mxu0
        %v383 = vpop.f32.mrb[0].mxu0
        %384 = vdwg.mxu0
        %v385 = vmul.f32 %v380, 0.35355338
        %v386 = vadd.f32 %v385, %v331
        %v387 = vsel %vm338, %v386, -inf
        %388 = vmax.xlane.f32.xlu0 %v387
        %v389 = vpop.xlane.xlu0 %388
        %v390 = vsub.f32 %v386, %v389
        %v391 = vmul.f32 %v390, 1.442695
        %v392 = vpow.pop %v391
        %v393 = vsel %vm338, %v392, 0.0
        %394 = vadd.xlane.f32.xlu0 %v393
        %v395 = vpop.xlane.xlu0 %394
        %v396 = vrcp.pop %v395
        %v397 = vmul.f32 %v392, %v396
        %v398 = vpack.c.bf16 %v397, %v397
        %v400 = vsel %vm338, %v398, 0
        %vm402 = vcmask 1043456
        %v404 = vsel %vm402, %v337, 0
        %406 = vmatprep.subr.bf16.mxu0 0
        %407 = vmatpush1.bf16.msra.mxu0 %v404
        %408 = vmatprep.subr.bf16.mxu0 0
        %409 = vmatpush1.bf16.msra.mxu0 0
        %410 = vmatprep.subr.bf16.mxu0 0
        %411 = vmatpush1.bf16.msra.mxu0 0
        %412 = vmatprep.subr.bf16.mxu0 0
        %413 = vmatpush1.bf16.msra.mxu0 0
        %414 = vmatprep.subr.bf16.mxu0 0
        %415 = vmatpush1.bf16.msra.mxu0 0
        %416 = vmatprep.subr.bf16.mxu0 0
        %417 = vmatpush1.bf16.msra.mxu0 0
        %418 = vmatprep.subr.bf16.mxu0 0
        %419 = vmatpush1.bf16.msra.mxu0 0
        %420 = vmatprep.subr.bf16.mxu0 0
        %421 = vmatpush1.bf16.msra.mxu0 0
        %422 = vmatprep.subr.bf16.mxu0 0
        %423 = vmatpush1.bf16.msra.mxu0 0
        %424 = vmatprep.subr.bf16.mxu0 0
        %425 = vmatpush1.bf16.msra.mxu0 0
        %426 = vmatprep.subr.bf16.mxu0 0
        %427 = vmatpush1.bf16.msra.mxu0 0
        %428 = vmatprep.subr.bf16.mxu0 0
        %429 = vmatpush1.bf16.msra.mxu0 0
        %430 = vmatprep.subr.bf16.mxu0 0
        %431 = vmatpush1.bf16.msra.mxu0 0
        %432 = vmatprep.subr.bf16.mxu0 0
        %433 = vmatpush1.bf16.msra.mxu0 0
        %434 = vmatprep.subr.bf16.mxu0 0
        %435 = vmatpush1.bf16.msra.mxu0 0
        %436 = vmatprep.subr.bf16.mxu0 0
        %437 = vmatpush1.bf16.msra.mxu0 0
        %438 = vmatprep.mubr.bf16.mxu0 0
        %439 = vmatmul.mubr.bf16.gmra.mrb[0].mxu0 %v400
        %v440 = vpop.f32.mrb[0].mxu0
        %v441 = vadd.f32 0.0, %v440
        %v442 = vpop.f32.mrb[0].mxu0
        %v443 = vpop.f32.mrb[0].mxu0
        %v444 = vpop.f32.mrb[0].mxu0
        %445 = vdwg.mxu0
        %446 = vst.msk [vmem:[%s329] sm:$0xff] %vm338, %v441
        %s447 = scalar_lea.vmem %s263, 8 [#allocation2]
        %v448 = vld [vmem:[%s447] sm:$0xff]
        %v449 = vpack.c.bf16 %v448, %v448
        %s450 = scalar_lea.vmem %s272, 8 [#allocation5]
        %v451 = vld [vmem:[%s450] sm:$0xff]
        %v452 = vpack.c.bf16 %v451, %v451
        %s453 = scalar_lea.vmem %s281, 8 [#allocation7]
        %v454 = vld [vmem:[%s453] sm:$0xff]
        %v455 = vpack.c.bf16 %v454, %v454
        %v457 = vsel %vm338, %v449, 0
        %v460 = vsel %vm338, %v452, 0
        %462 = vmatprep.subr.bf16.mxu0 0
        %463 = vmatpush1.bf16.xpose.msra.mxu0 %v460
        %464 = vmatprep.subr.bf16.mxu0 0
        %465 = vmatpush1.bf16.xpose.msra.mxu0 0
        %466 = vmatprep.subr.bf16.mxu0 0
        %467 = vmatpush1.bf16.xpose.msra.mxu0 0
        %468 = vmatprep.subr.bf16.mxu0 0
        %469 = vmatpush1.bf16.xpose.msra.mxu0 0
        %470 = vmatprep.subr.bf16.mxu0 0
        %471 = vmatpush1.bf16.xpose.msra.mxu0 0
        %472 = vmatprep.subr.bf16.mxu0 0
        %473 = vmatpush1.bf16.xpose.msra.mxu0 0
        %474 = vmatprep.subr.bf16.mxu0 0
        %475 = vmatpush1.bf16.xpose.msra.mxu0 0
        %476 = vmatprep.subr.bf16.mxu0 0
        %477 = vmatpush1.bf16.xpose.msra.mxu0 0
        %478 = vmatprep.subr.bf16.mxu0 0
        %479 = vmatpush1.bf16.xpose.msra.mxu0 0
        %480 = vmatprep.subr.bf16.mxu0 0
        %481 = vmatpush1.bf16.xpose.msra.mxu0 0
        %482 = vmatprep.subr.bf16.mxu0 0
        %483 = vmatpush1.bf16.xpose.msra.mxu0 0
        %484 = vmatprep.subr.bf16.mxu0 0
        %485 = vmatpush1.bf16.xpose.msra.mxu0 0
        %486 = vmatprep.subr.bf16.mxu0 0
        %487 = vmatpush1.bf16.xpose.msra.mxu0 0
        %488 = vmatprep.subr.bf16.mxu0 0
        %489 = vmatpush1.bf16.xpose.msra.mxu0 0
        %490 = vmatprep.subr.bf16.mxu0 0
        %491 = vmatpush1.bf16.xpose.msra.mxu0 0
        %492 = vmatprep.subr.bf16.mxu0 0
        %493 = vmatpush1.bf16.xpose.msra.mxu0 0
        %494 = vmatprep.mubr.bf16.mxu0 0
        %495 = vmatmul.mubr.bf16.gmra.mrb[0].mxu0 %v457
        %v496 = vpop.f32.mrb[0].mxu0
        %v497 = vadd.f32 0.0, %v496
        %v498 = vpop.f32.mrb[0].mxu0
        %v499 = vpop.f32.mrb[0].mxu0
        %v500 = vpop.f32.mrb[0].mxu0
        %501 = vdwg.mxu0
        %v502 = vmul.f32 %v497, 0.35355338
        %v503 = vadd.f32 %v502, %v331
        %v504 = vsel %vm338, %v503, -inf
        %505 = vmax.xlane.f32.xlu0 %v504
        %v506 = vpop.xlane.xlu0 %505
        %v507 = vsub.f32 %v503, %v506
        %v508 = vmul.f32 %v507, 1.442695
        %v509 = vpow.pop %v508
        %v510 = vsel %vm338, %v509, 0.0
        %511 = vadd.xlane.f32.xlu0 %v510
        %v512 = vpop.xlane.xlu0 %511
        %v513 = vrcp.pop %v512
        %v514 = vmul.f32 %v509, %v513
        %v515 = vpack.c.bf16 %v514, %v514
        %v517 = vsel %vm338, %v515, 0
        %v520 = vsel %vm402, %v455, 0
        %522 = vmatprep.subr.bf16.mxu0 0
        %523 = vmatpush1.bf16.msra.mxu0 %v520
        %524 = vmatprep.subr.bf16.mxu0 0
        %525 = vmatpush1.bf16.msra.mxu0 0
        %526 = vmatprep.subr.bf16.mxu0 0
        %527 = vmatpush1.bf16.msra.mxu0 0
        %528 = vmatprep.subr.bf16.mxu0 0
        %529 = vmatpush1.bf16.msra.mxu0 0
        %530 = vmatprep.subr.bf16.mxu0 0
        %531 = vmatpush1.bf16.msra.mxu0 0
        %532 = vmatprep.subr.bf16.mxu0 0
        %533 = vmatpush1.bf16.msra.mxu0 0
        %534 = vmatprep.subr.bf16.mxu0 0
        %535 = vmatpush1.bf16.msra.mxu0 0
        %536 = vmatprep.subr.bf16.mxu0 0
        %537 = vmatpush1.bf16.msra.mxu0 0
        %538 = vmatprep.subr.bf16.mxu0 0
        %539 = vmatpush1.bf16.msra.mxu0 0
        %540 = vmatprep.subr.bf16.mxu0 0
        %541 = vmatpush1.bf16.msra.mxu0 0
        %542 = vmatprep.subr.bf16.mxu0 0
        %543 = vmatpush1.bf16.msra.mxu0 0
        %544 = vmatprep.subr.bf16.mxu0 0
        %545 = vmatpush1.bf16.msra.mxu0 0
        %546 = vmatprep.subr.bf16.mxu0 0
        %547 = vmatpush1.bf16.msra.mxu0 0
        %548 = vmatprep.subr.bf16.mxu0 0
        %549 = vmatpush1.bf16.msra.mxu0 0
        %550 = vmatprep.subr.bf16.mxu0 0
        %551 = vmatpush1.bf16.msra.mxu0 0
        %552 = vmatprep.subr.bf16.mxu0 0
        %553 = vmatpush1.bf16.msra.mxu0 0
        %554 = vmatprep.mubr.bf16.mxu0 0
        %555 = vmatmul.mubr.bf16.gmra.mrb[0].mxu0 %v517
        %v556 = vpop.f32.mrb[0].mxu0
        %v557 = vadd.f32 0.0, %v556
        %v558 = vpop.f32.mrb[0].mxu0
        %v559 = vpop.f32.mrb[0].mxu0
        %v560 = vpop.f32.mrb[0].mxu0
        %561 = vdwg.mxu0
        %563 = vrot.lane.b32.xlu0 %v557, 8
        %v564 = vpop.permute.xlu0 %563
        %vm566 = vcmask 130112
        %567 = vst.msk [vmem:[%s329] sm:$0xff] %vm566, %v564
        %s568 = scalar_lea.vmem %s263, 16 [#allocation2]
        %v569 = vld [vmem:[%s568] sm:$0xff]
        %v570 = vpack.c.bf16 %v569, %v569
        %s571 = scalar_lea.vmem %s272, 16 [#allocation5]
        %v572 = vld [vmem:[%s571] sm:$0xff]
        %v573 = vpack.c.bf16 %v572, %v572
        %s574 = scalar_lea.vmem %s281, 16 [#allocation7]
        %v575 = vld [vmem:[%s574] sm:$0xff]
        %v576 = vpack.c.bf16 %v575, %v575
        %v578 = vsel %vm338, %v570, 0
        %v581 = vsel %vm338, %v573, 0
        %583 = vmatprep.subr.bf16.mxu0 0
        %584 = vmatpush1.bf16.xpose.msra.mxu0 %v581
        %585 = vmatprep.subr.bf16.mxu0 0
        %586 = vmatpush1.bf16.xpose.msra.mxu0 0
        %587 = vmatprep.subr.bf16.mxu0 0
        %588 = vmatpush1.bf16.xpose.msra.mxu0 0
        %589 = vmatprep.subr.bf16.mxu0 0
        %590 = vmatpush1.bf16.xpose.msra.mxu0 0
        %591 = vmatprep.subr.bf16.mxu0 0
        %592 = vmatpush1.bf16.xpose.msra.mxu0 0
        %593 = vmatprep.subr.bf16.mxu0 0
        %594 = vmatpush1.bf16.xpose.msra.mxu0 0
        %595 = vmatprep.subr.bf16.mxu0 0
        %596 = vmatpush1.bf16.xpose.msra.mxu0 0
        %597 = vmatprep.subr.bf16.mxu0 0
        %598 = vmatpush1.bf16.xpose.msra.mxu0 0
        %599 = vmatprep.subr.bf16.mxu0 0
        %600 = vmatpush1.bf16.xpose.msra.mxu0 0
        %601 = vmatprep.subr.bf16.mxu0 0
        %602 = vmatpush1.bf16.xpose.msra.mxu0 0
        %603 = vmatprep.subr.bf16.mxu0 0
        %604 = vmatpush1.bf16.xpose.msra.mxu0 0
        %605 = vmatprep.subr.bf16.mxu0 0
        %606 = vmatpush1.bf16.xpose.msra.mxu0 0
        %607 = vmatprep.subr.bf16.mxu0 0
        %608 = vmatpush1.bf16.xpose.msra.mxu0 0
        %609 = vmatprep.subr.bf16.mxu0 0
        %610 = vmatpush1.bf16.xpose.msra.mxu0 0
        %611 = vmatprep.subr.bf16.mxu0 0
        %612 = vmatpush1.bf16.xpose.msra.mxu0 0
        %613 = vmatprep.subr.bf16.mxu0 0
        %614 = vmatpush1.bf16.xpose.msra.mxu0 0
        %615 = vmatprep.mubr.bf16.mxu0 0
        %616 = vmatmul.mubr.bf16.gmra.mrb[0].mxu0 %v578
        %v617 = vpop.f32.mrb[0].mxu0
        %v618 = vadd.f32 0.0, %v617
        %v619 = vpop.f32.mrb[0].mxu0
        %v620 = vpop.f32.mrb[0].mxu0
        %v621 = vpop.f32.mrb[0].mxu0
        %622 = vdwg.mxu0
        %v623 = vmul.f32 %v618, 0.35355338
        %v624 = vadd.f32 %v623, %v331
        %v625 = vsel %vm338, %v624, -inf
        %626 = vmax.xlane.f32.xlu0 %v625
        %v627 = vpop.xlane.xlu0 %626
        %v628 = vsub.f32 %v624, %v627
        %v629 = vmul.f32 %v628, 1.442695
        %v630 = vpow.pop %v629
        %v631 = vsel %vm338, %v630, 0.0
        %632 = vadd.xlane.f32.xlu0 %v631
        %v633 = vpop.xlane.xlu0 %632
        %v634 = vrcp.pop %v633
        %v635 = vmul.f32 %v630, %v634
        %v636 = vpack.c.bf16 %v635, %v635
        %v638 = vsel %vm338, %v636, 0
        %v641 = vsel %vm402, %v576, 0
        %643 = vmatprep.subr.bf16.mxu0 0
        %644 = vmatpush1.bf16.msra.mxu0 %v641
        %645 = vmatprep.subr.bf16.mxu0 0
        %646 = vmatpush1.bf16.msra.mxu0 0
        %647 = vmatprep.subr.bf16.mxu0 0
        %648 = vmatpush1.bf16.msra.mxu0 0
        %649 = vmatprep.subr.bf16.mxu0 0
        %650 = vmatpush1.bf16.msra.mxu0 0
        %651 = vmatprep.subr.bf16.mxu0 0
        %652 = vmatpush1.bf16.msra.mxu0 0
        %653 = vmatprep.subr.bf16.mxu0 0
        %654 = vmatpush1.bf16.msra.mxu0 0
        %655 = vmatprep.subr.bf16.mxu0 0
        %656 = vmatpush1.bf16.msra.mxu0 0
        %657 = vmatprep.subr.bf16.mxu0 0
        %658 = vmatpush1.bf16.msra.mxu0 0
        %659 = vmatprep.subr.bf16.mxu0 0
        %660 = vmatpush1.bf16.msra.mxu0 0
        %661 = vmatprep.subr.bf16.mxu0 0
        %662 = vmatpush1.bf16.msra.mxu0 0
        %663 = vmatprep.subr.bf16.mxu0 0
        %664 = vmatpush1.bf16.msra.mxu0 0
        %665 = vmatprep.subr.bf16.mxu0 0
        %666 = vmatpush1.bf16.msra.mxu0 0
        %667 = vmatprep.subr.bf16.mxu0 0
        %668 = vmatpush1.bf16.msra.mxu0 0
        %669 = vmatprep.subr.bf16.mxu0 0
        %670 = vmatpush1.bf16.msra.mxu0 0
        %671 = vmatprep.subr.bf16.mxu0 0
        %672 = vmatpush1.bf16.msra.mxu0 0
        %673 = vmatprep.subr.bf16.mxu0 0
        %674 = vmatpush1.bf16.msra.mxu0 0
        %675 = vmatprep.mubr.bf16.mxu0 0
        %676 = vmatmul.mubr.bf16.gmra.mrb[0].mxu0 %v638
        %v677 = vpop.f32.mrb[0].mxu0
        %v678 = vadd.f32 0.0, %v677
        %v679 = vpop.f32.mrb[0].mxu0
        %v680 = vpop.f32.mrb[0].mxu0
        %v681 = vpop.f32.mrb[0].mxu0
        %682 = vdwg.mxu0
        %684 = vrot.lane.b32.xlu0 %v678, 16
        %v685 = vpop.permute.xlu0 %684
        %vm687 = vcmask 195712
        %688 = vst.msk [vmem:[%s329] sm:$0xff] %vm687, %v685
        %s689 = scalar_lea.vmem %s263, 24 [#allocation2]
        %v690 = vld [vmem:[%s689] sm:$0xff]
        %v691 = vpack.c.bf16 %v690, %v690
        %s692 = scalar_lea.vmem %s272, 24 [#allocation5]
        %v693 = vld [vmem:[%s692] sm:$0xff]
        %v694 = vpack.c.bf16 %v693, %v693
        %s695 = scalar_lea.vmem %s281, 24 [#allocation7]
        %v696 = vld [vmem:[%s695] sm:$0xff]
        %v697 = vpack.c.bf16 %v696, %v696
        %v699 = vsel %vm338, %v691, 0
        %v702 = vsel %vm338, %v694, 0
        %704 = vmatprep.subr.bf16.mxu0 0
        %705 = vmatpush1.bf16.xpose.msra.mxu0 %v702
        %706 = vmatprep.subr.bf16.mxu0 0
        %707 = vmatpush1.bf16.xpose.msra.mxu0 0
        %708 = vmatprep.subr.bf16.mxu0 0
        %709 = vmatpush1.bf16.xpose.msra.mxu0 0
        %710 = vmatprep.subr.bf16.mxu0 0
        %711 = vmatpush1.bf16.xpose.msra.mxu0 0
        %712 = vmatprep.subr.bf16.mxu0 0
        %713 = vmatpush1.bf16.xpose.msra.mxu0 0
        %714 = vmatprep.subr.bf16.mxu0 0
        %715 = vmatpush1.bf16.xpose.msra.mxu0 0
        %716 = vmatprep.subr.bf16.mxu0 0
        %717 = vmatpush1.bf16.xpose.msra.mxu0 0
        %718 = vmatprep.subr.bf16.mxu0 0
        %719 = vmatpush1.bf16.xpose.msra.mxu0 0
        %720 = vmatprep.subr.bf16.mxu0 0
        %721 = vmatpush1.bf16.xpose.msra.mxu0 0
        %722 = vmatprep.subr.bf16.mxu0 0
        %723 = vmatpush1.bf16.xpose.msra.mxu0 0
        %724 = vmatprep.subr.bf16.mxu0 0
        %725 = vmatpush1.bf16.xpose.msra.mxu0 0
        %726 = vmatprep.subr.bf16.mxu0 0
        %727 = vmatpush1.bf16.xpose.msra.mxu0 0
        %728 = vmatprep.subr.bf16.mxu0 0
        %729 = vmatpush1.bf16.xpose.msra.mxu0 0
        %730 = vmatprep.subr.bf16.mxu0 0
        %731 = vmatpush1.bf16.xpose.msra.mxu0 0
        %732 = vmatprep.subr.bf16.mxu0 0
        %733 = vmatpush1.bf16.xpose.msra.mxu0 0
        %734 = vmatprep.subr.bf16.mxu0 0
        %735 = vmatpush1.bf16.xpose.msra.mxu0 0
        %736 = vmatprep.mubr.bf16.mxu0 0
        %737 = vmatmul.mubr.bf16.gmra.mrb[0].mxu0 %v699
        %v738 = vpop.f32.mrb[0].mxu0
        %v739 = vadd.f32 0.0, %v738
        %v740 = vpop.f32.mrb[0].mxu0
        %v741 = vpop.f32.mrb[0].mxu0
        %v742 = vpop.f32.mrb[0].mxu0
        %743 = vdwg.mxu0
        %v744 = vmul.f32 %v739, 0.35355338
        %v745 = vadd.f32 %v744, %v331
        %v746 = vsel %vm338, %v745, -inf
        %747 = vmax.xlane.f32.xlu0 %v746
        %v748 = vpop.xlane.xlu0 %747
        %v749 = vsub.f32 %v745, %v748
        %v750 = vmul.f32 %v749, 1.442695
        %v751 = vpow.pop %v750
        %v752 = vsel %vm338, %v751, 0.0
        %753 = vadd.xlane.f32.xlu0 %v752
        %v754 = vpop.xlane.xlu0 %753
        %v755 = vrcp.pop %v754
        %v756 = vmul.f32 %v751, %v755
        %v757 = vpack.c.bf16 %v756, %v756
        %v759 = vsel %vm338, %v757, 0
        %v762 = vsel %vm402, %v697, 0
        %764 = vmatprep.subr.bf16.mxu0 0
        %765 = vmatpush1.bf16.msra.mxu0 %v762
        %766 = vmatprep.subr.bf16.mxu0 0
        %767 = vmatpush1.bf16.msra.mxu0 0
        %768 = vmatprep.subr.bf16.mxu0 0
        %769 = vmatpush1.bf16.msra.mxu0 0
        %770 = vmatprep.subr.bf16.mxu0 0
        %771 = vmatpush1.bf16.msra.mxu0 0
        %772 = vmatprep.subr.bf16.mxu0 0
        %773 = vmatpush1.bf16.msra.mxu0 0
        %774 = vmatprep.subr.bf16.mxu0 0
        %775 = vmatpush1.bf16.msra.mxu0 0
        %776 = vmatprep.subr.bf16.mxu0 0
        %777 = vmatpush1.bf16.msra.mxu0 0
        %778 = vmatprep.subr.bf16.mxu0 0
        %779 = vmatpush1.bf16.msra.mxu0 0
        %780 = vmatprep.subr.bf16.mxu0 0
        %781 = vmatpush1.bf16.msra.mxu0 0
        %782 = vmatprep.subr.bf16.mxu0 0
        %783 = vmatpush1.bf16.msra.mxu0 0
        %784 = vmatprep.subr.bf16.mxu0 0
        %785 = vmatpush1.bf16.msra.mxu0 0
        %786 = vmatprep.subr.bf16.mxu0 0
        %787 = vmatpush1.bf16.msra.mxu0 0
        %788 = vmatprep.subr.bf16.mxu0 0
        %789 = vmatpush1.bf16.msra.mxu0 0
        %790 = vmatprep.subr.bf16.mxu0 0
        %791 = vmatpush1.bf16.msra.mxu0 0
        %792 = vmatprep.subr.bf16.mxu0 0
        %793 = vmatpush1.bf16.msra.mxu0 0
        %794 = vmatprep.subr.bf16.mxu0 0
        %795 = vmatpush1.bf16.msra.mxu0 0
        %796 = vmatprep.mubr.bf16.mxu0 0
        %797 = vmatmul.mubr.bf16.gmra.mrb[0].mxu0 %v759
        %v798 = vpop.f32.mrb[0].mxu0
        %v799 = vadd.f32 0.0, %v798
        %v800 = vpop.f32.mrb[0].mxu0
        %v801 = vpop.f32.mrb[0].mxu0
        %v802 = vpop.f32.mrb[0].mxu0
        %803 = vdwg.mxu0
        %805 = vrot.lane.b32.xlu0 %v799, 24
        %v806 = vpop.permute.xlu0 %805
        %vm808 = vcmask 261312
        %809 = vst.msk [vmem:[%s329] sm:$0xff] %vm808, %v806
        %s810 = sand.u32 %s139, 1
        %s811 = scalar_lea.sflag [#allocation4], %s810
        %s812 = sand.u32 %s139, 1
        %s813 = smul.addr %s812, 8
        %s814 = scalar_lea.vmem [#allocation10], %s813
        // Predicated region
        $region53: #{transformer_forward.34} parent=35 // pred_check
          %p815 = pneg %p149
        $region54: #{transformer_forward.34} parent=35 // pred_check_branch
          %817 = sbr.rel (%p815) target = $region56
        $region55: #{transformer_forward.34} parent=35 // pred_region
          %s819 = ssub.s32 128, 128
          %820 = vsyncadd %s811, %s819
          %s821 = smul.addr %s27, 128
          %s822 = scalar_lea.hbm %s4, %s821
          %s824 = sshll.u32 %s814, 4
          %s825 = int_to_ptr.vmem [resolvable:$true] %s824
          %827 = dma.vmem_to_hbm [thread:$0]  %s825, 128, %s822, %s811
        $region56: #{transformer_forward.34} parent=35 // pred_fallthru
          _
      $region36: #{transformer_forward.34} parent=5 // pred_fallthru
        _
      %p828 = scmp.le.s32.totalorder 2, %s22
      // Predicated region
      $region57: #{transformer_forward.34} parent=5 // pred_check
        %p829 = pneg %p828
      $region58: #{transformer_forward.34} parent=5 // pred_check_branch
        %831 = sbr.rel (%p829) target = $region60
      $region59: #{transformer_forward.34} parent=5 // pred_region
        %s832 = ssub.s32 %s22, 2
        // Predicated region
        $region61: #{transformer_forward.34} parent=59 // pred_check
          %p833 = pneg %p155
        $region62: #{transformer_forward.34} parent=59 // pred_check_branch
          %835 = sbr.rel (%p833) target = $region64
        $region63: #{transformer_forward.34} parent=59 // pred_region
          %s836 = sand.u32 %s140, 1
          %s837 = scalar_lea.sflag [#allocation4], %s836
          %s838 = sand.u32 %s140, 1
          %s839 = smul.addr %s838, 8
          %s840 = scalar_lea.vmem [#allocation10], %s839
          %841 = dma.done %s837, 128
        $region64: #{transformer_forward.34} parent=59 // pred_fallthru
          _
      $region60: #{transformer_forward.34} parent=5 // pred_fallthru
        _
    $region6: #{transformer_forward.34} parent=1 // loop_footer
      %s26 = sadd.s32 1, %s22
    $region7: #{transformer_forward.34} parent=1 // loop_footer_branch
      %21 = sbr.rel target = $region3
    $region8: #{transformer_forward.34} parent=1 // loop_exit
      _
    %842 = vsyncpa [#allocation3], 1
    %s843 = scalar_lea.sflag [#allocation3], 1
    %844 = vsyncpa %s843, 1
    %845 = vsyncpa [#allocation6], 1
    %s846 = scalar_lea.sflag [#allocation6], 1
    %847 = vsyncpa %s846, 1
    %848 = vsyncpa [#allocation9], 1
    %s849 = scalar_lea.sflag [#allocation9], 1
    %850 = vsyncpa %s849, 1
    %851 = vsyncpa [#allocation4], 1
    %s852 = scalar_lea.sflag [#allocation4], 1
    %853 = vsyncpa %s852, 1

// kernel: transformer_forward.37
$region0: #{transformer_forward.37}
  #allocation0 [shape = 'u32[]', space=smem, size = 0x4, offset = 0x4, fixed_abs, tag = 'smem constant byte address 0x4 - core index']
  #allocation1 [shape = 'u32[144,128]{1,0:T(1,128)}', space=vmem, size = 0x12000, scoped, tag = 'internal scratch']
  #allocation2 [shape = 'f32[16,64]{1,0:T(8,128)}', space=vmem, size = 0x2000, scoped, tag = 'scratch operand']
  %s0 = inlined_call_operand.hbm [shape: f32[16,32], index: 0, kind: input, shape index: {}]
  %s1 = inlined_call_operand.hbm [shape: f32[32,64], index: 1, kind: input, shape index: {}]
  %s2 = inlined_call_operand.hbm [shape: f32[1,64], index: 2, kind: input, shape index: {}]
  %s3 = inlined_call_operand.hbm [shape: f32[16,64], index: 3, kind: output, shape index: {}]
  %s4 = sld [smem:[#allocation0]]
  $region42: #{transformer_forward.37} parent=0
    _
  %s6 = ssub.s32 1, %s4
  %s7 = scalar_select 0, %s6, %s4
  $region1: #{transformer_forward.37} parent=0
    #allocation3 [shape = 'u8[8192]{0}', space=vmem, size = 0x2000, scoped, tag = 'input window, operand 0, single buffered']
    #allocation4 [shape = 's32[1]{0}', space=sflag, size = 0x4, scoped, tag = 'scoped memory for transformer_forward.37']
    #allocation5 [shape = 's32[1]{0}', space=sflag, size = 0x4, scoped, tag = 'scoped memory for transformer_forward.37']
    #allocation6 [shape = 'u8[16384]{0}', space=vmem, size = 0x4000, scoped, tag = 'input window, operand 1, single buffered']
    #allocation7 [shape = 's32[1]{0}', space=sflag, size = 0x4, scoped, tag = 'scoped memory for transformer_forward.37']
    #allocation8 [shape = 'u8[512]{0}', space=vmem, size = 0x400, scoped, tag = 'input window, operand 2, single buffered']
    #allocation9 [shape = 'u8[8192]{0}', space=vmem, size = 0x2000, scoped, tag = 'output window, operand 0, single buffered']
    %8 = vsyncpa [#allocation4], 0
    %9 = vsyncpa [#allocation7], 0
    %10 = vsyncpa [#allocation5], 0
    // Predicated region
    $region2: #{transformer_forward.37} parent=1 // pred_check
      _
    $region3: #{transformer_forward.37} parent=1 // pred_check_branch
      %12 = sbr.rel (0) target = $region5
    $region4: #{transformer_forward.37} parent=1 // pred_region
      %s14 = ssub.s32 256, 256
      %15 = vsyncadd [#allocation4], %s14
      %s16 = sshll.u32 [#allocation3], 4
      %s17 = int_to_ptr.vmem [resolvable:$true] %s16
      %22 = dma.hbm_to_vmem [thread:$0]  %s0, 256, %s17, [#allocation4], 128, 128, 8
    $region5: #{transformer_forward.37} parent=1 // pred_fallthru
      _
    // Predicated region
    $region6: #{transformer_forward.37} parent=1 // pred_check
      _
    $region7: #{transformer_forward.37} parent=1 // pred_check_branch
      %24 = sbr.rel (0) target = $region9
    $region8: #{transformer_forward.37} parent=1 // pred_region
      %s26 = ssub.s32 512, 512
      %27 = vsyncadd [#allocation7], %s26
      %s28 = sshll.u32 [#allocation6], 4
      %s29 = int_to_ptr.vmem [resolvable:$true] %s28
      %34 = dma.hbm_to_vmem [thread:$0]  %s1, 512, %s29, [#allocation7], 128, 128, 8
    $region9: #{transformer_forward.37} parent=1 // pred_fallthru
      _
    // Predicated region
    $region10: #{transformer_forward.37} parent=1 // pred_check
      _
    $region11: #{transformer_forward.37} parent=1 // pred_check_branch
      %36 = sbr.rel (0) target = $region13
    $region12: #{transformer_forward.37} parent=1 // pred_region
      %s38 = ssub.s32 16, 16
      %39 = vsyncadd [#allocation7], %s38
      %s41 = sshll.u32 [#allocation8], 4
      %s42 = int_to_ptr.vmem [resolvable:$true] %s41
      %44 = dma.hbm_to_vmem [thread:$0]  %s2, 16, %s42, [#allocation7]
    $region13: #{transformer_forward.37} parent=1 // pred_fallthru
      _
    // Predicated region
    $region14: #{transformer_forward.37} parent=1 // pred_check
      _
    $region15: #{transformer_forward.37} parent=1 // pred_check_branch
      %46 = sbr.rel (0) target = $region17
    $region16: #{transformer_forward.37} parent=1 // pred_region
      %47 = dma.done [#allocation4], 256
    $region17: #{transformer_forward.37} parent=1 // pred_fallthru
      _
    // Predicated region
    $region18: #{transformer_forward.37} parent=1 // pred_check
      _
    $region19: #{transformer_forward.37} parent=1 // pred_check_branch
      %49 = sbr.rel (0) target = $region21
    $region20: #{transformer_forward.37} parent=1 // pred_region
      %50 = dma.done [#allocation7], 512
    $region21: #{transformer_forward.37} parent=1 // pred_fallthru
      _
    // Predicated region
    $region22: #{transformer_forward.37} parent=1 // pred_check
      _
    $region23: #{transformer_forward.37} parent=1 // pred_check_branch
      %52 = sbr.rel (0) target = $region25
    $region24: #{transformer_forward.37} parent=1 // pred_region
      %53 = dma.done [#allocation7], 16
    $region25: #{transformer_forward.37} parent=1 // pred_fallthru
      _
    %p55 = scmp.eq.s32.totalorder 0, 0
    // Predicated region
    $region26: #{transformer_forward.37} parent=1 // pred_check
      %p56 = pneg %p55
    $region27: #{transformer_forward.37} parent=1 // pred_check_branch
      %58 = sbr.rel (%p56) target = $region29
    $region28: #{transformer_forward.37} parent=1 // pred_region
      %vm59 = vcmask 523264
      %60 = vst.msk [vmem:[#allocation2] sm:$0xff] %vm59, 0.0
      %61 = vst.msk [vmem:[#allocation2 + $0x8] sm:$0xff] %vm59, 0.0
    $region29: #{transformer_forward.37} parent=1 // pred_fallthru
      _
    %v62 = vld [vmem:[#allocation2] sm:$0xff]
    %v63 = vld [vmem:[#allocation2 + $0x8] sm:$0xff]
    %v64 = vld [vmem:[#allocation3] sm:$0xff]
    %v65 = vld [vmem:[#allocation3 + $0x8] sm:$0xff]
    %v66 = vpack.c.bf16 %v65, %v64
    %v67 = vld [vmem:[#allocation6] sm:$0xff]
    %v68 = vld [vmem:[#allocation6 + $0x8] sm:$0xff]
    %v69 = vld [vmem:[#allocation6 + $0x10] sm:$0xff]
    %v70 = vld [vmem:[#allocation6 + $0x18] sm:$0xff]
    %v71 = vpack.c.bf16 %v68, %v67
    %v72 = vpack.c.bf16 %v70, %v69
    %vm73 = vcmask 261120
    %v75 = vsel %vm73, %v66, 0
    %77 = vmatprep.subr.bf16.mxu0 0
    %78 = vmatpush1.bf16.msra.mxu0 %v71
    %79 = vmatprep.subr.bf16.mxu0 0
    %80 = vmatpush1.bf16.msra.mxu0 %v72
    %81 = vmatprep.subr.bf16.mxu0 0
    %82 = vmatpush1.bf16.msra.mxu0 0
    %83 = vmatprep.subr.bf16.mxu0 0
    %84 = vmatpush1.bf16.msra.mxu0 0
    %85 = vmatprep.subr.bf16.mxu0 0
    %86 = vmatpush1.bf16.msra.mxu0 0
    %87 = vmatprep.subr.bf16.mxu0 0
    %88 = vmatpush1.bf16.msra.mxu0 0
    %89 = vmatprep.subr.bf16.mxu0 0
    %90 = vmatpush1.bf16.msra.mxu0 0
    %91 = vmatprep.subr.bf16.mxu0 0
    %92 = vmatpush1.bf16.msra.mxu0 0
    %93 = vmatprep.subr.bf16.mxu0 0
    %94 = vmatpush1.bf16.msra.mxu0 0
    %95 = vmatprep.subr.bf16.mxu0 0
    %96 = vmatpush1.bf16.msra.mxu0 0
    %97 = vmatprep.subr.bf16.mxu0 0
    %98 = vmatpush1.bf16.msra.mxu0 0
    %99 = vmatprep.subr.bf16.mxu0 0
    %100 = vmatpush1.bf16.msra.mxu0 0
    %101 = vmatprep.subr.bf16.mxu0 0
    %102 = vmatpush1.bf16.msra.mxu0 0
    %103 = vmatprep.subr.bf16.mxu0 0
    %104 = vmatpush1.bf16.msra.mxu0 0
    %105 = vmatprep.subr.bf16.mxu0 0
    %106 = vmatpush1.bf16.msra.mxu0 0
    %107 = vmatprep.subr.bf16.mxu0 0
    %108 = vmatpush1.bf16.msra.mxu0 0
    %109 = vmatprep.mubr.bf16.mxu0 0
    %110 = vmatmul.mubr.bf16.gmra.mrb[0].mxu0 %v75
    %v111 = vpop.f32.mrb[0].mxu0
    %v112 = vadd.f32 0.0, %v111
    %v113 = vpop.f32.mrb[0].mxu0
    %v114 = vpop.f32.mrb[0].mxu0
    %v115 = vadd.f32 0.0, %v114
    %v116 = vpop.f32.mrb[0].mxu0
    %117 = vdwg.mxu0
    %v118 = vadd.f32 %v62, %v112
    %v119 = vadd.f32 %v63, %v115
    %vm120 = vcmask 523264
    %121 = vst.msk [vmem:[#allocation2] sm:$0xff] %vm120, %v118
    %122 = vst.msk [vmem:[#allocation2 + $0x8] sm:$0xff] %vm120, %v119
    // Predicated region
    $region30: #{transformer_forward.37} parent=1 // pred_check
      %p123 = pneg %p55
    $region31: #{transformer_forward.37} parent=1 // pred_check_branch
      %125 = sbr.rel (%p123) target = $region33
    $region32: #{transformer_forward.37} parent=1 // pred_region
      %v126 = vld [vmem:[#allocation2] sm:$0xff]
      %v127 = vld [vmem:[#allocation2 + $0x8] sm:$0xff]
      %v128 = vld [vmem:[#allocation8] sm:$0x1]
      %v130 = vlaneseq
      %v131 = vshrl.u32 %v130, 7
      %v132 = vsub.s32 0, %v131
      %v133 = vrot.slane %v128, %v132
      %v135 = vadd.f32 %v126, %v133
      %v136 = vadd.f32 %v127, %v133
      %137 = vst.msk [vmem:[#allocation9] sm:$0xff] %vm120, %v135
      %138 = vst.msk [vmem:[#allocation9 + $0x8] sm:$0xff] %vm120, %v136
    $region33: #{transformer_forward.37} parent=1 // pred_fallthru
      _
    // Predicated region
    $region34: #{transformer_forward.37} parent=1 // pred_check
      _
    $region35: #{transformer_forward.37} parent=1 // pred_check_branch
      %140 = sbr.rel (0) target = $region37
    $region36: #{transformer_forward.37} parent=1 // pred_region
      %s142 = ssub.s32 256, 256
      %143 = vsyncadd [#allocation5], %s142
      %s144 = sshll.u32 [#allocation9], 4
      %s145 = int_to_ptr.vmem [resolvable:$true] %s144
      %150 = dma.vmem_to_hbm [thread:$0]  %s145, 256, %s3, [#allocation5], 128, 128, 8
    $region37: #{transformer_forward.37} parent=1 // pred_fallthru
      _
    // Predicated region
    $region38: #{transformer_forward.37} parent=1 // pred_check
      _
    $region39: #{transformer_forward.37} parent=1 // pred_check_branch
      %152 = sbr.rel (0) target = $region41
    $region40: #{transformer_forward.37} parent=1 // pred_region
      %153 = dma.done [#allocation5], 256
    $region41: #{transformer_forward.37} parent=1 // pred_fallthru
      _
    %154 = vsyncpa [#allocation4], 1
    %155 = vsyncpa [#allocation7], 1
    %156 = vsyncpa [#allocation5], 1

// kernel: transformer_forward.28
$region0: #{transformer_forward.28}
  #allocation0 [shape = 'u32[]', space=smem, size = 0x4, offset = 0x4, fixed_abs, tag = 'smem constant byte address 0x4 - core index']
  #allocation1 [shape = 'u32[144,128]{1,0:T(1,128)}', space=vmem, size = 0x12000, scoped, tag = 'internal scratch']
  %s0 = inlined_call_operand.hbm [shape: f32[16,32], index: 0, kind: input, shape index: {}, may-alias: {0,5}]
  %s1 = inlined_call_operand.hbm [shape: f32[32,64], index: 1, kind: input, shape index: {}]
  %s2 = inlined_call_operand.hbm [shape: f32[1,64], index: 2, kind: input, shape index: {}]
  %s3 = inlined_call_operand.hbm [shape: f32[64,32], index: 3, kind: input, shape index: {}]
  %s4 = inlined_call_operand.hbm [shape: f32[1,32], index: 4, kind: input, shape index: {}]
  %s5 = inlined_call_operand.hbm [shape: f32[16,32], index: 5, kind: input, shape index: {}, may-alias: {0,5}]
  %s6 = inlined_call_operand.hbm [shape: f32[1,32], index: 6, kind: input, shape index: {}]
  %s7 = inlined_call_operand.hbm [shape: f32[1,32], index: 7, kind: input, shape index: {}]
  %s8 = inlined_call_operand.hbm [shape: f32[16,32], index: 8, kind: output, shape index: {}]
  %s9 = sld [smem:[#allocation0]]
  $region74: #{transformer_forward.28} parent=0
    _
  %s11 = ssub.s32 1, %s9
  %s12 = scalar_select 0, %s11, %s9
  $region1: #{transformer_forward.28} parent=0
    #allocation2 [shape = 'u8[8192]{0}', space=vmem, size = 0x2000, scoped, tag = 'input window, operand 0, single buffered']
    #allocation3 [shape = 's32[1]{0}', space=sflag, size = 0x4, scoped, tag = 'scoped memory for transformer_forward.28']
    #allocation4 [shape = 's32[1]{0}', space=sflag, size = 0x4, scoped, tag = 'scoped memory for transformer_forward.28']
    #allocation5 [shape = 'u8[16384]{0}', space=vmem, size = 0x4000, scoped, tag = 'input window, operand 1, single buffered']
    #allocation6 [shape = 's32[1]{0}', space=sflag, size = 0x4, scoped, tag = 'scoped memory for transformer_forward.28']
    #allocation7 [shape = 'u8[512]{0}', space=vmem, size = 0x400, scoped, tag = 'input window, operand 2, single buffered']
    #allocation8 [shape = 'u8[32768]{0}', space=vmem, size = 0x8000, scoped, tag = 'input window, operand 3, single buffered']
    #allocation9 [shape = 's32[1]{0}', space=sflag, size = 0x4, scoped, tag = 'scoped memory for transformer_forward.28']
    #allocation10 [shape = 'u8[512]{0}', space=vmem, size = 0x400, scoped, tag = 'input window, operand 4, single buffered']
    #allocation11 [shape = 'u8[8192]{0}', space=vmem, size = 0x2000, scoped, tag = 'input window, operand 5, single buffered']
    #allocation12 [shape = 's32[1]{0}', space=sflag, size = 0x4, scoped, tag = 'scoped memory for transformer_forward.28']
    #allocation13 [shape = 'u8[512]{0}', space=vmem, size = 0x400, scoped, tag = 'input window, operand 6, single buffered']
    #allocation14 [shape = 'u8[512]{0}', space=vmem, size = 0x400, scoped, tag = 'input window, operand 7, single buffered']
    #allocation15 [shape = 's32[1]{0}', space=sflag, size = 0x4, scoped, tag = 'scoped memory for transformer_forward.28']
    #allocation16 [shape = 'u8[8192]{0}', space=vmem, size = 0x2000, scoped, tag = 'output window, operand 0, single buffered']
    %13 = vsyncpa [#allocation3], 0
    %14 = vsyncpa [#allocation6], 0
    %15 = vsyncpa [#allocation9], 0
    %16 = vsyncpa [#allocation12], 0
    %17 = vsyncpa [#allocation15], 0
    %18 = vsyncpa [#allocation4], 0
    // Predicated region
    $region2: #{transformer_forward.28} parent=1 // pred_check
      _
    $region3: #{transformer_forward.28} parent=1 // pred_check_branch
      %20 = sbr.rel (0) target = $region5
    $region4: #{transformer_forward.28} parent=1 // pred_region
      %s22 = ssub.s32 256, 256
      %23 = vsyncadd [#allocation3], %s22
      %s24 = sshll.u32 [#allocation2], 4
      %s25 = int_to_ptr.vmem [resolvable:$true] %s24
      %30 = dma.hbm_to_vmem [thread:$0]  %s0, 256, %s25, [#allocation3], 128, 128, 8
    $region5: #{transformer_forward.28} parent=1 // pred_fallthru
      _
    // Predicated region
    $region6: #{transformer_forward.28} parent=1 // pred_check
      _
    $region7: #{transformer_forward.28} parent=1 // pred_check_branch
      %32 = sbr.rel (0) target = $region9
    $region8: #{transformer_forward.28} parent=1 // pred_region
      %s34 = ssub.s32 512, 512
      %35 = vsyncadd [#allocation6], %s34
      %s36 = sshll.u32 [#allocation5], 4
      %s37 = int_to_ptr.vmem [resolvable:$true] %s36
      %42 = dma.hbm_to_vmem [thread:$0]  %s1, 512, %s37, [#allocation6], 128, 128, 8
    $region9: #{transformer_forward.28} parent=1 // pred_fallthru
      _
    // Predicated region
    $region10: #{transformer_forward.28} parent=1 // pred_check
      _
    $region11: #{transformer_forward.28} parent=1 // pred_check_branch
      %44 = sbr.rel (0) target = $region13
    $region12: #{transformer_forward.28} parent=1 // pred_region
      %s46 = ssub.s32 16, 16
      %47 = vsyncadd [#allocation6], %s46
      %s49 = sshll.u32 [#allocation7], 4
      %s50 = int_to_ptr.vmem [resolvable:$true] %s49
      %52 = dma.hbm_to_vmem [thread:$0]  %s2, 16, %s50, [#allocation6]
    $region13: #{transformer_forward.28} parent=1 // pred_fallthru
      _
    // Predicated region
    $region14: #{transformer_forward.28} parent=1 // pred_check
      _
    $region15: #{transformer_forward.28} parent=1 // pred_check_branch
      %54 = sbr.rel (0) target = $region17
    $region16: #{transformer_forward.28} parent=1 // pred_region
      %s56 = ssub.s32 1024, 1024
      %57 = vsyncadd [#allocation9], %s56
      %s58 = sshll.u32 [#allocation8], 4
      %s59 = int_to_ptr.vmem [resolvable:$true] %s58
      %64 = dma.hbm_to_vmem [thread:$0]  %s3, 1024, %s59, [#allocation9], 128, 128, 8
    $region17: #{transformer_forward.28} parent=1 // pred_fallthru
      _
    // Predicated region
    $region18: #{transformer_forward.28} parent=1 // pred_check
      _
    $region19: #{transformer_forward.28} parent=1 // pred_check_branch
      %66 = sbr.rel (0) target = $region21
    $region20: #{transformer_forward.28} parent=1 // pred_region
      %s68 = ssub.s32 16, 16
      %69 = vsyncadd [#allocation9], %s68
      %s71 = sshll.u32 [#allocation10], 4
      %s72 = int_to_ptr.vmem [resolvable:$true] %s71
      %74 = dma.hbm_to_vmem [thread:$0]  %s4, 16, %s72, [#allocation9]
    $region21: #{transformer_forward.28} parent=1 // pred_fallthru
      _
    // Predicated region
    $region22: #{transformer_forward.28} parent=1 // pred_check
      _
    $region23: #{transformer_forward.28} parent=1 // pred_check_branch
      %76 = sbr.rel (0) target = $region25
    $region24: #{transformer_forward.28} parent=1 // pred_region
      %s78 = ssub.s32 256, 256
      %79 = vsyncadd [#allocation12], %s78
      %s80 = sshll.u32 [#allocation11], 4
      %s81 = int_to_ptr.vmem [resolvable:$true] %s80
      %86 = dma.hbm_to_vmem [thread:$0]  %s5, 256, %s81, [#allocation12], 128, 128, 8
    $region25: #{transformer_forward.28} parent=1 // pred_fallthru
      _
    // Predicated region
    $region26: #{transformer_forward.28} parent=1 // pred_check
      _
    $region27: #{transformer_forward.28} parent=1 // pred_check_branch
      %88 = sbr.rel (0) target = $region29
    $region28: #{transformer_forward.28} parent=1 // pred_region
      %s90 = ssub.s32 16, 16
      %91 = vsyncadd [#allocation12], %s90
      %s93 = sshll.u32 [#allocation13], 4
      %s94 = int_to_ptr.vmem [resolvable:$true] %s93
      %96 = dma.hbm_to_vmem [thread:$0]  %s6, 16, %s94, [#allocation12]
    $region29: #{transformer_forward.28} parent=1 // pred_fallthru
      _
    // Predicated region
    $region30: #{transformer_forward.28} parent=1 // pred_check
      _
    $region31: #{transformer_forward.28} parent=1 // pred_check_branch
      %98 = sbr.rel (0) target = $region33
    $region32: #{transformer_forward.28} parent=1 // pred_region
      %s100 = ssub.s32 16, 16
      %101 = vsyncadd [#allocation15], %s100
      %s103 = sshll.u32 [#allocation14], 4
      %s104 = int_to_ptr.vmem [resolvable:$true] %s103
      %106 = dma.hbm_to_vmem [thread:$0]  %s7, 16, %s104, [#allocation15]
    $region33: #{transformer_forward.28} parent=1 // pred_fallthru
      _
    // Predicated region
    $region34: #{transformer_forward.28} parent=1 // pred_check
      _
    $region35: #{transformer_forward.28} parent=1 // pred_check_branch
      %108 = sbr.rel (0) target = $region37
    $region36: #{transformer_forward.28} parent=1 // pred_region
      %109 = dma.done [#allocation3], 256
    $region37: #{transformer_forward.28} parent=1 // pred_fallthru
      _
    // Predicated region
    $region38: #{transformer_forward.28} parent=1 // pred_check
      _
    $region39: #{transformer_forward.28} parent=1 // pred_check_branch
      %111 = sbr.rel (0) target = $region41
    $region40: #{transformer_forward.28} parent=1 // pred_region
      %112 = dma.done [#allocation6], 512
    $region41: #{transformer_forward.28} parent=1 // pred_fallthru
      _
    // Predicated region
    $region42: #{transformer_forward.28} parent=1 // pred_check
      _
    $region43: #{transformer_forward.28} parent=1 // pred_check_branch
      %114 = sbr.rel (0) target = $region45
    $region44: #{transformer_forward.28} parent=1 // pred_region
      %115 = dma.done [#allocation6], 16
    $region45: #{transformer_forward.28} parent=1 // pred_fallthru
      _
    // Predicated region
    $region46: #{transformer_forward.28} parent=1 // pred_check
      _
    $region47: #{transformer_forward.28} parent=1 // pred_check_branch
      %117 = sbr.rel (0) target = $region49
    $region48: #{transformer_forward.28} parent=1 // pred_region
      %118 = dma.done [#allocation9], 1024
    $region49: #{transformer_forward.28} parent=1 // pred_fallthru
      _
    // Predicated region
    $region50: #{transformer_forward.28} parent=1 // pred_check
      _
    $region51: #{transformer_forward.28} parent=1 // pred_check_branch
      %120 = sbr.rel (0) target = $region53
    $region52: #{transformer_forward.28} parent=1 // pred_region
      %121 = dma.done [#allocation9], 16
    $region53: #{transformer_forward.28} parent=1 // pred_fallthru
      _
    // Predicated region
    $region54: #{transformer_forward.28} parent=1 // pred_check
      _
    $region55: #{transformer_forward.28} parent=1 // pred_check_branch
      %123 = sbr.rel (0) target = $region57
    $region56: #{transformer_forward.28} parent=1 // pred_region
      %124 = dma.done [#allocation12], 256
    $region57: #{transformer_forward.28} parent=1 // pred_fallthru
      _
    // Predicated region
    $region58: #{transformer_forward.28} parent=1 // pred_check
      _
    $region59: #{transformer_forward.28} parent=1 // pred_check_branch
      %126 = sbr.rel (0) target = $region61
    $region60: #{transformer_forward.28} parent=1 // pred_region
      %127 = dma.done [#allocation12], 16
    $region61: #{transformer_forward.28} parent=1 // pred_fallthru
      _
    // Predicated region
    $region62: #{transformer_forward.28} parent=1 // pred_check
      _
    $region63: #{transformer_forward.28} parent=1 // pred_check_branch
      %129 = sbr.rel (0) target = $region65
    $region64: #{transformer_forward.28} parent=1 // pred_region
      %130 = dma.done [#allocation15], 16
    $region65: #{transformer_forward.28} parent=1 // pred_fallthru
      _
    %v132 = vld [vmem:[#allocation2] sm:$0xff]
    %v133 = vld [vmem:[#allocation2 + $0x8] sm:$0xff]
    %v134 = vpack.c.bf16 %v133, %v132
    %v135 = vld [vmem:[#allocation5] sm:$0xff]
    %v136 = vld [vmem:[#allocation5 + $0x8] sm:$0xff]
    %v137 = vld [vmem:[#allocation5 + $0x10] sm:$0xff]
    %v138 = vld [vmem:[#allocation5 + $0x18] sm:$0xff]
    %v139 = vpack.c.bf16 %v136, %v135
    %v140 = vpack.c.bf16 %v138, %v137
    %v141 = vld [vmem:[#allocation7] sm:$0x1]
    %v143 = vlaneseq
    %v144 = vshrl.u32 %v143, 7
    %v145 = vsub.s32 0, %v144
    %v146 = vrot.slane %v141, %v145
    %vm148 = vcmask 261120
    %v150 = vsel %vm148, %v134, 0
    %152 = vmatprep.subr.bf16.mxu0 0
    %153 = vmatpush1.bf16.msra.mxu0 %v139
    %154 = vmatprep.subr.bf16.mxu0 0
    %155 = vmatpush1.bf16.msra.mxu0 %v140
    %156 = vmatprep.subr.bf16.mxu0 0
    %157 = vmatpush1.bf16.msra.mxu0 0
    %158 = vmatprep.subr.bf16.mxu0 0
    %159 = vmatpush1.bf16.msra.mxu0 0
    %160 = vmatprep.subr.bf16.mxu0 0
    %161 = vmatpush1.bf16.msra.mxu0 0
    %162 = vmatprep.subr.bf16.mxu0 0
    %163 = vmatpush1.bf16.msra.mxu0 0
    %164 = vmatprep.subr.bf16.mxu0 0
    %165 = vmatpush1.bf16.msra.mxu0 0
    %166 = vmatprep.subr.bf16.mxu0 0
    %167 = vmatpush1.bf16.msra.mxu0 0
    %168 = vmatprep.subr.bf16.mxu0 0
    %169 = vmatpush1.bf16.msra.mxu0 0
    %170 = vmatprep.subr.bf16.mxu0 0
    %171 = vmatpush1.bf16.msra.mxu0 0
    %172 = vmatprep.subr.bf16.mxu0 0
    %173 = vmatpush1.bf16.msra.mxu0 0
    %174 = vmatprep.subr.bf16.mxu0 0
    %175 = vmatpush1.bf16.msra.mxu0 0
    %176 = vmatprep.subr.bf16.mxu0 0
    %177 = vmatpush1.bf16.msra.mxu0 0
    %178 = vmatprep.subr.bf16.mxu0 0
    %179 = vmatpush1.bf16.msra.mxu0 0
    %180 = vmatprep.subr.bf16.mxu0 0
    %181 = vmatpush1.bf16.msra.mxu0 0
    %182 = vmatprep.subr.bf16.mxu0 0
    %183 = vmatpush1.bf16.msra.mxu0 0
    %184 = vmatprep.mubr.bf16.mxu0 0
    %185 = vmatmul.mubr.bf16.gmra.mrb[0].mxu0 %v150
    %v186 = vpop.f32.mrb[0].mxu0
    %v187 = vadd.f32 %v146, %v186
    %v188 = vpop.f32.mrb[0].mxu0
    %v189 = vpop.f32.mrb[0].mxu0
    %v190 = vadd.f32 %v146, %v189
    %v191 = vpop.f32.mrb[0].mxu0
    %192 = vdwg.mxu0
    %v193 = vmax.f32 %v187, 0.0
    %v194 = vmax.f32 %v190, 0.0
    %v195 = vpack.c.bf16 %v194, %v193
    %v196 = vld [vmem:[#allocation8] sm:$0xff]
    %v197 = vld [vmem:[#allocation8 + $0x8] sm:$0xff]
    %v198 = vld [vmem:[#allocation8 + $0x10] sm:$0xff]
    %v199 = vld [vmem:[#allocation8 + $0x18] sm:$0xff]
    %v200 = vld [vmem:[#allocation8 + $0x20] sm:$0xff]
    %v201 = vld [vmem:[#allocation8 + $0x28] sm:$0xff]
    %v202 = vld [vmem:[#allocation8 + $0x30] sm:$0xff]
    %v203 = vld [vmem:[#allocation8 + $0x38] sm:$0xff]
    %v204 = vpack.c.bf16 %v197, %v196
    %v205 = vpack.c.bf16 %v199, %v198
    %v206 = vpack.c.bf16 %v201, %v200
    %v207 = vpack.c.bf16 %v203, %v202
    %v208 = vld [vmem:[#allocation10] sm:$0x1]
    %v210 = vlaneseq
    %v211 = vshrl.u32 %v210, 7
    %v212 = vsub.s32 0, %v211
    %v213 = vrot.slane %v208, %v212
    %vm215 = vcmask 523264
    %v217 = vsel %vm215, %v195, 0
    %219 = vmatprep.subr.bf16.mxu0 0
    %220 = vmatpush1.bf16.msra.mxu0 %v204
    %221 = vmatprep.subr.bf16.mxu0 0
    %222 = vmatpush1.bf16.msra.mxu0 %v205
    %223 = vmatprep.subr.bf16.mxu0 0
    %224 = vmatpush1.bf16.msra.mxu0 %v206
    %225 = vmatprep.subr.bf16.mxu0 0
    %226 = vmatpush1.bf16.msra.mxu0 %v207
    %227 = vmatprep.subr.bf16.mxu0 0
    %228 = vmatpush1.bf16.msra.mxu0 0
    %229 = vmatprep.subr.bf16.mxu0 0
    %230 = vmatpush1.bf16.msra.mxu0 0
    %231 = vmatprep.subr.bf16.mxu0 0
    %232 = vmatpush1.bf16.msra.mxu0 0
    %233 = vmatprep.subr.bf16.mxu0 0
    %234 = vmatpush1.bf16.msra.mxu0 0
    %235 = vmatprep.subr.bf16.mxu0 0
    %236 = vmatpush1.bf16.msra.mxu0 0
    %237 = vmatprep.subr.bf16.mxu0 0
    %238 = vmatpush1.bf16.msra.mxu0 0
    %239 = vmatprep.subr.bf16.mxu0 0
    %240 = vmatpush1.bf16.msra.mxu0 0
    %241 = vmatprep.subr.bf16.mxu0 0
    %242 = vmatpush1.bf16.msra.mxu0 0
    %243 = vmatprep.subr.bf16.mxu0 0
    %244 = vmatpush1.bf16.msra.mxu0 0
    %245 = vmatprep.subr.bf16.mxu0 0
    %246 = vmatpush1.bf16.msra.mxu0 0
    %247 = vmatprep.subr.bf16.mxu0 0
    %248 = vmatpush1.bf16.msra.mxu0 0
    %249 = vmatprep.subr.bf16.mxu0 0
    %250 = vmatpush1.bf16.msra.mxu0 0
    %251 = vmatprep.mubr.bf16.mxu0 0
    %252 = vmatmul.mubr.bf16.gmra.mrb[0].mxu0 %v217
    %v253 = vpop.f32.mrb[0].mxu0
    %v254 = vadd.f32 %v213, %v253
    %v255 = vpop.f32.mrb[0].mxu0
    %v256 = vpop.f32.mrb[0].mxu0
    %v257 = vadd.f32 %v213, %v256
    %v258 = vpop.f32.mrb[0].mxu0
    %259 = vdwg.mxu0
    %v260 = vld [vmem:[#allocation11] sm:$0xff]
    %v261 = vld [vmem:[#allocation11 + $0x8] sm:$0xff]
    %v262 = vadd.f32 %v254, %v260
    %v263 = vadd.f32 %v257, %v261
    %v264 = vsel %vm148, %v262, 0.0
    %265 = vadd.xlane.f32.xlu0 %v264
    %v266 = vpop.xlane.xlu0 %265
    %v267 = vsel %vm148, %v263, 0.0
    %268 = vadd.xlane.f32.xlu0 %v267
    %v269 = vpop.xlane.xlu0 %268
    %v270 = vrcp.pop 32.0
    %v271 = vmul.f32 %v266, %v270
    %v272 = vmul.f32 %v269, %v270
    %v273 = vsub.f32 %v262, %v271
    %v274 = vsub.f32 %v263, %v272
    %v275 = vmul.f32 %v273, %v273
    %v276 = vmul.f32 %v274, %v274
    %v277 = vsel %vm148, %v275, 0.0
    %278 = vadd.xlane.f32.xlu0 %v277
    %v279 = vpop.xlane.xlu0 %278
    %v280 = vsel %vm148, %v276, 0.0
    %281 = vadd.xlane.f32.xlu0 %v280
    %v282 = vpop.xlane.xlu0 %281
    %v283 = vmul.f32 %v279, %v270
    %v284 = vmul.f32 %v282, %v270
    %v285 = vadd.f32 %v283, 1e-06
    %v286 = vadd.f32 %v284, 1e-06
    %v287 = vrsqrt.pop %v285
    %v288 = vrsqrt.pop %v286
    %v289 = vmul.f32 %v273, %v287
    %v290 = vmul.f32 %v274, %v288
    %v291 = vld [vmem:[#allocation13] sm:$0x1]
    %v293 = vlaneseq
    %v294 = vshrl.u32 %v293, 7
    %v295 = vsub.s32 0, %v294
    %v296 = vrot.slane %v291, %v295
    %v298 = vmul.f32 %v289, %v296
    %v299 = vmul.f32 %v290, %v296
    %v300 = vld [vmem:[#allocation14] sm:$0x1]
    %v302 = vlaneseq
    %v303 = vshrl.u32 %v302, 7
    %v304 = vsub.s32 0, %v303
    %v305 = vrot.slane %v300, %v304
    %v307 = vadd.f32 %v298, %v305
    %v308 = vadd.f32 %v299, %v305
    %309 = vst.msk [vmem:[#allocation16] sm:$0xff] %vm148, %v307
    %310 = vst.msk [vmem:[#allocation16 + $0x8] sm:$0xff] %vm148, %v308
    // Predicated region
    $region66: #{transformer_forward.28} parent=1 // pred_check
      _
    $region67: #{transformer_forward.28} parent=1 // pred_check_branch
      %312 = sbr.rel (0) target = $region69
    $region68: #{transformer_forward.28} parent=1 // pred_region
      %s314 = ssub.s32 256, 256
      %315 = vsyncadd [#allocation4], %s314
      %s316 = sshll.u32 [#allocation16], 4
      %s317 = int_to_ptr.vmem [resolvable:$true] %s316
      %322 = dma.vmem_to_hbm [thread:$0]  %s317, 256, %s8, [#allocation4], 128, 128, 8
    $region69: #{transformer_forward.28} parent=1 // pred_fallthru
      _
    // Predicated region
    $region70: #{transformer_forward.28} parent=1 // pred_check
      _
    $region71: #{transformer_forward.28} parent=1 // pred_check_branch
      %324 = sbr.rel (0) target = $region73
    $region72: #{transformer_forward.28} parent=1 // pred_region
      %325 = dma.done [#allocation4], 256
    $region73: #{transformer_forward.28} parent=1 // pred_fallthru
      _
    %326 = vsyncpa [#allocation3], 1
    %327 = vsyncpa [#allocation6], 1
    %328 = vsyncpa [#allocation9], 1
    %329 = vsyncpa [#allocation12], 1
    %330 = vsyncpa [#allocation15], 1
    %331 = vsyncpa [#allocation4], 1

// kernel: transformer_forward.49
$region0: #{transformer_forward.49}
  #allocation0 [shape = 'u32[]', space=smem, size = 0x4, offset = 0x4, fixed_abs, tag = 'smem constant byte address 0x4 - core index']
  #allocation1 [shape = 'u32[144,128]{1,0:T(1,128)}', space=vmem, size = 0x12000, scoped, tag = 'internal scratch']
  #allocation2 [shape = 'f32[16,128]{1,0:T(8,128)}', space=vmem, size = 0x2000, scoped, tag = 'scratch operand']
  %s0 = inlined_call_operand.hbm [shape: f32[16,32], index: 0, kind: input, shape index: {}]
  %s1 = inlined_call_operand.hbm [shape: f32[32,128], index: 1, kind: input, shape index: {}]
  %s2 = inlined_call_operand.hbm [shape: f32[1,128], index: 2, kind: input, shape index: {}]
  %s3 = inlined_call_operand.hbm [shape: f32[16,128], index: 3, kind: output, shape index: {}]
  %s4 = sld [smem:[#allocation0]]
  $region42: #{transformer_forward.49} parent=0
    _
  %s6 = ssub.s32 1, %s4
  %s7 = scalar_select 0, %s6, %s4
  $region1: #{transformer_forward.49} parent=0
    #allocation3 [shape = 'u8[8192]{0}', space=vmem, size = 0x2000, scoped, tag = 'input window, operand 0, single buffered']
    #allocation4 [shape = 's32[1]{0}', space=sflag, size = 0x4, scoped, tag = 'scoped memory for transformer_forward.49']
    #allocation5 [shape = 's32[1]{0}', space=sflag, size = 0x4, scoped, tag = 'scoped memory for transformer_forward.49']
    #allocation6 [shape = 'u8[16384]{0}', space=vmem, size = 0x4000, scoped, tag = 'input window, operand 1, single buffered']
    #allocation7 [shape = 's32[1]{0}', space=sflag, size = 0x4, scoped, tag = 'scoped memory for transformer_forward.49']
    #allocation8 [shape = 'u8[512]{0}', space=vmem, size = 0x400, scoped, tag = 'input window, operand 2, single buffered']
    #allocation9 [shape = 'u8[8192]{0}', space=vmem, size = 0x2000, scoped, tag = 'output window, operand 0, single buffered']
    %8 = vsyncpa [#allocation4], 0
    %9 = vsyncpa [#allocation7], 0
    %10 = vsyncpa [#allocation5], 0
    // Predicated region
    $region2: #{transformer_forward.49} parent=1 // pred_check
      _
    $region3: #{transformer_forward.49} parent=1 // pred_check_branch
      %12 = sbr.rel (0) target = $region5
    $region4: #{transformer_forward.49} parent=1 // pred_region
      %s14 = ssub.s32 256, 256
      %15 = vsyncadd [#allocation4], %s14
      %s16 = sshll.u32 [#allocation3], 4
      %s17 = int_to_ptr.vmem [resolvable:$true] %s16
      %22 = dma.hbm_to_vmem [thread:$0]  %s0, 256, %s17, [#allocation4], 128, 128, 8
    $region5: #{transformer_forward.49} parent=1 // pred_fallthru
      _
    // Predicated region
    $region6: #{transformer_forward.49} parent=1 // pred_check
      _
    $region7: #{transformer_forward.49} parent=1 // pred_check_branch
      %24 = sbr.rel (0) target = $region9
    $region8: #{transformer_forward.49} parent=1 // pred_region
      %s26 = ssub.s32 512, 512
      %27 = vsyncadd [#allocation7], %s26
      %s28 = sshll.u32 [#allocation6], 4
      %s29 = int_to_ptr.vmem [resolvable:$true] %s28
      %34 = dma.hbm_to_vmem [thread:$0]  %s1, 512, %s29, [#allocation7], 128, 128, 8
    $region9: #{transformer_forward.49} parent=1 // pred_fallthru
      _
    // Predicated region
    $region10: #{transformer_forward.49} parent=1 // pred_check
      _
    $region11: #{transformer_forward.49} parent=1 // pred_check_branch
      %36 = sbr.rel (0) target = $region13
    $region12: #{transformer_forward.49} parent=1 // pred_region
      %s38 = ssub.s32 16, 16
      %39 = vsyncadd [#allocation7], %s38
      %s41 = sshll.u32 [#allocation8], 4
      %s42 = int_to_ptr.vmem [resolvable:$true] %s41
      %44 = dma.hbm_to_vmem [thread:$0]  %s2, 16, %s42, [#allocation7]
    $region13: #{transformer_forward.49} parent=1 // pred_fallthru
      _
    // Predicated region
    $region14: #{transformer_forward.49} parent=1 // pred_check
      _
    $region15: #{transformer_forward.49} parent=1 // pred_check_branch
      %46 = sbr.rel (0) target = $region17
    $region16: #{transformer_forward.49} parent=1 // pred_region
      %47 = dma.done [#allocation4], 256
    $region17: #{transformer_forward.49} parent=1 // pred_fallthru
      _
    // Predicated region
    $region18: #{transformer_forward.49} parent=1 // pred_check
      _
    $region19: #{transformer_forward.49} parent=1 // pred_check_branch
      %49 = sbr.rel (0) target = $region21
    $region20: #{transformer_forward.49} parent=1 // pred_region
      %50 = dma.done [#allocation7], 512
    $region21: #{transformer_forward.49} parent=1 // pred_fallthru
      _
    // Predicated region
    $region22: #{transformer_forward.49} parent=1 // pred_check
      _
    $region23: #{transformer_forward.49} parent=1 // pred_check_branch
      %52 = sbr.rel (0) target = $region25
    $region24: #{transformer_forward.49} parent=1 // pred_region
      %53 = dma.done [#allocation7], 16
    $region25: #{transformer_forward.49} parent=1 // pred_fallthru
      _
    %p55 = scmp.eq.s32.totalorder 0, 0
    // Predicated region
    $region26: #{transformer_forward.49} parent=1 // pred_check
      %p56 = pneg %p55
    $region27: #{transformer_forward.49} parent=1 // pred_check_branch
      %58 = sbr.rel (%p56) target = $region29
    $region28: #{transformer_forward.49} parent=1 // pred_region
      %59 = vst [vmem:[#allocation2] sm:$0xff] 0.0
      %60 = vst [vmem:[#allocation2 + $0x8] sm:$0xff] 0.0
    $region29: #{transformer_forward.49} parent=1 // pred_fallthru
      _
    %v61 = vld [vmem:[#allocation2] sm:$0xff]
    %v62 = vld [vmem:[#allocation2 + $0x8] sm:$0xff]
    %v63 = vld [vmem:[#allocation3] sm:$0xff]
    %v64 = vld [vmem:[#allocation3 + $0x8] sm:$0xff]
    %v65 = vpack.c.bf16 %v64, %v63
    %v66 = vld [vmem:[#allocation6] sm:$0xff]
    %v67 = vld [vmem:[#allocation6 + $0x8] sm:$0xff]
    %v68 = vld [vmem:[#allocation6 + $0x10] sm:$0xff]
    %v69 = vld [vmem:[#allocation6 + $0x18] sm:$0xff]
    %v70 = vpack.c.bf16 %v67, %v66
    %v71 = vpack.c.bf16 %v69, %v68
    %vm72 = vcmask 261120
    %v74 = vsel %vm72, %v65, 0
    %76 = vmatprep.subr.bf16.mxu0 0
    %77 = vmatpush1.bf16.msra.mxu0 %v70
    %78 = vmatprep.subr.bf16.mxu0 0
    %79 = vmatpush1.bf16.msra.mxu0 %v71
    %80 = vmatprep.subr.bf16.mxu0 0
    %81 = vmatpush1.bf16.msra.mxu0 0
    %82 = vmatprep.subr.bf16.mxu0 0
    %83 = vmatpush1.bf16.msra.mxu0 0
    %84 = vmatprep.subr.bf16.mxu0 0
    %85 = vmatpush1.bf16.msra.mxu0 0
    %86 = vmatprep.subr.bf16.mxu0 0
    %87 = vmatpush1.bf16.msra.mxu0 0
    %88 = vmatprep.subr.bf16.mxu0 0
    %89 = vmatpush1.bf16.msra.mxu0 0
    %90 = vmatprep.subr.bf16.mxu0 0
    %91 = vmatpush1.bf16.msra.mxu0 0
    %92 = vmatprep.subr.bf16.mxu0 0
    %93 = vmatpush1.bf16.msra.mxu0 0
    %94 = vmatprep.subr.bf16.mxu0 0
    %95 = vmatpush1.bf16.msra.mxu0 0
    %96 = vmatprep.subr.bf16.mxu0 0
    %97 = vmatpush1.bf16.msra.mxu0 0
    %98 = vmatprep.subr.bf16.mxu0 0
    %99 = vmatpush1.bf16.msra.mxu0 0
    %100 = vmatprep.subr.bf16.mxu0 0
    %101 = vmatpush1.bf16.msra.mxu0 0
    %102 = vmatprep.subr.bf16.mxu0 0
    %103 = vmatpush1.bf16.msra.mxu0 0
    %104 = vmatprep.subr.bf16.mxu0 0
    %105 = vmatpush1.bf16.msra.mxu0 0
    %106 = vmatprep.subr.bf16.mxu0 0
    %107 = vmatpush1.bf16.msra.mxu0 0
    %108 = vmatprep.mubr.bf16.mxu0 0
    %109 = vmatmul.mubr.bf16.gmra.mrb[0].mxu0 %v74
    %v110 = vpop.f32.mrb[0].mxu0
    %v111 = vadd.f32 0.0, %v110
    %v112 = vpop.f32.mrb[0].mxu0
    %v113 = vpop.f32.mrb[0].mxu0
    %v114 = vadd.f32 0.0, %v113
    %v115 = vpop.f32.mrb[0].mxu0
    %116 = vdwg.mxu0
    %v117 = vadd.f32 %v61, %v111
    %v118 = vadd.f32 %v62, %v114
    %119 = vst [vmem:[#allocation2] sm:$0xff] %v117
    %120 = vst [vmem:[#allocation2 + $0x8] sm:$0xff] %v118
    // Predicated region
    $region30: #{transformer_forward.49} parent=1 // pred_check
      %p121 = pneg %p55
    $region31: #{transformer_forward.49} parent=1 // pred_check_branch
      %123 = sbr.rel (%p121) target = $region33
    $region32: #{transformer_forward.49} parent=1 // pred_region
      %v124 = vld [vmem:[#allocation2] sm:$0xff]
      %v125 = vld [vmem:[#allocation2 + $0x8] sm:$0xff]
      %v126 = vld [vmem:[#allocation8] sm:$0x1]
      %v128 = vlaneseq
      %v129 = vshrl.u32 %v128, 7
      %v130 = vsub.s32 0, %v129
      %v131 = vrot.slane %v126, %v130
      %v133 = vadd.f32 %v124, %v131
      %v134 = vadd.f32 %v125, %v131
      %135 = vst [vmem:[#allocation9] sm:$0xff] %v133
      %136 = vst [vmem:[#allocation9 + $0x8] sm:$0xff] %v134
    $region33: #{transformer_forward.49} parent=1 // pred_fallthru
      _
    // Predicated region
    $region34: #{transformer_forward.49} parent=1 // pred_check
      _
    $region35: #{transformer_forward.49} parent=1 // pred_check_branch
      %138 = sbr.rel (0) target = $region37
    $region36: #{transformer_forward.49} parent=1 // pred_region
      %s140 = ssub.s32 256, 256
      %141 = vsyncadd [#allocation5], %s140
      %s142 = sshll.u32 [#allocation9], 4
      %s143 = int_to_ptr.vmem [resolvable:$true] %s142
      %148 = dma.vmem_to_hbm [thread:$0]  %s143, 256, %s3, [#allocation5], 128, 128, 8
    $region37: #{transformer_forward.49} parent=1 // pred_fallthru
      _
    // Predicated region
    $region38: #{transformer_forward.49} parent=1 // pred_check
      _
    $region39: #{transformer_forward.49} parent=1 // pred_check_branch
      %150 = sbr.rel (0) target = $region41
    $region40: #{transformer_forward.49} parent=1 // pred_region
      %151 = dma.done [#allocation5], 256
    $region41: #{transformer_forward.49} parent=1 // pred_fallthru
      _
    %152 = vsyncpa [#allocation4], 1
    %153 = vsyncpa [#allocation7], 1
    %154 = vsyncpa [#allocation5], 1

</llo_original>
